<compile_context>
chip_gen: v7x
topology: tpu7x:2x2x1
jax: 0.10.0
libtpu: 0.0.40
codegen_flags: <defaults>
</compile_context>

<pallas_src>
import functools
import math

import jax
import jax.numpy as jnp
from jax import lax
from jax.experimental import pallas as pl
from jax.experimental.pallas import tpu as pltpu


def _qkv_proj_kernel(x_ref, wc_ref, bc_ref, q_ref, k_ref, v_ref, *,
                     n_head: int, head_dim: int, scale: float):
    # x_ref: (1, bq, C) bf16; wc_ref: (C, 3C) bf16; bc_ref: (1, 3C) f32.
    x = x_ref[0]
    wc = wc_ref[...]
    bc = bc_ref[...]
    # qkv = c_attn(hidden_states); accumulate in f32, bias folded in epilogue.
    qkv = jnp.dot(x, wc, preferred_element_type=jnp.float32) + bc   # (bq, 3C) f32
    C = n_head * head_dim
    # Head split (one-time layout conversion, outside the O(T^2) attention loop).
    for h in range(n_head):
        lo = h * head_dim
        hi = lo + head_dim
        q_ref[0, h] = (qkv[:, lo:hi] * scale).astype(q_ref.dtype)     # pre-scaled q
        k_ref[0, h] = qkv[:, C + lo:C + hi].astype(k_ref.dtype)
        v_ref[0, h] = qkv[:, 2 * C + lo:2 * C + hi].astype(v_ref.dtype)


def _flash_attn_proj_kernel(q_ref, k_ref, v_ref, wp_ref, bp_ref, out_ref,
                            m_sc, l_sc, acc_sc, ctx_sc, *,
                            n_head: int, head_dim: int):
    # q_ref: (1, H, bq, hd) bf16; k_ref/v_ref: (1, H, bk, hd) bf16
    # wp_ref: (C, C) bf16; bp_ref: (1, C) f32; out_ref: (1, bq, C) f32
    # scratch: m_sc/l_sc (H, bq, 1) f32, acc_sc (H, bq, hd) f32, ctx_sc (bq, C) f32
    qi = pl.program_id(1)
    ki = pl.program_id(2)

    @pl.when(ki == 0)
    def _init():
        m_sc[...] = jnp.full(m_sc.shape, -jnp.inf, m_sc.dtype)
        l_sc[...] = jnp.zeros(l_sc.shape, l_sc.dtype)
        acc_sc[...] = jnp.zeros(acc_sc.shape, acc_sc.dtype)

    def _scores():
        # Batched over heads; bf16 inputs, f32 accumulation on the MXU.
        return jnp.einsum('hqd,hkd->hqk', q_ref[0], k_ref[0],
                          preferred_element_type=jnp.float32)

    def _update(s):
        # Online softmax; statistics kept in f32.
        m_prev = m_sc[...]                                            # (H, bq, 1)
        m_new = jnp.maximum(m_prev, jnp.max(s, axis=-1, keepdims=True))
        alpha = jnp.exp(m_prev - m_new)
        p = jnp.exp(s - m_new)                                        # (H, bq, bk) f32
        l_sc[...] = alpha * l_sc[...] + jnp.sum(p, axis=-1, keepdims=True)
        pv = jnp.einsum('hqk,hkd->hqd', p.astype(v_ref.dtype), v_ref[0],
                        preferred_element_type=jnp.float32)
        acc_sc[...] = alpha * acc_sc[...] + pv
        m_sc[...] = m_new

    # KV blocks strictly below the diagonal: fully visible, no mask needed.
    @pl.when(ki < qi)
    def _off_diag():
        _update(_scores())

    # Diagonal block: single select is numerically identical to the GPT-2
    # formulation  s*mask + (-10000)*(1-mask).
    @pl.when(ki == qi)
    def _diag():
        s = _scores()
        rows = lax.broadcasted_iota(jnp.int32, s.shape, 1)
        cols = lax.broadcasted_iota(jnp.int32, s.shape, 2)
        _update(jnp.where(cols <= rows, s, -10000.0))

    # KV blocks above the diagonal (ki > qi) are fully masked -> skipped
    # (their softmax contribution exp(-10000 - m) underflows to 0 in f32).

    @pl.when(ki == pl.num_programs(2) - 1)
    def _epilogue():
        inv_l = pl.reciprocal(l_sc[...], approx=True)                 # EUP slot
        ctx = acc_sc[...] * inv_l                                     # (H, bq, hd) f32
        # _merge_heads: write each head into its channel slab of the scratch.
        for h in range(n_head):
            ctx_sc[:, h * head_dim:(h + 1) * head_dim] = ctx[h]
        # attn_output = c_proj(attn_output)
        y = jnp.dot(ctx_sc[...].astype(jnp.bfloat16), wp_ref[...],
                    preferred_element_type=jnp.float32) + bp_ref[...]
        out_ref[0] = y.astype(out_ref.dtype)


def patched_causal_self_attention(x, wc, bc, wp, bp, *, n_head,
                                  block_q=128, block_k=128):
    """x: (B, T, C) f32.  Returns attn_output (B, T, C) f32."""
    B, T, C = x.shape
    assert C % n_head == 0
    head_dim = C // n_head
    block_q = min(block_q, T)
    block_k = min(block_k, T)
    assert block_q == block_k, "causal block skipping assumes square, aligned tiles"
    assert T % block_q == 0 and T % block_k == 0
    nq = T // block_q
    nk = T // block_k
    scale = 1.0 / math.sqrt(head_dim)

    # bf16 MXU inputs (halves HBM/VMEM traffic); biases stay f32.
    x_bf = x.astype(jnp.bfloat16)
    wc_bf = wc.astype(jnp.bfloat16)
    wp_bf = wp.astype(jnp.bfloat16)
    bc2 = bc.reshape(1, 3 * C).astype(jnp.float32)
    bp2 = bp.reshape(1, C).astype(jnp.float32)

    # ---- Kernel 1: fused c_attn projection + head split + q pre-scale ----
    qkv_kernel = functools.partial(_qkv_proj_kernel, n_head=n_head,
                                   head_dim=head_dim, scale=scale)
    head_shape = jax.ShapeDtypeStruct((B, n_head, T, head_dim), jnp.bfloat16)
    head_spec = pl.BlockSpec((1, n_head, block_q, head_dim), lambda b, i: (b, 0, i, 0))
    q, k, v = pl.pallas_call(
        qkv_kernel,
        out_shape=(head_shape, head_shape, head_shape),
        grid_spec=pltpu.PrefetchScalarGridSpec(
            num_scalar_prefetch=0,
            grid=(B, nq),
            in_specs=[
                pl.BlockSpec((1, block_q, C), lambda b, i: (b, i, 0)),   # hidden tile
                pl.BlockSpec((C, 3 * C), lambda b, i: (0, 0)),           # W c_attn
                pl.BlockSpec((1, 3 * C), lambda b, i: (0, 0)),           # b c_attn
            ],
            out_specs=(head_spec, head_spec, head_spec),
        ),
        compiler_params=pltpu.CompilerParams(
            dimension_semantics=("parallel", "parallel")),
    )(x_bf, wc_bf, bc2)

    # ---- Kernel 2: flash attention over query tiles + fused c_proj ----
    attn_kernel = functools.partial(_flash_attn_proj_kernel,
                                    n_head=n_head, head_dim=head_dim)
    # Clamp the kv block index above the diagonal so skipped blocks re-map to
    # the previous block and their DMAs are elided (no wasted HBM traffic).
    kv_map = lambda b, qi, ki: (b, 0, jnp.minimum(ki, qi), 0)
    out = pl.pallas_call(
        attn_kernel,
        out_shape=jax.ShapeDtypeStruct((B, T, C), x.dtype),
        grid_spec=pltpu.PrefetchScalarGridSpec(
            num_scalar_prefetch=0,
            grid=(B, nq, nk),
            in_specs=[
                pl.BlockSpec((1, n_head, block_q, head_dim),
                             lambda b, qi, ki: (b, 0, qi, 0)),           # q tile
                pl.BlockSpec((1, n_head, block_k, head_dim), kv_map),    # k tile
                pl.BlockSpec((1, n_head, block_k, head_dim), kv_map),    # v tile
                pl.BlockSpec((C, C), lambda b, qi, ki: (0, 0)),          # W c_proj
                pl.BlockSpec((1, C), lambda b, qi, ki: (0, 0)),          # b c_proj
            ],
            out_specs=pl.BlockSpec((1, block_q, C), lambda b, qi, ki: (b, qi, 0)),
            scratch_shapes=[
                pltpu.VMEM((n_head, block_q, 1), jnp.float32),           # running max
                pltpu.VMEM((n_head, block_q, 1), jnp.float32),           # running denom
                pltpu.VMEM((n_head, block_q, head_dim), jnp.float32),    # ctx accumulator
                pltpu.VMEM((block_q, C), jnp.float32),                   # merged heads
            ],
        ),
        compiler_params=pltpu.CompilerParams(
            dimension_semantics=("parallel", "parallel", "arbitrary"),
            vmem_limit_bytes=64 * 1024 * 1024),
    )(q, k, v, wp_bf, bp2)
    return out


def _reference(x, wc, bc, wp, bp, *, n_head):
    # Pure-JAX f32 reference mirroring the PyTorch forward, for validation.
    B, T, C = x.shape
    hd = C // n_head
    qkv = jnp.einsum("btc,cd->btd", x, wc) + bc
    q, k, v = jnp.split(qkv, 3, axis=-1)

    def split_heads(t):
        return t.reshape(B, T, n_head, hd).transpose(0, 2, 1, 3)

    q, k, v = split_heads(q), split_heads(k), split_heads(v)
    s = jnp.einsum("bhqd,bhkd->bhqk", q, k) / math.sqrt(hd)
    mask = jnp.tril(jnp.ones((T, T), jnp.float32))[None, None]
    s = s * mask + (-10000.0) * (1.0 - mask)
    p = jax.nn.softmax(s, axis=-1)
    ctx = jnp.einsum("bhqk,bhkd->bhqd", p, v)
    ctx = ctx.transpose(0, 2, 1, 3).reshape(B, T, C)
    return jnp.einsum("btc,cd->btd", ctx, wp) + bp


if __name__ == "__main__":
    # Small but tile-exercising config: 2 query tiles x 2 kv tiles per batch.
    B, T, C, n_head = 2, 256, 128, 4

    key = jax.random.PRNGKey(0)
    k0, k1, k2, k3, k4 = jax.random.split(key, 5)
    x = jax.random.normal(k0, (B, T, C), jnp.float32)
    wc = 0.02 * jax.random.normal(k1, (C, 3 * C), jnp.float32)   # c_attn weight
    bc = 0.02 * jax.random.normal(k2, (3 * C,), jnp.float32)     # c_attn bias
    wp = 0.02 * jax.random.normal(k3, (C, C), jnp.float32)       # c_proj weight
    bp = 0.02 * jax.random.normal(k4, (C,), jnp.float32)         # c_proj bias

    # TODO(synk): sparsify_q/k/v + backproject hooks are only active under
    # compression (compressed_dim != embed_dim); modeled here as the
    # no-compression path, so they are never called. layer_past /
    # attention_mask / head_mask / use_cache are likewise not modeled.

    out = patched_causal_self_attention(x, wc, bc, wp, bp, n_head=n_head)
    out = jax.block_until_ready(out)

    ref = _reference(x, wc, bc, wp, bp, n_head=n_head)
    assert out.shape == (B, T, C)
    max_err = float(jnp.max(jnp.abs(out - ref)))
    assert jnp.allclose(out, ref, atol=1e-2, rtol=1e-2), f"max abs err {max_err}"

    print("KERNEL_OK")
</pallas_src>

<mosaic_0001>
module attributes {stable_mosaic.version = 11 : i64} {
  func.func @_qkv_proj_kernel(%arg0: i32, %arg1: i32, %arg2: memref<1x128x128xbf16, #tpu.memory_space<vmem>>, %arg3: memref<128x384xbf16, #tpu.memory_space<vmem>>, %arg4: memref<1x384xf32, #tpu.memory_space<vmem>>, %arg5: memref<1x4x128x32xbf16, #tpu.memory_space<vmem>>, %arg6: memref<1x4x128x32xbf16, #tpu.memory_space<vmem>>, %arg7: memref<1x4x128x32xbf16, #tpu.memory_space<vmem>>) attributes {dimension_semantics = [#tpu.dimension_semantics<parallel>, #tpu.dimension_semantics<parallel>], iteration_bounds = array<i64: 2, 2>, scalar_prefetch = 0 : i64, scratch_operands = 0 : i64, tpu.core_type = #tpu.core_type<tc>, window_params = [{transform_indices = @transform_0, window_bounds = array<i64: 1, 128, 128>}, {pipeline_mode = #tpu.pipeline_mode<synchronous>, transform_indices = @transform_1, window_bounds = array<i64: 128, 384>}, {pipeline_mode = #tpu.pipeline_mode<synchronous>, transform_indices = @transform_2, window_bounds = array<i64: 1, 384>}, {transform_indices = @transform_3, window_bounds = array<i64: 1, 4, 128, 32>}, {transform_indices = @transform_4, window_bounds = array<i64: 1, 4, 128, 32>}, {transform_indices = @transform_5, window_bounds = array<i64: 1, 4, 128, 32>}]} {
    %c0 = arith.constant 0 : index
    %c0_0 = arith.constant 0 : index
    %c0_1 = arith.constant 0 : index
    %0 = vector.load %arg2[%c0, %c0_0, %c0_1] : memref<1x128x128xbf16, #tpu.memory_space<vmem>>, vector<1x128x128xbf16>
    %1 = vector.shape_cast %0 : vector<1x128x128xbf16> to vector<128x128xbf16>
    %c0_2 = arith.constant 0 : index
    %c0_3 = arith.constant 0 : index
    %2 = vector.load %arg3[%c0_2, %c0_3] : memref<128x384xbf16, #tpu.memory_space<vmem>>, vector<128x384xbf16>
    %c0_4 = arith.constant 0 : index
    %c0_5 = arith.constant 0 : index
    %3 = vector.load %arg4[%c0_4, %c0_5] : memref<1x384xf32, #tpu.memory_space<vmem>>, vector<1x384xf32>
    %cst = arith.constant dense<0.000000e+00> : vector<128x384xf32>
    %4 = tpu.matmul %1, %2, %cst {dimension_numbers = #tpu.dot_dimension_numbers<[1], [0], [0], [1], [0, 0, 1, 1], [], []>} : vector<128x128xbf16>, vector<128x384xbf16>, vector<128x384xf32> -> vector<128x384xf32>
    %5 = vector.broadcast %3 : vector<1x384xf32> to vector<128x384xf32>
    %6 = arith.addf %4, %5 : vector<128x384xf32>
    %7 = vector.extract_strided_slice %6 {offsets = [0, 0], sizes = [128, 32], strides = [1, 1]} : vector<128x384xf32> to vector<128x32xf32>
    %cst_6 = arith.constant 0.176776692 : f32
    %8 = vector.broadcast %cst_6 : f32 to vector<128x32xf32>
    %9 = arith.mulf %7, %8 : vector<128x32xf32>
    %10 = arith.truncf %9 : vector<128x32xf32> to vector<128x32xbf16>
    %c0_7 = arith.constant 0 : index
    %c0_8 = arith.constant 0 : index
    %c0_9 = arith.constant 0 : index
    %c0_10 = arith.constant 0 : index
    %11 = vector.load %arg5[%c0_7, %c0_8, %c0_9, %c0_10] : memref<1x4x128x32xbf16, #tpu.memory_space<vmem>>, vector<1x1x128x32xbf16>
    %12 = vector.shape_cast %11 : vector<1x1x128x32xbf16> to vector<128x32xbf16>
    %13 = vector.shape_cast %10 : vector<128x32xbf16> to vector<1x1x128x32xbf16>
    tpu.vector_store %arg5[%c0_7, %c0_8, %c0_9, %c0_10], %13 {strides = array<i32>} : memref<1x4x128x32xbf16, #tpu.memory_space<vmem>>, vector<1x1x128x32xbf16>,
    %14 = vector.extract_strided_slice %6 {offsets = [0, 128], sizes = [128, 32], strides = [1, 1]} : vector<128x384xf32> to vector<128x32xf32>
    %15 = arith.truncf %14 : vector<128x32xf32> to vector<128x32xbf16>
    %c0_11 = arith.constant 0 : index
    %c0_12 = arith.constant 0 : index
    %c0_13 = arith.constant 0 : index
    %c0_14 = arith.constant 0 : index
    %16 = vector.load %arg6[%c0_11, %c0_12, %c0_13, %c0_14] : memref<1x4x128x32xbf16, #tpu.memory_space<vmem>>, vector<1x1x128x32xbf16>
    %17 = vector.shape_cast %16 : vector<1x1x128x32xbf16> to vector<128x32xbf16>
    %18 = vector.shape_cast %15 : vector<128x32xbf16> to vector<1x1x128x32xbf16>
    tpu.vector_store %arg6[%c0_11, %c0_12, %c0_13, %c0_14], %18 {strides = array<i32>} : memref<1x4x128x32xbf16, #tpu.memory_space<vmem>>, vector<1x1x128x32xbf16>,
    %19 = vector.extract_strided_slice %6 {offsets = [0, 256], sizes = [128, 32], strides = [1, 1]} : vector<128x384xf32> to vector<128x32xf32>
    %20 = arith.truncf %19 : vector<128x32xf32> to vector<128x32xbf16>
    %c0_15 = arith.constant 0 : index
    %c0_16 = arith.constant 0 : index
    %c0_17 = arith.constant 0 : index
    %c0_18 = arith.constant 0 : index
    %21 = vector.load %arg7[%c0_15, %c0_16, %c0_17, %c0_18] : memref<1x4x128x32xbf16, #tpu.memory_space<vmem>>, vector<1x1x128x32xbf16>
    %22 = vector.shape_cast %21 : vector<1x1x128x32xbf16> to vector<128x32xbf16>
    %23 = vector.shape_cast %20 : vector<128x32xbf16> to vector<1x1x128x32xbf16>
    tpu.vector_store %arg7[%c0_15, %c0_16, %c0_17, %c0_18], %23 {strides = array<i32>} : memref<1x4x128x32xbf16, #tpu.memory_space<vmem>>, vector<1x1x128x32xbf16>,
    %24 = vector.extract_strided_slice %6 {offsets = [0, 32], sizes = [128, 32], strides = [1, 1]} : vector<128x384xf32> to vector<128x32xf32>
    %cst_19 = arith.constant 0.176776692 : f32
    %25 = vector.broadcast %cst_19 : f32 to vector<128x32xf32>
    %26 = arith.mulf %24, %25 : vector<128x32xf32>
    %27 = arith.truncf %26 : vector<128x32xf32> to vector<128x32xbf16>
    %c0_20 = arith.constant 0 : index
    %c1 = arith.constant 1 : index
    %c0_21 = arith.constant 0 : index
    %c0_22 = arith.constant 0 : index
    %28 = vector.load %arg5[%c0_20, %c1, %c0_21, %c0_22] : memref<1x4x128x32xbf16, #tpu.memory_space<vmem>>, vector<1x1x128x32xbf16>
    %29 = vector.shape_cast %28 : vector<1x1x128x32xbf16> to vector<128x32xbf16>
    %30 = vector.shape_cast %27 : vector<128x32xbf16> to vector<1x1x128x32xbf16>
    tpu.vector_store %arg5[%c0_20, %c1, %c0_21, %c0_22], %30 {strides = array<i32>} : memref<1x4x128x32xbf16, #tpu.memory_space<vmem>>, vector<1x1x128x32xbf16>,
    %31 = vector.extract_strided_slice %6 {offsets = [0, 160], sizes = [128, 32], strides = [1, 1]} : vector<128x384xf32> to vector<128x32xf32>
    %32 = arith.truncf %31 : vector<128x32xf32> to vector<128x32xbf16>
    %c0_23 = arith.constant 0 : index
    %c1_24 = arith.constant 1 : index
    %c0_25 = arith.constant 0 : index
    %c0_26 = arith.constant 0 : index
    %33 = vector.load %arg6[%c0_23, %c1_24, %c0_25, %c0_26] : memref<1x4x128x32xbf16, #tpu.memory_space<vmem>>, vector<1x1x128x32xbf16>
    %34 = vector.shape_cast %33 : vector<1x1x128x32xbf16> to vector<128x32xbf16>
    %35 = vector.shape_cast %32 : vector<128x32xbf16> to vector<1x1x128x32xbf16>
    tpu.vector_store %arg6[%c0_23, %c1_24, %c0_25, %c0_26], %35 {strides = array<i32>} : memref<1x4x128x32xbf16, #tpu.memory_space<vmem>>, vector<1x1x128x32xbf16>,
    %36 = vector.extract_strided_slice %6 {offsets = [0, 288], sizes = [128, 32], strides = [1, 1]} : vector<128x384xf32> to vector<128x32xf32>
    %37 = arith.truncf %36 : vector<128x32xf32> to vector<128x32xbf16>
    %c0_27 = arith.constant 0 : index
    %c1_28 = arith.constant 1 : index
    %c0_29 = arith.constant 0 : index
    %c0_30 = arith.constant 0 : index
    %38 = vector.load %arg7[%c0_27, %c1_28, %c0_29, %c0_30] : memref<1x4x128x32xbf16, #tpu.memory_space<vmem>>, vector<1x1x128x32xbf16>
    %39 = vector.shape_cast %38 : vector<1x1x128x32xbf16> to vector<128x32xbf16>
    %40 = vector.shape_cast %37 : vector<128x32xbf16> to vector<1x1x128x32xbf16>
    tpu.vector_store %arg7[%c0_27, %c1_28, %c0_29, %c0_30], %40 {strides = array<i32>} : memref<1x4x128x32xbf16, #tpu.memory_space<vmem>>, vector<1x1x128x32xbf16>,
    %41 = vector.extract_strided_slice %6 {offsets = [0, 64], sizes = [128, 32], strides = [1, 1]} : vector<128x384xf32> to vector<128x32xf32>
    %cst_31 = arith.constant 0.176776692 : f32
    %42 = vector.broadcast %cst_31 : f32 to vector<128x32xf32>
    %43 = arith.mulf %41, %42 : vector<128x32xf32>
    %44 = arith.truncf %43 : vector<128x32xf32> to vector<128x32xbf16>
    %c0_32 = arith.constant 0 : index
    %c2 = arith.constant 2 : index
    %c0_33 = arith.constant 0 : index
    %c0_34 = arith.constant 0 : index
    %45 = vector.load %arg5[%c0_32, %c2, %c0_33, %c0_34] : memref<1x4x128x32xbf16, #tpu.memory_space<vmem>>, vector<1x1x128x32xbf16>
    %46 = vector.shape_cast %45 : vector<1x1x128x32xbf16> to vector<128x32xbf16>
    %47 = vector.shape_cast %44 : vector<128x32xbf16> to vector<1x1x128x32xbf16>
    tpu.vector_store %arg5[%c0_32, %c2, %c0_33, %c0_34], %47 {strides = array<i32>} : memref<1x4x128x32xbf16, #tpu.memory_space<vmem>>, vector<1x1x128x32xbf16>,
    %48 = vector.extract_strided_slice %6 {offsets = [0, 192], sizes = [128, 32], strides = [1, 1]} : vector<128x384xf32> to vector<128x32xf32>
    %49 = arith.truncf %48 : vector<128x32xf32> to vector<128x32xbf16>
    %c0_35 = arith.constant 0 : index
    %c2_36 = arith.constant 2 : index
    %c0_37 = arith.constant 0 : index
    %c0_38 = arith.constant 0 : index
    %50 = vector.load %arg6[%c0_35, %c2_36, %c0_37, %c0_38] : memref<1x4x128x32xbf16, #tpu.memory_space<vmem>>, vector<1x1x128x32xbf16>
    %51 = vector.shape_cast %50 : vector<1x1x128x32xbf16> to vector<128x32xbf16>
    %52 = vector.shape_cast %49 : vector<128x32xbf16> to vector<1x1x128x32xbf16>
    tpu.vector_store %arg6[%c0_35, %c2_36, %c0_37, %c0_38], %52 {strides = array<i32>} : memref<1x4x128x32xbf16, #tpu.memory_space<vmem>>, vector<1x1x128x32xbf16>,
    %53 = vector.extract_strided_slice %6 {offsets = [0, 320], sizes = [128, 32], strides = [1, 1]} : vector<128x384xf32> to vector<128x32xf32>
    %54 = arith.truncf %53 : vector<128x32xf32> to vector<128x32xbf16>
    %c0_39 = arith.constant 0 : index
    %c2_40 = arith.constant 2 : index
    %c0_41 = arith.constant 0 : index
    %c0_42 = arith.constant 0 : index
    %55 = vector.load %arg7[%c0_39, %c2_40, %c0_41, %c0_42] : memref<1x4x128x32xbf16, #tpu.memory_space<vmem>>, vector<1x1x128x32xbf16>
    %56 = vector.shape_cast %55 : vector<1x1x128x32xbf16> to vector<128x32xbf16>
    %57 = vector.shape_cast %54 : vector<128x32xbf16> to vector<1x1x128x32xbf16>
    tpu.vector_store %arg7[%c0_39, %c2_40, %c0_41, %c0_42], %57 {strides = array<i32>} : memref<1x4x128x32xbf16, #tpu.memory_space<vmem>>, vector<1x1x128x32xbf16>,
    %58 = vector.extract_strided_slice %6 {offsets = [0, 96], sizes = [128, 32], strides = [1, 1]} : vector<128x384xf32> to vector<128x32xf32>
    %cst_43 = arith.constant 0.176776692 : f32
    %59 = vector.broadcast %cst_43 : f32 to vector<128x32xf32>
    %60 = arith.mulf %58, %59 : vector<128x32xf32>
    %61 = arith.truncf %60 : vector<128x32xf32> to vector<128x32xbf16>
    %c0_44 = arith.constant 0 : index
    %c3 = arith.constant 3 : index
    %c0_45 = arith.constant 0 : index
    %c0_46 = arith.constant 0 : index
    %62 = vector.load %arg5[%c0_44, %c3, %c0_45, %c0_46] : memref<1x4x128x32xbf16, #tpu.memory_space<vmem>>, vector<1x1x128x32xbf16>
    %63 = vector.shape_cast %62 : vector<1x1x128x32xbf16> to vector<128x32xbf16>
    %64 = vector.shape_cast %61 : vector<128x32xbf16> to vector<1x1x128x32xbf16>
    tpu.vector_store %arg5[%c0_44, %c3, %c0_45, %c0_46], %64 {strides = array<i32>} : memref<1x4x128x32xbf16, #tpu.memory_space<vmem>>, vector<1x1x128x32xbf16>,
    %65 = vector.extract_strided_slice %6 {offsets = [0, 224], sizes = [128, 32], strides = [1, 1]} : vector<128x384xf32> to vector<128x32xf32>
    %66 = arith.truncf %65 : vector<128x32xf32> to vector<128x32xbf16>
    %c0_47 = arith.constant 0 : index
    %c3_48 = arith.constant 3 : index
    %c0_49 = arith.constant 0 : index
    %c0_50 = arith.constant 0 : index
    %67 = vector.load %arg6[%c0_47, %c3_48, %c0_49, %c0_50] : memref<1x4x128x32xbf16, #tpu.memory_space<vmem>>, vector<1x1x128x32xbf16>
    %68 = vector.shape_cast %67 : vector<1x1x128x32xbf16> to vector<128x32xbf16>
    %69 = vector.shape_cast %66 : vector<128x32xbf16> to vector<1x1x128x32xbf16>
    tpu.vector_store %arg6[%c0_47, %c3_48, %c0_49, %c0_50], %69 {strides = array<i32>} : memref<1x4x128x32xbf16, #tpu.memory_space<vmem>>, vector<1x1x128x32xbf16>,
    %70 = vector.extract_strided_slice %6 {offsets = [0, 352], sizes = [128, 32], strides = [1, 1]} : vector<128x384xf32> to vector<128x32xf32>
    %71 = arith.truncf %70 : vector<128x32xf32> to vector<128x32xbf16>
    %c0_51 = arith.constant 0 : index
    %c3_52 = arith.constant 3 : index
    %c0_53 = arith.constant 0 : index
    %c0_54 = arith.constant 0 : index
    %72 = vector.load %arg7[%c0_51, %c3_52, %c0_53, %c0_54] : memref<1x4x128x32xbf16, #tpu.memory_space<vmem>>, vector<1x1x128x32xbf16>
    %73 = vector.shape_cast %72 : vector<1x1x128x32xbf16> to vector<128x32xbf16>
    %74 = vector.shape_cast %71 : vector<128x32xbf16> to vector<1x1x128x32xbf16>
    tpu.vector_store %arg7[%c0_51, %c3_52, %c0_53, %c0_54], %74 {strides = array<i32>} : memref<1x4x128x32xbf16, #tpu.memory_space<vmem>>, vector<1x1x128x32xbf16>,
    return
  }
  func.func @transform_0(%arg0: i32, %arg1: i32) -> (i32, i32, i32) {
    %c0_i32 = arith.constant 0 : i32
    %c0_i32_0 = arith.constant 0 : i32
    return %arg0, %arg1, %c0_i32 : i32, i32, i32
  }
  func.func @transform_1(%arg0: i32, %arg1: i32) -> (i32, i32) {
    %c0_i32 = arith.constant 0 : i32
    %c0_i32_0 = arith.constant 0 : i32
    %c0_i32_1 = arith.constant 0 : i32
    return %c0_i32, %c0_i32_0 : i32, i32
  }
  func.func @transform_2(%arg0: i32, %arg1: i32) -> (i32, i32) {
    %c0_i32 = arith.constant 0 : i32
    %c0_i32_0 = arith.constant 0 : i32
    %c0_i32_1 = arith.constant 0 : i32
    return %c0_i32, %c0_i32_0 : i32, i32
  }
  func.func @transform_3(%arg0: i32, %arg1: i32) -> (i32, i32, i32, i32) {
    %c0_i32 = arith.constant 0 : i32
    %c0_i32_0 = arith.constant 0 : i32
    %c0_i32_1 = arith.constant 0 : i32
    return %arg0, %c0_i32, %arg1, %c0_i32_0 : i32, i32, i32, i32
  }
  func.func @transform_4(%arg0: i32, %arg1: i32) -> (i32, i32, i32, i32) {
    %c0_i32 = arith.constant 0 : i32
    %c0_i32_0 = arith.constant 0 : i32
    %c0_i32_1 = arith.constant 0 : i32
    return %arg0, %c0_i32, %arg1, %c0_i32_0 : i32, i32, i32, i32
  }
  func.func @transform_5(%arg0: i32, %arg1: i32) -> (i32, i32, i32, i32) {
    %c0_i32 = arith.constant 0 : i32
    %c0_i32_0 = arith.constant 0 : i32
    %c0_i32_1 = arith.constant 0 : i32
    return %arg0, %c0_i32, %arg1, %c0_i32_0 : i32, i32, i32, i32
  }
}

</mosaic_0001>

<llo_original>
// kernel: tpu_custom_call.1
$region0: #{tpu_custom_call.1}
  #allocation0 [shape = 'u32[]', space=smem, size = 0x4, offset = 0x4, fixed_abs, tag = 'smem constant byte address 0x4 - core index']
  #allocation1 [shape = 'u32[144,128]{1,0:T(1,128)}', space=vmem, size = 0x12000, scoped, tag = 'internal scratch']
  %s0 = inlined_call_operand.hbm [shape: bf16[2,256,128], index: 0, kind: input, shape index: {}]
  %s1 = inlined_call_operand.hbm [shape: bf16[128,384], index: 1, kind: input, shape index: {}]
  %s2 = inlined_call_operand.vmem [shape: f32[1,384], index: 2, kind: input, shape index: {}]
  %s3 = inlined_call_operand.vmem [shape: bf16[2,4,256,32], index: 3, kind: output, shape index: {0}]
  %s4 = inlined_call_operand.vmem [shape: bf16[2,4,256,32], index: 4, kind: output, shape index: {1}]
  %s5 = inlined_call_operand.vmem [shape: bf16[2,4,256,32], index: 5, kind: output, shape index: {2}]
  %6 = xla_tuple %s3, %s4, %s5
  %s7 = sld [smem:[#allocation0]]
  $region180: #{tpu_custom_call.1} parent=0
    _
  %s9 = ssub.s32 1, %s7
  %s10 = scalar_select 0, %s9, %s7
  $region1: #{tpu_custom_call.1} parent=0
    #allocation2 [shape = 'u8[65536]{0}', space=vmem, size = 0x10000, scoped, tag = 'input window, operand 0']
    #allocation3 [shape = 's32[2]{0}', space=sflag, size = 0x8, scoped, tag = 'scoped memory for tpu_custom_call.1']
    #allocation4 [shape = 'u8[98304]{0}', space=vmem, size = 0x18000, scoped, tag = 'input window, operand 1, single buffered']
    #allocation5 [shape = 's32[1]{0}', space=sflag, size = 0x4, scoped, tag = 'scoped memory for tpu_custom_call.1']
    #allocation6 [shape = 'u8[262144]{0}', space=vmem, size = 0x40000, scoped, tag = 'output window, operand 0']
    #allocation7 [shape = 'u8[262144]{0}', space=vmem, size = 0x40000, scoped, tag = 'output window, operand 1']
    #allocation8 [shape = 'u8[262144]{0}', space=vmem, size = 0x40000, scoped, tag = 'output window, operand 2']
    %11 = vsyncpa [#allocation3], 0
    %s12 = scalar_lea.sflag [#allocation3], 1
    %13 = vsyncpa %s12, 0
    %14 = vsyncpa [#allocation5], 0
    loop: start=0, step=1, limit=6
    $region2: #{tpu_custom_call.1} parent=1 // loop_pre_header
      _
    $region3: #{tpu_custom_call.1} parent=1 // loop_header
      %s16 = sphi 0, %s20
      %p17 = scmp.ge.s32.totalorder %s16, 6
      %s23 = sphi 0, %s35
      %s24 = sphi 0, %s31
      %s25 = sphi 0, %s23
      %s26 = sphi 0, %s24
      %s27 = sphi 0, %s25
      %s28 = sphi 0, %s26
      %s40 = sphi 0, %s42
      %s43 = sphi 0, %s40
      %s44 = sphi 0, %s43
      %s60 = sphi 0, %s44
      %s64 = sphi 0, %s64
      %s66 = sphi 0, %s64
      %s67 = sphi 0, %s66
      %s81 = sphi 0, %s67
      %s85 = sphi 0, %s85
      %s87 = sphi 0, %s85
      %s88 = sphi 0, %s87
      %s102 = sphi 0, %s88
      %s110 = sphi 0, %s112
      %s113 = sphi 0, %s110
      %s114 = sphi 0, %s113
      %s130 = sphi 0, %s114
      %s138 = sphi 0, %s140
      %s141 = sphi 0, %s138
      %s142 = sphi 0, %s141
      %s158 = sphi 0, %s142
      %s166 = sphi 0, %s168
      %s169 = sphi 0, %s166
      %s170 = sphi 0, %s169
      %s186 = sphi 0, %s170
    $region4: #{tpu_custom_call.1} parent=1 // loop_header_branch
      %19 = sbr.rel (%p17) target = $region8
    $region5: #{tpu_custom_call.1} parent=1 // loop_body
      %s21 = ssub.s32 %s16, 1
      %s22 = ssub.s32 %s16, 2
      %s29 = sadd.s32 1, %s24
      %p30 = scmp.ge.s32.totalorder %s29, 2
      %s31 = scalar_select %p30, 0, %s29
      %s32 = sadd.s32 1, %s23
      %s33 = scalar_select %p30, %s32, %s23
      %p34 = scmp.ge.s32.totalorder %s33, 2
      %s35 = scalar_select %p34, 0, %s33
      %s36 = ssub.s32 %s23, %s35
      %s37 = ssub.s32 %s24, %s31
      %s38 = sor.u32 %s36, %s37
      %p39 = scmp.eq.s32.totalorder %s38, 0
      %s41 = sadd.s32 %s40, 1
      %s42 = scalar_select %p39, %s40, %s41
      %p45 = pneg %p39
      %p46 = scmp.eq.s32.totalorder %s16, 3
      %p47 = por %p45, %p46
      %p48 = scmp.ne.s32.totalorder %s40, %s43
      %p49 = scmp.eq.s32.totalorder %s16, 0
      %p50 = por %p48, %p49
      %p51 = scmp.ne.s32.totalorder %s40, %s43
      %p52 = scmp.eq.s32.totalorder %s21, 3
      %p53 = por %p51, %p52
      %p54 = scmp.ne.s32.totalorder %s43, %s44
      %p55 = scmp.eq.s32.totalorder %s21, 0
      %p56 = por %p54, %p55
      %p57 = scmp.ne.s32.totalorder %s43, %s44
      %p58 = scmp.eq.s32.totalorder %s22, 3
      %p59 = por %p57, %p58
      %p61 = scmp.ne.s32.totalorder %s44, %s60
      %p62 = scmp.eq.s32.totalorder %s22, 0
      %p63 = por %p61, %p62
      %s65 = sadd.s32 %s64, 1
      %p68 = scmp.eq.s32.totalorder %s16, 3
      %p69 = scmp.ne.s32.totalorder %s64, %s66
      %p70 = scmp.eq.s32.totalorder %s16, 0
      %p71 = por %p69, %p70
      %p72 = scmp.ne.s32.totalorder %s64, %s66
      %p73 = scmp.eq.s32.totalorder %s21, 3
      %p74 = por %p72, %p73
      %p75 = scmp.ne.s32.totalorder %s66, %s67
      %p76 = scmp.eq.s32.totalorder %s21, 0
      %p77 = por %p75, %p76
      %p78 = scmp.ne.s32.totalorder %s66, %s67
      %p79 = scmp.eq.s32.totalorder %s22, 3
      %p80 = por %p78, %p79
      %p82 = scmp.ne.s32.totalorder %s67, %s81
      %p83 = scmp.eq.s32.totalorder %s22, 0
      %p84 = por %p82, %p83
      %s86 = sadd.s32 %s85, 1
      %p89 = scmp.eq.s32.totalorder %s16, 3
      %p90 = scmp.ne.s32.totalorder %s85, %s87
      %p91 = scmp.eq.s32.totalorder %s16, 0
      %p92 = por %p90, %p91
      %p93 = scmp.ne.s32.totalorder %s85, %s87
      %p94 = scmp.eq.s32.totalorder %s21, 3
      %p95 = por %p93, %p94
      %p96 = scmp.ne.s32.totalorder %s87, %s88
      %p97 = scmp.eq.s32.totalorder %s21, 0
      %p98 = por %p96, %p97
      %p99 = scmp.ne.s32.totalorder %s87, %s88
      %p100 = scmp.eq.s32.totalorder %s22, 3
      %p101 = por %p99, %p100
      %p103 = scmp.ne.s32.totalorder %s88, %s102
      %p104 = scmp.eq.s32.totalorder %s22, 0
      %p105 = por %p103, %p104
      %s106 = ssub.s32 %s23, %s35
      %s107 = ssub.s32 %s24, %s31
      %s108 = sor.u32 %s106, %s107
      %p109 = scmp.eq.s32.totalorder %s108, 0
      %s111 = sadd.s32 %s110, 1
      %s112 = scalar_select %p109, %s110, %s111
      %p115 = pneg %p109
      %p116 = scmp.eq.s32.totalorder %s16, 3
      %p117 = por %p115, %p116
      %p118 = scmp.ne.s32.totalorder %s110, %s113
      %p119 = scmp.eq.s32.totalorder %s16, 0
      %p120 = por %p118, %p119
      %p121 = scmp.ne.s32.totalorder %s110, %s113
      %p122 = scmp.eq.s32.totalorder %s21, 3
      %p123 = por %p121, %p122
      %p124 = scmp.ne.s32.totalorder %s113, %s114
      %p125 = scmp.eq.s32.totalorder %s21, 0
      %p126 = por %p124, %p125
      %p127 = scmp.ne.s32.totalorder %s113, %s114
      %p128 = scmp.eq.s32.totalorder %s22, 3
      %p129 = por %p127, %p128
      %p131 = scmp.ne.s32.totalorder %s114, %s130
      %p132 = scmp.eq.s32.totalorder %s22, 0
      %p133 = por %p131, %p132
      %s134 = ssub.s32 %s23, %s35
      %s135 = ssub.s32 %s24, %s31
      %s136 = sor.u32 %s134, %s135
      %p137 = scmp.eq.s32.totalorder %s136, 0
      %s139 = sadd.s32 %s138, 1
      %s140 = scalar_select %p137, %s138, %s139
      %p143 = pneg %p137
      %p144 = scmp.eq.s32.totalorder %s16, 3
      %p145 = por %p143, %p144
      %p146 = scmp.ne.s32.totalorder %s138, %s141
      %p147 = scmp.eq.s32.totalorder %s16, 0
      %p148 = por %p146, %p147
      %p149 = scmp.ne.s32.totalorder %s138, %s141
      %p150 = scmp.eq.s32.totalorder %s21, 3
      %p151 = por %p149, %p150
      %p152 = scmp.ne.s32.totalorder %s141, %s142
      %p153 = scmp.eq.s32.totalorder %s21, 0
      %p154 = por %p152, %p153
      %p155 = scmp.ne.s32.totalorder %s141, %s142
      %p156 = scmp.eq.s32.totalorder %s22, 3
      %p157 = por %p155, %p156
      %p159 = scmp.ne.s32.totalorder %s142, %s158
      %p160 = scmp.eq.s32.totalorder %s22, 0
      %p161 = por %p159, %p160
      %s162 = ssub.s32 %s23, %s35
      %s163 = ssub.s32 %s24, %s31
      %s164 = sor.u32 %s162, %s163
      %p165 = scmp.eq.s32.totalorder %s164, 0
      %s167 = sadd.s32 %s166, 1
      %s168 = scalar_select %p165, %s166, %s167
      %p171 = pneg %p165
      %p172 = scmp.eq.s32.totalorder %s16, 3
      %p173 = por %p171, %p172
      %p174 = scmp.ne.s32.totalorder %s166, %s169
      %p175 = scmp.eq.s32.totalorder %s16, 0
      %p176 = por %p174, %p175
      %p177 = scmp.ne.s32.totalorder %s166, %s169
      %p178 = scmp.eq.s32.totalorder %s21, 3
      %p179 = por %p177, %p178
      %p180 = scmp.ne.s32.totalorder %s169, %s170
      %p181 = scmp.eq.s32.totalorder %s21, 0
      %p182 = por %p180, %p181
      %p183 = scmp.ne.s32.totalorder %s169, %s170
      %p184 = scmp.eq.s32.totalorder %s22, 3
      %p185 = por %p183, %p184
      %p187 = scmp.ne.s32.totalorder %s170, %s186
      %p188 = scmp.eq.s32.totalorder %s22, 0
      %p189 = por %p187, %p188
      %p190 = scmp.le.s32.totalorder 1, %s16
      %p191 = scmp.lt.s32.totalorder %s16, 5
      %p192 = pnand %p190, %p191
      %p193 = pneg %p192
      // Predicated region
      $region9: #{tpu_custom_call.1} parent=5 // pred_check
        _
      $region10: #{tpu_custom_call.1} parent=5 // pred_check_branch
        %195 = sbr.rel (%p192) target = $region12
      $region11: #{tpu_custom_call.1} parent=5 // pred_region
        %s196 = ssub.s32 %s16, 1
        // Predicated region
        $region13: #{tpu_custom_call.1} parent=11 // pred_check
          %p197 = pneg %p77
        $region14: #{tpu_custom_call.1} parent=11 // pred_check_branch
          %199 = sbr.rel (%p197) target = $region16
        $region15: #{tpu_custom_call.1} parent=11 // pred_region
          %s201 = ssub.s32 3072, 3072
          %202 = vsyncadd [#allocation5], %s201
          %s203 = sshll.u32 [#allocation4], 4
          %s204 = int_to_ptr.vmem [resolvable:$true] %s203
          %209 = dma.hbm_to_vmem [thread:$0]  %s1, 3072, %s204, [#allocation5], 192, 192, 12
        $region16: #{tpu_custom_call.1} parent=11 // pred_fallthru
          _
        // Predicated region
        $region17: #{tpu_custom_call.1} parent=11 // pred_check
          %p210 = pneg %p98
        $region18: #{tpu_custom_call.1} parent=11 // pred_check_branch
          %212 = sbr.rel (%p210) target = $region20
        $region19: #{tpu_custom_call.1} parent=11 // pred_region
          _
        $region20: #{tpu_custom_call.1} parent=11 // pred_fallthru
          _
      $region12: #{tpu_custom_call.1} parent=5 // pred_fallthru
        _
      %p213 = scmp.lt.s32.totalorder %s16, 4
      // Predicated region
      $region21: #{tpu_custom_call.1} parent=5 // pred_check
        %p214 = pneg %p213
      $region22: #{tpu_custom_call.1} parent=5 // pred_check_branch
        %216 = sbr.rel (%p214) target = $region24
      $region23: #{tpu_custom_call.1} parent=5 // pred_region
        // Predicated region
        $region25: #{tpu_custom_call.1} parent=23 // pred_check
          %p217 = pneg %p50
        $region26: #{tpu_custom_call.1} parent=23 // pred_check_branch
          %219 = sbr.rel (%p217) target = $region28
        $region27: #{tpu_custom_call.1} parent=23 // pred_region
          %s220 = sand.u32 %s40, 1
          %s221 = scalar_lea.sflag [#allocation3], %s220
          %s222 = sand.u32 %s40, 1
          %s223 = smul.addr %s222, 64
          %s224 = scalar_lea.vmem [#allocation2], %s223
          %s225 = smul.u32 16, %s24
          %s227 = ssub.s32 1024, 1024
          %228 = vsyncadd %s221, %s227
          %s229 = smul.addr %s23, 32
          %s230 = sadd.s32 %s225, %s229
          %s231 = smul.addr %s230, 64
          %s232 = scalar_lea.hbm %s0, %s231
          %s233 = sshll.u32 %s224, 4
          %s234 = int_to_ptr.vmem [resolvable:$true] %s233
          %239 = dma.hbm_to_vmem [thread:$0]  %s232, 1024, %s234, %s221, 64, 64, 4
        $region28: #{tpu_custom_call.1} parent=23 // pred_fallthru
          _
      $region24: #{tpu_custom_call.1} parent=5 // pred_fallthru
        _
      %p240 = scmp.le.s32.totalorder 1, %s16
      %p241 = scmp.lt.s32.totalorder %s16, 5
      %p242 = pnand %p240, %p241
      %p243 = pneg %p242
      // Predicated region
      $region29: #{tpu_custom_call.1} parent=5 // pred_check
        _
      $region30: #{tpu_custom_call.1} parent=5 // pred_check_branch
        %245 = sbr.rel (%p242) target = $region32
      $region31: #{tpu_custom_call.1} parent=5 // pred_region
        %s246 = ssub.s32 %s16, 1
        %s247 = sand.u32 %s43, 1
        %s248 = scalar_lea.sflag [#allocation3], %s247
        %s249 = sand.u32 %s43, 1
        %s250 = smul.addr %s249, 64
        %s251 = scalar_lea.vmem [#allocation2], %s250
        // Predicated region
        $region33: #{tpu_custom_call.1} parent=31 // pred_check
          %p252 = pneg %p56
        $region34: #{tpu_custom_call.1} parent=31 // pred_check_branch
          %254 = sbr.rel (%p252) target = $region36
        $region35: #{tpu_custom_call.1} parent=31 // pred_region
          %255 = dma.done %s248, 1024
        $region36: #{tpu_custom_call.1} parent=31 // pred_fallthru
          _
        // Predicated region
        $region37: #{tpu_custom_call.1} parent=31 // pred_check
          %p256 = pneg %p77
        $region38: #{tpu_custom_call.1} parent=31 // pred_check_branch
          %258 = sbr.rel (%p256) target = $region40
        $region39: #{tpu_custom_call.1} parent=31 // pred_region
          %259 = dma.done [#allocation5], 3072
        $region40: #{tpu_custom_call.1} parent=31 // pred_fallthru
          _
        %s260 = sand.u32 %s43, 1
        %s261 = scalar_lea.sflag [#allocation3], %s260
        %s262 = sand.u32 %s43, 1
        %s263 = smul.addr %s262, 64
        %s264 = scalar_lea.vmem [#allocation2], %s263
        %p265 = pneg %p56
        %p266 = pneg %p53
        %p267 = pneg %p77
        %p268 = pneg %p74
        %p269 = pneg %p98
        %p270 = pneg %p95
        %p271 = pneg %p126
        %p272 = pneg %p123
        %s273 = sand.u32 %s113, 1
        %s274 = sand.u32 %s113, 1
        %s275 = smul.addr %s274, 256
        %s276 = scalar_lea.vmem [#allocation6], %s275
        %p277 = pneg %p154
        %p278 = pneg %p151
        %s279 = sand.u32 %s141, 1
        %s280 = sand.u32 %s141, 1
        %s281 = smul.addr %s280, 256
        %s282 = scalar_lea.vmem [#allocation7], %s281
        %p283 = pneg %p182
        %p284 = pneg %p179
        %s285 = sand.u32 %s169, 1
        %s286 = sand.u32 %s169, 1
        %s287 = smul.addr %s286, 256
        %s288 = scalar_lea.vmem [#allocation8], %s287
        %s289 = smul.u32 16, %s26
        %s290 = smul.u32 16, %s26
        %s291 = smul.u32 16, %s26
        %s292 = smul.u32 16, %s26
        %v294 = vld [vmem:[%s251] sm:$0xf]
        %v295 = vld [vmem:[%s251 + $0x4] sm:$0xf]
        %v296 = vld [vmem:[%s251 + $0x8] sm:$0xf]
        %v297 = vld [vmem:[%s251 + $0xc] sm:$0xf]
        %v298 = vld [vmem:[%s251 + $0x10] sm:$0xf]
        %v299 = vld [vmem:[%s251 + $0x14] sm:$0xf]
        %v300 = vld [vmem:[%s251 + $0x18] sm:$0xf]
        %v301 = vld [vmem:[%s251 + $0x1c] sm:$0xf]
        %v302 = vld [vmem:[%s251 + $0x20] sm:$0xf]
        %v303 = vld [vmem:[%s251 + $0x24] sm:$0xf]
        %v304 = vld [vmem:[%s251 + $0x28] sm:$0xf]
        %v305 = vld [vmem:[%s251 + $0x2c] sm:$0xf]
        %v306 = vld [vmem:[%s251 + $0x30] sm:$0xf]
        %v307 = vld [vmem:[%s251 + $0x34] sm:$0xf]
        %v308 = vld [vmem:[%s251 + $0x38] sm:$0xf]
        %v309 = vld [vmem:[%s251 + $0x3c] sm:$0xf]
        %v310 = vld [vmem:[#allocation4] sm:$0xff]
        %v311 = vld [vmem:[#allocation4 + $0x8] sm:$0xf]
        %v312 = vld [vmem:[#allocation4 + $0xc] sm:$0xff]
        %v313 = vld [vmem:[#allocation4 + $0x14] sm:$0xf]
        %v314 = vld [vmem:[#allocation4 + $0x18] sm:$0xff]
        %v315 = vld [vmem:[#allocation4 + $0x20] sm:$0xf]
        %v316 = vld [vmem:[#allocation4 + $0x24] sm:$0xff]
        %v317 = vld [vmem:[#allocation4 + $0x2c] sm:$0xf]
        %v318 = vld [vmem:[#allocation4 + $0x30] sm:$0xff]
        %v319 = vld [vmem:[#allocation4 + $0x38] sm:$0xf]
        %v320 = vld [vmem:[#allocation4 + $0x3c] sm:$0xff]
        %v321 = vld [vmem:[#allocation4 + $0x44] sm:$0xf]
        %v322 = vld [vmem:[#allocation4 + $0x48] sm:$0xff]
        %v323 = vld [vmem:[#allocation4 + $0x50] sm:$0xf]
        %v324 = vld [vmem:[#allocation4 + $0x54] sm:$0xff]
        %v325 = vld [vmem:[#allocation4 + $0x5c] sm:$0xf]
        %v326 = vld [vmem:[#allocation4 + $0x60] sm:$0xff]
        %v327 = vld [vmem:[#allocation4 + $0x68] sm:$0xf]
        %v328 = vld [vmem:[#allocation4 + $0x6c] sm:$0xff]
        %v329 = vld [vmem:[#allocation4 + $0x74] sm:$0xf]
        %v330 = vld [vmem:[#allocation4 + $0x78] sm:$0xff]
        %v331 = vld [vmem:[#allocation4 + $0x80] sm:$0xf]
        %v332 = vld [vmem:[#allocation4 + $0x84] sm:$0xff]
        %v333 = vld [vmem:[#allocation4 + $0x8c] sm:$0xf]
        %v334 = vld [vmem:[#allocation4 + $0x90] sm:$0xff]
        %v335 = vld [vmem:[#allocation4 + $0x98] sm:$0xf]
        %v336 = vld [vmem:[#allocation4 + $0x9c] sm:$0xff]
        %v337 = vld [vmem:[#allocation4 + $0xa4] sm:$0xf]
        %v338 = vld [vmem:[#allocation4 + $0xa8] sm:$0xff]
        %v339 = vld [vmem:[#allocation4 + $0xb0] sm:$0xf]
        %v340 = vld [vmem:[#allocation4 + $0xb4] sm:$0xff]
        %v341 = vld [vmem:[#allocation4 + $0xbc] sm:$0xf]
        %v342 = vld [vmem:[%s2] sm:$0x7]
        %v344 = vlaneseq
        %v345 = vshrl.u32 %v344, 7
        %v346 = vsub.s32 0, %v345
        %v347 = vrot.slane %v342, %v346
        %v348 = vlaneseq
        %v349 = vshrl.u32 %v348, 7
        %v350 = vsub.s32 1, %v349
        %v351 = vrot.slane %v342, %v350
        %v352 = vlaneseq
        %v353 = vshrl.u32 %v352, 7
        %v354 = vsub.s32 2, %v353
        %v355 = vrot.slane %v342, %v354
        %v375 = vunpack.c.l.b16 %v294
        %v376 = vunpack.c.l.b16 %v295
        %v377 = vunpack.c.l.b16 %v296
        %v378 = vunpack.c.l.b16 %v297
        %v379 = vunpack.c.l.b16 %v298
        %v380 = vunpack.c.l.b16 %v299
        %v381 = vunpack.c.l.b16 %v300
        %v382 = vunpack.c.l.b16 %v301
        %v383 = vunpack.c.l.b16 %v302
        %v384 = vunpack.c.l.b16 %v303
        %v385 = vunpack.c.l.b16 %v304
        %v386 = vunpack.c.l.b16 %v305
        %v387 = vunpack.c.l.b16 %v306
        %v388 = vunpack.c.l.b16 %v307
        %v389 = vunpack.c.l.b16 %v308
        %v390 = vunpack.c.l.b16 %v309
        %v391 = vpack.c.b16 %v376, %v375
        %v392 = vpack.c.b16 %v378, %v377
        %v393 = vpack.c.b16 %v380, %v379
        %v394 = vpack.c.b16 %v382, %v381
        %v395 = vpack.c.b16 %v384, %v383
        %v396 = vpack.c.b16 %v386, %v385
        %v397 = vpack.c.b16 %v388, %v387
        %v398 = vpack.c.b16 %v390, %v389
        %v439 = vunpack.c.l.b16 %v310
        %v440 = vunpack.c.h.b16 %v310
        %v441 = vunpack.c.l.b16 %v311
        %v442 = vunpack.c.l.b16 %v312
        %v443 = vunpack.c.h.b16 %v312
        %v444 = vunpack.c.l.b16 %v313
        %v445 = vunpack.c.l.b16 %v314
        %v446 = vunpack.c.h.b16 %v314
        %v447 = vunpack.c.l.b16 %v315
        %v448 = vunpack.c.l.b16 %v316
        %v449 = vunpack.c.h.b16 %v316
        %v450 = vunpack.c.l.b16 %v317
        %v451 = vunpack.c.l.b16 %v318
        %v452 = vunpack.c.h.b16 %v318
        %v453 = vunpack.c.l.b16 %v319
        %v454 = vunpack.c.l.b16 %v320
        %v455 = vunpack.c.h.b16 %v320
        %v456 = vunpack.c.l.b16 %v321
        %v457 = vunpack.c.l.b16 %v322
        %v458 = vunpack.c.h.b16 %v322
        %v459 = vunpack.c.l.b16 %v323
        %v460 = vunpack.c.l.b16 %v324
        %v461 = vunpack.c.h.b16 %v324
        %v462 = vunpack.c.l.b16 %v325
        %v463 = vunpack.c.l.b16 %v326
        %v464 = vunpack.c.h.b16 %v326
        %v465 = vunpack.c.l.b16 %v327
        %v466 = vunpack.c.l.b16 %v328
        %v467 = vunpack.c.h.b16 %v328
        %v468 = vunpack.c.l.b16 %v329
        %v469 = vunpack.c.l.b16 %v330
        %v470 = vunpack.c.h.b16 %v330
        %v471 = vunpack.c.l.b16 %v331
        %v472 = vunpack.c.l.b16 %v332
        %v473 = vunpack.c.h.b16 %v332
        %v474 = vunpack.c.l.b16 %v333
        %v475 = vunpack.c.l.b16 %v334
        %v476 = vunpack.c.h.b16 %v334
        %v477 = vunpack.c.l.b16 %v335
        %v478 = vunpack.c.l.b16 %v336
        %v479 = vunpack.c.h.b16 %v336
        %v480 = vunpack.c.l.b16 %v337
        %v481 = vunpack.c.l.b16 %v338
        %v482 = vunpack.c.h.b16 %v338
        %v483 = vunpack.c.l.b16 %v339
        %v484 = vunpack.c.l.b16 %v340
        %v485 = vunpack.c.h.b16 %v340
        %v486 = vunpack.c.l.b16 %v341
        %v487 = vpack.c.b16 %v442, %v439
        %v488 = vpack.c.b16 %v443, %v440
        %v489 = vpack.c.b16 %v444, %v441
        %v490 = vpack.c.b16 %v448, %v445
        %v491 = vpack.c.b16 %v449, %v446
        %v492 = vpack.c.b16 %v450, %v447
        %v493 = vpack.c.b16 %v454, %v451
        %v494 = vpack.c.b16 %v455, %v452
        %v495 = vpack.c.b16 %v456, %v453
        %v496 = vpack.c.b16 %v460, %v457
        %v497 = vpack.c.b16 %v461, %v458
        %v498 = vpack.c.b16 %v462, %v459
        %v499 = vpack.c.b16 %v466, %v463
        %v500 = vpack.c.b16 %v467, %v464
        %v501 = vpack.c.b16 %v468, %v465
        %v502 = vpack.c.b16 %v472, %v469
        %v503 = vpack.c.b16 %v473, %v470
        %v504 = vpack.c.b16 %v474, %v471
        %v505 = vpack.c.b16 %v478, %v475
        %v506 = vpack.c.b16 %v479, %v476
        %v507 = vpack.c.b16 %v480, %v477
        %v508 = vpack.c.b16 %v484, %v481
        %v509 = vpack.c.b16 %v485, %v482
        %v510 = vpack.c.b16 %v486, %v483
        %535 = vmatprep.subr.bf16.mxu0 %v488
        %536 = vmatpush1.bf16.msra.mxu0 %v487
        %537 = vmatprep.subr.bf16.mxu0 %v491
        %538 = vmatpush1.bf16.msra.mxu0 %v490
        %539 = vmatprep.subr.bf16.mxu0 %v494
        %540 = vmatpush1.bf16.msra.mxu0 %v493
        %541 = vmatprep.subr.bf16.mxu0 %v497
        %542 = vmatpush1.bf16.msra.mxu0 %v496
        %543 = vmatprep.subr.bf16.mxu0 %v500
        %544 = vmatpush1.bf16.msra.mxu0 %v499
        %545 = vmatprep.subr.bf16.mxu0 %v503
        %546 = vmatpush1.bf16.msra.mxu0 %v502
        %547 = vmatprep.subr.bf16.mxu0 %v506
        %548 = vmatpush1.bf16.msra.mxu0 %v505
        %549 = vmatprep.subr.bf16.mxu0 %v509
        %550 = vmatpush1.bf16.msra.mxu0 %v508
        %551 = vmatprep.subr.bf16.mxu0 0
        %552 = vmatpush1.bf16.msra.mxu0 0
        %553 = vmatprep.subr.bf16.mxu0 0
        %554 = vmatpush1.bf16.msra.mxu0 0
        %555 = vmatprep.subr.bf16.mxu0 0
        %556 = vmatpush1.bf16.msra.mxu0 0
        %557 = vmatprep.subr.bf16.mxu0 0
        %558 = vmatpush1.bf16.msra.mxu0 0
        %559 = vmatprep.subr.bf16.mxu0 0
        %560 = vmatpush1.bf16.msra.mxu0 0
        %561 = vmatprep.subr.bf16.mxu0 0
        %562 = vmatpush1.bf16.msra.mxu0 0
        %563 = vmatprep.subr.bf16.mxu0 0
        %564 = vmatpush1.bf16.msra.mxu0 0
        %565 = vmatprep.subr.bf16.mxu0 0
        %566 = vmatpush1.bf16.msra.mxu0 0
        %567 = vmatprep.mubr.bf16.mxu0 0
        %568 = vmatmul.mubr.bf16.gmra.mrb[0].mxu0 %v391
        %v569 = vpop.f32.mrb[0].mxu0
        %v570 = vadd.f32 %v347, %v569
        %v571 = vpop.f32.mrb[0].mxu0
        %v572 = vadd.f32 %v351, %v571
        %v573 = vpop.f32.mrb[0].mxu0
        %v574 = vadd.f32 %v347, %v573
        %v575 = vpop.f32.mrb[0].mxu0
        %v576 = vadd.f32 %v351, %v575
        %577 = vmatprep.mubr.bf16.mxu0 0
        %578 = vmatmul.mubr.bf16.gmra.mrb[0].mxu0 %v392
        %v579 = vpop.f32.mrb[0].mxu0
        %v580 = vadd.f32 %v347, %v579
        %v581 = vpop.f32.mrb[0].mxu0
        %v582 = vadd.f32 %v351, %v581
        %v583 = vpop.f32.mrb[0].mxu0
        %v584 = vadd.f32 %v347, %v583
        %v585 = vpop.f32.mrb[0].mxu0
        %v586 = vadd.f32 %v351, %v585
        %587 = vmatprep.mubr.bf16.mxu0 0
        %588 = vmatmul.mubr.bf16.gmra.mrb[0].mxu0 %v393
        %v589 = vpop.f32.mrb[0].mxu0
        %v590 = vadd.f32 %v347, %v589
        %v591 = vpop.f32.mrb[0].mxu0
        %v592 = vadd.f32 %v351, %v591
        %v593 = vpop.f32.mrb[0].mxu0
        %v594 = vadd.f32 %v347, %v593
        %v595 = vpop.f32.mrb[0].mxu0
        %v596 = vadd.f32 %v351, %v595
        %597 = vmatprep.mubr.bf16.mxu0 0
        %598 = vmatmul.mubr.bf16.gmra.mrb[0].mxu0 %v394
        %v599 = vpop.f32.mrb[0].mxu0
        %v600 = vadd.f32 %v347, %v599
        %v601 = vpop.f32.mrb[0].mxu0
        %v602 = vadd.f32 %v351, %v601
        %v603 = vpop.f32.mrb[0].mxu0
        %v604 = vadd.f32 %v347, %v603
        %v605 = vpop.f32.mrb[0].mxu0
        %v606 = vadd.f32 %v351, %v605
        %607 = vmatprep.mubr.bf16.mxu0 0
        %608 = vmatmul.mubr.bf16.gmra.mrb[0].mxu0 %v395
        %v609 = vpop.f32.mrb[0].mxu0
        %v610 = vadd.f32 %v347, %v609
        %v611 = vpop.f32.mrb[0].mxu0
        %v612 = vadd.f32 %v351, %v611
        %v613 = vpop.f32.mrb[0].mxu0
        %v614 = vadd.f32 %v347, %v613
        %v615 = vpop.f32.mrb[0].mxu0
        %v616 = vadd.f32 %v351, %v615
        %617 = vmatprep.mubr.bf16.mxu0 0
        %618 = vmatmul.mubr.bf16.gmra.mrb[0].mxu0 %v396
        %v619 = vpop.f32.mrb[0].mxu0
        %v620 = vadd.f32 %v347, %v619
        %v621 = vpop.f32.mrb[0].mxu0
        %v622 = vadd.f32 %v351, %v621
        %v623 = vpop.f32.mrb[0].mxu0
        %v624 = vadd.f32 %v347, %v623
        %v625 = vpop.f32.mrb[0].mxu0
        %v626 = vadd.f32 %v351, %v625
        %627 = vmatprep.mubr.bf16.mxu0 0
        %628 = vmatmul.mubr.bf16.gmra.mrb[0].mxu0 %v397
        %v629 = vpop.f32.mrb[0].mxu0
        %v630 = vadd.f32 %v347, %v629
        %v631 = vpop.f32.mrb[0].mxu0
        %v632 = vadd.f32 %v351, %v631
        %v633 = vpop.f32.mrb[0].mxu0
        %v634 = vadd.f32 %v347, %v633
        %v635 = vpop.f32.mrb[0].mxu0
        %v636 = vadd.f32 %v351, %v635
        %637 = vmatprep.mubr.bf16.mxu0 0
        %638 = vmatmul.mubr.bf16.gmra.mrb[0].mxu0 %v398
        %v639 = vpop.f32.mrb[0].mxu0
        %v640 = vadd.f32 %v347, %v639
        %v641 = vpop.f32.mrb[0].mxu0
        %v642 = vadd.f32 %v351, %v641
        %v643 = vpop.f32.mrb[0].mxu0
        %v644 = vadd.f32 %v347, %v643
        %v645 = vpop.f32.mrb[0].mxu0
        %v646 = vadd.f32 %v351, %v645
        %647 = vdwg.mxu0
        %648 = vmatprep.subr.bf16.mxu0 0
        %649 = vmatpush1.bf16.msra.mxu0 %v489
        %650 = vmatprep.subr.bf16.mxu0 0
        %651 = vmatpush1.bf16.msra.mxu0 %v492
        %652 = vmatprep.subr.bf16.mxu0 0
        %653 = vmatpush1.bf16.msra.mxu0 %v495
        %654 = vmatprep.subr.bf16.mxu0 0
        %655 = vmatpush1.bf16.msra.mxu0 %v498
        %656 = vmatprep.subr.bf16.mxu0 0
        %657 = vmatpush1.bf16.msra.mxu0 %v501
        %658 = vmatprep.subr.bf16.mxu0 0
        %659 = vmatpush1.bf16.msra.mxu0 %v504
        %660 = vmatprep.subr.bf16.mxu0 0
        %661 = vmatpush1.bf16.msra.mxu0 %v507
        %662 = vmatprep.subr.bf16.mxu0 0
        %663 = vmatpush1.bf16.msra.mxu0 %v510
        %664 = vmatprep.subr.bf16.mxu0 0
        %665 = vmatpush1.bf16.msra.mxu0 0
        %666 = vmatprep.subr.bf16.mxu0 0
        %667 = vmatpush1.bf16.msra.mxu0 0
        %668 = vmatprep.subr.bf16.mxu0 0
        %669 = vmatpush1.bf16.msra.mxu0 0
        %670 = vmatprep.subr.bf16.mxu0 0
        %671 = vmatpush1.bf16.msra.mxu0 0
        %672 = vmatprep.subr.bf16.mxu0 0
        %673 = vmatpush1.bf16.msra.mxu0 0
        %674 = vmatprep.subr.bf16.mxu0 0
        %675 = vmatpush1.bf16.msra.mxu0 0
        %676 = vmatprep.subr.bf16.mxu0 0
        %677 = vmatpush1.bf16.msra.mxu0 0
        %678 = vmatprep.subr.bf16.mxu0 0
        %679 = vmatpush1.bf16.msra.mxu0 0
        %680 = vmatprep.mubr.bf16.mxu0 0
        %681 = vmatmul.mubr.bf16.gmra.mrb[0].mxu0 %v391
        %v682 = vpop.f32.mrb[0].mxu0
        %v683 = vadd.f32 %v355, %v682
        %v684 = vpop.f32.mrb[0].mxu0
        %v685 = vpop.f32.mrb[0].mxu0
        %v686 = vadd.f32 %v355, %v685
        %v687 = vpop.f32.mrb[0].mxu0
        %688 = vmatprep.mubr.bf16.mxu0 0
        %689 = vmatmul.mubr.bf16.gmra.mrb[0].mxu0 %v392
        %v690 = vpop.f32.mrb[0].mxu0
        %v691 = vadd.f32 %v355, %v690
        %v692 = vpop.f32.mrb[0].mxu0
        %v693 = vpop.f32.mrb[0].mxu0
        %v694 = vadd.f32 %v355, %v693
        %v695 = vpop.f32.mrb[0].mxu0
        %696 = vmatprep.mubr.bf16.mxu0 0
        %697 = vmatmul.mubr.bf16.gmra.mrb[0].mxu0 %v393
        %v698 = vpop.f32.mrb[0].mxu0
        %v699 = vadd.f32 %v355, %v698
        %v700 = vpop.f32.mrb[0].mxu0
        %v701 = vpop.f32.mrb[0].mxu0
        %v702 = vadd.f32 %v355, %v701
        %v703 = vpop.f32.mrb[0].mxu0
        %704 = vmatprep.mubr.bf16.mxu0 0
        %705 = vmatmul.mubr.bf16.gmra.mrb[0].mxu0 %v394
        %v706 = vpop.f32.mrb[0].mxu0
        %v707 = vadd.f32 %v355, %v706
        %v708 = vpop.f32.mrb[0].mxu0
        %v709 = vpop.f32.mrb[0].mxu0
        %v710 = vadd.f32 %v355, %v709
        %v711 = vpop.f32.mrb[0].mxu0
        %712 = vmatprep.mubr.bf16.mxu0 0
        %713 = vmatmul.mubr.bf16.gmra.mrb[0].mxu0 %v395
        %v714 = vpop.f32.mrb[0].mxu0
        %v715 = vadd.f32 %v355, %v714
        %v716 = vpop.f32.mrb[0].mxu0
        %v717 = vpop.f32.mrb[0].mxu0
        %v718 = vadd.f32 %v355, %v717
        %v719 = vpop.f32.mrb[0].mxu0
        %720 = vmatprep.mubr.bf16.mxu0 0
        %721 = vmatmul.mubr.bf16.gmra.mrb[0].mxu0 %v396
        %v722 = vpop.f32.mrb[0].mxu0
        %v723 = vadd.f32 %v355, %v722
        %v724 = vpop.f32.mrb[0].mxu0
        %v725 = vpop.f32.mrb[0].mxu0
        %v726 = vadd.f32 %v355, %v725
        %v727 = vpop.f32.mrb[0].mxu0
        %728 = vmatprep.mubr.bf16.mxu0 0
        %729 = vmatmul.mubr.bf16.gmra.mrb[0].mxu0 %v397
        %v730 = vpop.f32.mrb[0].mxu0
        %v731 = vadd.f32 %v355, %v730
        %v732 = vpop.f32.mrb[0].mxu0
        %v733 = vpop.f32.mrb[0].mxu0
        %v734 = vadd.f32 %v355, %v733
        %v735 = vpop.f32.mrb[0].mxu0
        %736 = vmatprep.mubr.bf16.mxu0 0
        %737 = vmatmul.mubr.bf16.gmra.mrb[0].mxu0 %v398
        %v738 = vpop.f32.mrb[0].mxu0
        %v739 = vadd.f32 %v355, %v738
        %v740 = vpop.f32.mrb[0].mxu0
        %v741 = vpop.f32.mrb[0].mxu0
        %v742 = vadd.f32 %v355, %v741
        %v743 = vpop.f32.mrb[0].mxu0
        %744 = vdwg.mxu0
        %v745 = vmul.f32 %v570, 0.17677669
        %v746 = vmul.f32 %v574, 0.17677669
        %v747 = vmul.f32 %v580, 0.17677669
        %v748 = vmul.f32 %v584, 0.17677669
        %v749 = vmul.f32 %v590, 0.17677669
        %v750 = vmul.f32 %v594, 0.17677669
        %v751 = vmul.f32 %v600, 0.17677669
        %v752 = vmul.f32 %v604, 0.17677669
        %v753 = vmul.f32 %v610, 0.17677669
        %v754 = vmul.f32 %v614, 0.17677669
        %v755 = vmul.f32 %v620, 0.17677669
        %v756 = vmul.f32 %v624, 0.17677669
        %v757 = vmul.f32 %v630, 0.17677669
        %v758 = vmul.f32 %v634, 0.17677669
        %v759 = vmul.f32 %v640, 0.17677669
        %v760 = vmul.f32 %v644, 0.17677669
        %v761 = vpack.c.bf16 %v746, %v745
        %v762 = vpack.c.bf16 %v748, %v747
        %v763 = vpack.c.bf16 %v750, %v749
        %v764 = vpack.c.bf16 %v752, %v751
        %v765 = vpack.c.bf16 %v754, %v753
        %v766 = vpack.c.bf16 %v756, %v755
        %v767 = vpack.c.bf16 %v758, %v757
        %v768 = vpack.c.bf16 %v760, %v759
        %v777 = vunpack.c.l.b16 %v761
        %v778 = vunpack.c.h.b16 %v761
        %v779 = vunpack.c.l.b16 %v762
        %v780 = vunpack.c.h.b16 %v762
        %v781 = vunpack.c.l.b16 %v763
        %v782 = vunpack.c.h.b16 %v763
        %v783 = vunpack.c.l.b16 %v764
        %v784 = vunpack.c.h.b16 %v764
        %v785 = vunpack.c.l.b16 %v765
        %v786 = vunpack.c.h.b16 %v765
        %v787 = vunpack.c.l.b16 %v766
        %v788 = vunpack.c.h.b16 %v766
        %v789 = vunpack.c.l.b16 %v767
        %v790 = vunpack.c.h.b16 %v767
        %v791 = vunpack.c.l.b16 %v768
        %v792 = vunpack.c.h.b16 %v768
        %v793 = vpack.c.b16 %v777, %v777
        %v794 = vpack.c.b16 %v778, %v778
        %v795 = vpack.c.b16 %v779, %v779
        %v796 = vpack.c.b16 %v780, %v780
        %v797 = vpack.c.b16 %v781, %v781
        %v798 = vpack.c.b16 %v782, %v782
        %v799 = vpack.c.b16 %v783, %v783
        %v800 = vpack.c.b16 %v784, %v784
        %v801 = vpack.c.b16 %v785, %v785
        %v802 = vpack.c.b16 %v786, %v786
        %v803 = vpack.c.b16 %v787, %v787
        %v804 = vpack.c.b16 %v788, %v788
        %v805 = vpack.c.b16 %v789, %v789
        %v806 = vpack.c.b16 %v790, %v790
        %v807 = vpack.c.b16 %v791, %v791
        %v808 = vpack.c.b16 %v792, %v792
        %vm825 = vcmask 257024
        %826 = vst.msk [vmem:[%s276] sm:$0xf] %vm825, %v793
        %827 = vst.msk [vmem:[%s276 + $0x4] sm:$0xf] %vm825, %v794
        %828 = vst.msk [vmem:[%s276 + $0x8] sm:$0xf] %vm825, %v795
        %829 = vst.msk [vmem:[%s276 + $0xc] sm:$0xf] %vm825, %v796
        %830 = vst.msk [vmem:[%s276 + $0x10] sm:$0xf] %vm825, %v797
        %831 = vst.msk [vmem:[%s276 + $0x14] sm:$0xf] %vm825, %v798
        %832 = vst.msk [vmem:[%s276 + $0x18] sm:$0xf] %vm825, %v799
        %833 = vst.msk [vmem:[%s276 + $0x1c] sm:$0xf] %vm825, %v800
        %834 = vst.msk [vmem:[%s276 + $0x20] sm:$0xf] %vm825, %v801
        %835 = vst.msk [vmem:[%s276 + $0x24] sm:$0xf] %vm825, %v802
        %836 = vst.msk [vmem:[%s276 + $0x28] sm:$0xf] %vm825, %v803
        %837 = vst.msk [vmem:[%s276 + $0x2c] sm:$0xf] %vm825, %v804
        %838 = vst.msk [vmem:[%s276 + $0x30] sm:$0xf] %vm825, %v805
        %839 = vst.msk [vmem:[%s276 + $0x34] sm:$0xf] %vm825, %v806
        %840 = vst.msk [vmem:[%s276 + $0x38] sm:$0xf] %vm825, %v807
        %841 = vst.msk [vmem:[%s276 + $0x3c] sm:$0xf] %vm825, %v808
        %v842 = vpack.c.bf16 %v576, %v572
        %v843 = vpack.c.bf16 %v586, %v582
        %v844 = vpack.c.bf16 %v596, %v592
        %v845 = vpack.c.bf16 %v606, %v602
        %v846 = vpack.c.bf16 %v616, %v612
        %v847 = vpack.c.bf16 %v626, %v622
        %v848 = vpack.c.bf16 %v636, %v632
        %v849 = vpack.c.bf16 %v646, %v642
        %v858 = vunpack.c.l.b16 %v842
        %v859 = vunpack.c.h.b16 %v842
        %v860 = vunpack.c.l.b16 %v843
        %v861 = vunpack.c.h.b16 %v843
        %v862 = vunpack.c.l.b16 %v844
        %v863 = vunpack.c.h.b16 %v844
        %v864 = vunpack.c.l.b16 %v845
        %v865 = vunpack.c.h.b16 %v845
        %v866 = vunpack.c.l.b16 %v846
        %v867 = vunpack.c.h.b16 %v846
        %v868 = vunpack.c.l.b16 %v847
        %v869 = vunpack.c.h.b16 %v847
        %v870 = vunpack.c.l.b16 %v848
        %v871 = vunpack.c.h.b16 %v848
        %v872 = vunpack.c.l.b16 %v849
        %v873 = vunpack.c.h.b16 %v849
        %v874 = vpack.c.b16 %v858, %v858
        %v875 = vpack.c.b16 %v859, %v859
        %v876 = vpack.c.b16 %v860, %v860
        %v877 = vpack.c.b16 %v861, %v861
        %v878 = vpack.c.b16 %v862, %v862
        %v879 = vpack.c.b16 %v863, %v863
        %v880 = vpack.c.b16 %v864, %v864
        %v881 = vpack.c.b16 %v865, %v865
        %v882 = vpack.c.b16 %v866, %v866
        %v883 = vpack.c.b16 %v867, %v867
        %v884 = vpack.c.b16 %v868, %v868
        %v885 = vpack.c.b16 %v869, %v869
        %v886 = vpack.c.b16 %v870, %v870
        %v887 = vpack.c.b16 %v871, %v871
        %v888 = vpack.c.b16 %v872, %v872
        %v889 = vpack.c.b16 %v873, %v873
        %906 = vst.msk [vmem:[%s282] sm:$0xf] %vm825, %v874
        %907 = vst.msk [vmem:[%s282 + $0x4] sm:$0xf] %vm825, %v875
        %908 = vst.msk [vmem:[%s282 + $0x8] sm:$0xf] %vm825, %v876
        %909 = vst.msk [vmem:[%s282 + $0xc] sm:$0xf] %vm825, %v877
        %910 = vst.msk [vmem:[%s282 + $0x10] sm:$0xf] %vm825, %v878
        %911 = vst.msk [vmem:[%s282 + $0x14] sm:$0xf] %vm825, %v879
        %912 = vst.msk [vmem:[%s282 + $0x18] sm:$0xf] %vm825, %v880
        %913 = vst.msk [vmem:[%s282 + $0x1c] sm:$0xf] %vm825, %v881
        %914 = vst.msk [vmem:[%s282 + $0x20] sm:$0xf] %vm825, %v882
        %915 = vst.msk [vmem:[%s282 + $0x24] sm:$0xf] %vm825, %v883
        %916 = vst.msk [vmem:[%s282 + $0x28] sm:$0xf] %vm825, %v884
        %917 = vst.msk [vmem:[%s282 + $0x2c] sm:$0xf] %vm825, %v885
        %918 = vst.msk [vmem:[%s282 + $0x30] sm:$0xf] %vm825, %v886
        %919 = vst.msk [vmem:[%s282 + $0x34] sm:$0xf] %vm825, %v887
        %920 = vst.msk [vmem:[%s282 + $0x38] sm:$0xf] %vm825, %v888
        %921 = vst.msk [vmem:[%s282 + $0x3c] sm:$0xf] %vm825, %v889
        %v922 = vpack.c.bf16 %v686, %v683
        %v923 = vpack.c.bf16 %v694, %v691
        %v924 = vpack.c.bf16 %v702, %v699
        %v925 = vpack.c.bf16 %v710, %v707
        %v926 = vpack.c.bf16 %v718, %v715
        %v927 = vpack.c.bf16 %v726, %v723
        %v928 = vpack.c.bf16 %v734, %v731
        %v929 = vpack.c.bf16 %v742, %v739
        %v938 = vunpack.c.l.b16 %v922
        %v939 = vunpack.c.h.b16 %v922
        %v940 = vunpack.c.l.b16 %v923
        %v941 = vunpack.c.h.b16 %v923
        %v942 = vunpack.c.l.b16 %v924
        %v943 = vunpack.c.h.b16 %v924
        %v944 = vunpack.c.l.b16 %v925
        %v945 = vunpack.c.h.b16 %v925
        %v946 = vunpack.c.l.b16 %v926
        %v947 = vunpack.c.h.b16 %v926
        %v948 = vunpack.c.l.b16 %v927
        %v949 = vunpack.c.h.b16 %v927
        %v950 = vunpack.c.l.b16 %v928
        %v951 = vunpack.c.h.b16 %v928
        %v952 = vunpack.c.l.b16 %v929
        %v953 = vunpack.c.h.b16 %v929
        %v954 = vpack.c.b16 %v938, %v938
        %v955 = vpack.c.b16 %v939, %v939
        %v956 = vpack.c.b16 %v940, %v940
        %v957 = vpack.c.b16 %v941, %v941
        %v958 = vpack.c.b16 %v942, %v942
        %v959 = vpack.c.b16 %v943, %v943
        %v960 = vpack.c.b16 %v944, %v944
        %v961 = vpack.c.b16 %v945, %v945
        %v962 = vpack.c.b16 %v946, %v946
        %v963 = vpack.c.b16 %v947, %v947
        %v964 = vpack.c.b16 %v948, %v948
        %v965 = vpack.c.b16 %v949, %v949
        %v966 = vpack.c.b16 %v950, %v950
        %v967 = vpack.c.b16 %v951, %v951
        %v968 = vpack.c.b16 %v952, %v952
        %v969 = vpack.c.b16 %v953, %v953
        %986 = vst.msk [vmem:[%s288] sm:$0xf] %vm825, %v954
        %987 = vst.msk [vmem:[%s288 + $0x4] sm:$0xf] %vm825, %v955
        %988 = vst.msk [vmem:[%s288 + $0x8] sm:$0xf] %vm825, %v956
        %989 = vst.msk [vmem:[%s288 + $0xc] sm:$0xf] %vm825, %v957
        %990 = vst.msk [vmem:[%s288 + $0x10] sm:$0xf] %vm825, %v958
        %991 = vst.msk [vmem:[%s288 + $0x14] sm:$0xf] %vm825, %v959
        %992 = vst.msk [vmem:[%s288 + $0x18] sm:$0xf] %vm825, %v960
        %993 = vst.msk [vmem:[%s288 + $0x1c] sm:$0xf] %vm825, %v961
        %994 = vst.msk [vmem:[%s288 + $0x20] sm:$0xf] %vm825, %v962
        %995 = vst.msk [vmem:[%s288 + $0x24] sm:$0xf] %vm825, %v963
        %996 = vst.msk [vmem:[%s288 + $0x28] sm:$0xf] %vm825, %v964
        %997 = vst.msk [vmem:[%s288 + $0x2c] sm:$0xf] %vm825, %v965
        %998 = vst.msk [vmem:[%s288 + $0x30] sm:$0xf] %vm825, %v966
        %999 = vst.msk [vmem:[%s288 + $0x34] sm:$0xf] %vm825, %v967
        %1000 = vst.msk [vmem:[%s288 + $0x38] sm:$0xf] %vm825, %v968
        %1001 = vst.msk [vmem:[%s288 + $0x3c] sm:$0xf] %vm825, %v969
        %1002 = vrot.lane.b32.xlu0 %v793, 96
        %v1003 = vpop.permute.xlu0 %1002
        %1004 = vrot.lane.b32.xlu0 %v794, 96
        %v1005 = vpop.permute.xlu0 %1004
        %1006 = vrot.lane.b32.xlu0 %v795, 96
        %v1007 = vpop.permute.xlu0 %1006
        %1008 = vrot.lane.b32.xlu0 %v796, 96
        %v1009 = vpop.permute.xlu0 %1008
        %1010 = vrot.lane.b32.xlu0 %v797, 96
        %v1011 = vpop.permute.xlu0 %1010
        %1012 = vrot.lane.b32.xlu0 %v798, 96
        %v1013 = vpop.permute.xlu0 %1012
        %1014 = vrot.lane.b32.xlu0 %v799, 96
        %v1015 = vpop.permute.xlu0 %1014
        %1016 = vrot.lane.b32.xlu0 %v800, 96
        %v1017 = vpop.permute.xlu0 %1016
        %1018 = vrot.lane.b32.xlu0 %v801, 96
        %v1019 = vpop.permute.xlu0 %1018
        %1020 = vrot.lane.b32.xlu0 %v802, 96
        %v1021 = vpop.permute.xlu0 %1020
        %1022 = vrot.lane.b32.xlu0 %v803, 96
        %v1023 = vpop.permute.xlu0 %1022
        %1024 = vrot.lane.b32.xlu0 %v804, 96
        %v1025 = vpop.permute.xlu0 %1024
        %1026 = vrot.lane.b32.xlu0 %v805, 96
        %v1027 = vpop.permute.xlu0 %1026
        %1028 = vrot.lane.b32.xlu0 %v806, 96
        %v1029 = vpop.permute.xlu0 %1028
        %1030 = vrot.lane.b32.xlu0 %v807, 96
        %v1031 = vpop.permute.xlu0 %1030
        %1032 = vrot.lane.b32.xlu0 %v808, 96
        %v1033 = vpop.permute.xlu0 %1032
        %s1050 = scalar_lea.vmem %s276, 64 [#allocation6]
        %1051 = vst.msk [vmem:[%s1050] sm:$0xf] %vm825, %v1003
        %1052 = vst.msk [vmem:[%s1050 + $0x4] sm:$0xf] %vm825, %v1005
        %1053 = vst.msk [vmem:[%s1050 + $0x8] sm:$0xf] %vm825, %v1007
        %1054 = vst.msk [vmem:[%s1050 + $0xc] sm:$0xf] %vm825, %v1009
        %1055 = vst.msk [vmem:[%s1050 + $0x10] sm:$0xf] %vm825, %v1011
        %1056 = vst.msk [vmem:[%s1050 + $0x14] sm:$0xf] %vm825, %v1013
        %1057 = vst.msk [vmem:[%s1050 + $0x18] sm:$0xf] %vm825, %v1015
        %1058 = vst.msk [vmem:[%s1050 + $0x1c] sm:$0xf] %vm825, %v1017
        %1059 = vst.msk [vmem:[%s1050 + $0x20] sm:$0xf] %vm825, %v1019
        %1060 = vst.msk [vmem:[%s1050 + $0x24] sm:$0xf] %vm825, %v1021
        %1061 = vst.msk [vmem:[%s1050 + $0x28] sm:$0xf] %vm825, %v1023
        %1062 = vst.msk [vmem:[%s1050 + $0x2c] sm:$0xf] %vm825, %v1025
        %1063 = vst.msk [vmem:[%s1050 + $0x30] sm:$0xf] %vm825, %v1027
        %1064 = vst.msk [vmem:[%s1050 + $0x34] sm:$0xf] %vm825, %v1029
        %1065 = vst.msk [vmem:[%s1050 + $0x38] sm:$0xf] %vm825, %v1031
        %1066 = vst.msk [vmem:[%s1050 + $0x3c] sm:$0xf] %vm825, %v1033
        %1067 = vrot.lane.b32.xlu0 %v874, 96
        %v1068 = vpop.permute.xlu0 %1067
        %1069 = vrot.lane.b32.xlu0 %v875, 96
        %v1070 = vpop.permute.xlu0 %1069
        %1071 = vrot.lane.b32.xlu0 %v876, 96
        %v1072 = vpop.permute.xlu0 %1071
        %1073 = vrot.lane.b32.xlu0 %v877, 96
        %v1074 = vpop.permute.xlu0 %1073
        %1075 = vrot.lane.b32.xlu0 %v878, 96
        %v1076 = vpop.permute.xlu0 %1075
        %1077 = vrot.lane.b32.xlu0 %v879, 96
        %v1078 = vpop.permute.xlu0 %1077
        %1079 = vrot.lane.b32.xlu0 %v880, 96
        %v1080 = vpop.permute.xlu0 %1079
        %1081 = vrot.lane.b32.xlu0 %v881, 96
        %v1082 = vpop.permute.xlu0 %1081
        %1083 = vrot.lane.b32.xlu0 %v882, 96
        %v1084 = vpop.permute.xlu0 %1083
        %1085 = vrot.lane.b32.xlu0 %v883, 96
        %v1086 = vpop.permute.xlu0 %1085
        %1087 = vrot.lane.b32.xlu0 %v884, 96
        %v1088 = vpop.permute.xlu0 %1087
        %1089 = vrot.lane.b32.xlu0 %v885, 96
        %v1090 = vpop.permute.xlu0 %1089
        %1091 = vrot.lane.b32.xlu0 %v886, 96
        %v1092 = vpop.permute.xlu0 %1091
        %1093 = vrot.lane.b32.xlu0 %v887, 96
        %v1094 = vpop.permute.xlu0 %1093
        %1095 = vrot.lane.b32.xlu0 %v888, 96
        %v1096 = vpop.permute.xlu0 %1095
        %1097 = vrot.lane.b32.xlu0 %v889, 96
        %v1098 = vpop.permute.xlu0 %1097
        %s1115 = scalar_lea.vmem %s282, 64 [#allocation7]
        %1116 = vst.msk [vmem:[%s1115] sm:$0xf] %vm825, %v1068
        %1117 = vst.msk [vmem:[%s1115 + $0x4] sm:$0xf] %vm825, %v1070
        %1118 = vst.msk [vmem:[%s1115 + $0x8] sm:$0xf] %vm825, %v1072
        %1119 = vst.msk [vmem:[%s1115 + $0xc] sm:$0xf] %vm825, %v1074
        %1120 = vst.msk [vmem:[%s1115 + $0x10] sm:$0xf] %vm825, %v1076
        %1121 = vst.msk [vmem:[%s1115 + $0x14] sm:$0xf] %vm825, %v1078
        %1122 = vst.msk [vmem:[%s1115 + $0x18] sm:$0xf] %vm825, %v1080
        %1123 = vst.msk [vmem:[%s1115 + $0x1c] sm:$0xf] %vm825, %v1082
        %1124 = vst.msk [vmem:[%s1115 + $0x20] sm:$0xf] %vm825, %v1084
        %1125 = vst.msk [vmem:[%s1115 + $0x24] sm:$0xf] %vm825, %v1086
        %1126 = vst.msk [vmem:[%s1115 + $0x28] sm:$0xf] %vm825, %v1088
        %1127 = vst.msk [vmem:[%s1115 + $0x2c] sm:$0xf] %vm825, %v1090
        %1128 = vst.msk [vmem:[%s1115 + $0x30] sm:$0xf] %vm825, %v1092
        %1129 = vst.msk [vmem:[%s1115 + $0x34] sm:$0xf] %vm825, %v1094
        %1130 = vst.msk [vmem:[%s1115 + $0x38] sm:$0xf] %vm825, %v1096
        %1131 = vst.msk [vmem:[%s1115 + $0x3c] sm:$0xf] %vm825, %v1098
        %1132 = vrot.lane.b32.xlu0 %v954, 96
        %v1133 = vpop.permute.xlu0 %1132
        %1134 = vrot.lane.b32.xlu0 %v955, 96
        %v1135 = vpop.permute.xlu0 %1134
        %1136 = vrot.lane.b32.xlu0 %v956, 96
        %v1137 = vpop.permute.xlu0 %1136
        %1138 = vrot.lane.b32.xlu0 %v957, 96
        %v1139 = vpop.permute.xlu0 %1138
        %1140 = vrot.lane.b32.xlu0 %v958, 96
        %v1141 = vpop.permute.xlu0 %1140
        %1142 = vrot.lane.b32.xlu0 %v959, 96
        %v1143 = vpop.permute.xlu0 %1142
        %1144 = vrot.lane.b32.xlu0 %v960, 96
        %v1145 = vpop.permute.xlu0 %1144
        %1146 = vrot.lane.b32.xlu0 %v961, 96
        %v1147 = vpop.permute.xlu0 %1146
        %1148 = vrot.lane.b32.xlu0 %v962, 96
        %v1149 = vpop.permute.xlu0 %1148
        %1150 = vrot.lane.b32.xlu0 %v963, 96
        %v1151 = vpop.permute.xlu0 %1150
        %1152 = vrot.lane.b32.xlu0 %v964, 96
        %v1153 = vpop.permute.xlu0 %1152
        %1154 = vrot.lane.b32.xlu0 %v965, 96
        %v1155 = vpop.permute.xlu0 %1154
        %1156 = vrot.lane.b32.xlu0 %v966, 96
        %v1157 = vpop.permute.xlu0 %1156
        %1158 = vrot.lane.b32.xlu0 %v967, 96
        %v1159 = vpop.permute.xlu0 %1158
        %1160 = vrot.lane.b32.xlu0 %v968, 96
        %v1161 = vpop.permute.xlu0 %1160
        %1162 = vrot.lane.b32.xlu0 %v969, 96
        %v1163 = vpop.permute.xlu0 %1162
        %s1180 = scalar_lea.vmem %s288, 64 [#allocation8]
        %1181 = vst.msk [vmem:[%s1180] sm:$0xf] %vm825, %v1133
        %1182 = vst.msk [vmem:[%s1180 + $0x4] sm:$0xf] %vm825, %v1135
        %1183 = vst.msk [vmem:[%s1180 + $0x8] sm:$0xf] %vm825, %v1137
        %1184 = vst.msk [vmem:[%s1180 + $0xc] sm:$0xf] %vm825, %v1139
        %1185 = vst.msk [vmem:[%s1180 + $0x10] sm:$0xf] %vm825, %v1141
        %1186 = vst.msk [vmem:[%s1180 + $0x14] sm:$0xf] %vm825, %v1143
        %1187 = vst.msk [vmem:[%s1180 + $0x18] sm:$0xf] %vm825, %v1145
        %1188 = vst.msk [vmem:[%s1180 + $0x1c] sm:$0xf] %vm825, %v1147
        %1189 = vst.msk [vmem:[%s1180 + $0x20] sm:$0xf] %vm825, %v1149
        %1190 = vst.msk [vmem:[%s1180 + $0x24] sm:$0xf] %vm825, %v1151
        %1191 = vst.msk [vmem:[%s1180 + $0x28] sm:$0xf] %vm825, %v1153
        %1192 = vst.msk [vmem:[%s1180 + $0x2c] sm:$0xf] %vm825, %v1155
        %1193 = vst.msk [vmem:[%s1180 + $0x30] sm:$0xf] %vm825, %v1157
        %1194 = vst.msk [vmem:[%s1180 + $0x34] sm:$0xf] %vm825, %v1159
        %1195 = vst.msk [vmem:[%s1180 + $0x38] sm:$0xf] %vm825, %v1161
        %1196 = vst.msk [vmem:[%s1180 + $0x3c] sm:$0xf] %vm825, %v1163
        %1197 = vrot.lane.b32.xlu0 %v793, 64
        %v1198 = vpop.permute.xlu0 %1197
        %1199 = vrot.lane.b32.xlu0 %v794, 64
        %v1200 = vpop.permute.xlu0 %1199
        %1201 = vrot.lane.b32.xlu0 %v795, 64
        %v1202 = vpop.permute.xlu0 %1201
        %1203 = vrot.lane.b32.xlu0 %v796, 64
        %v1204 = vpop.permute.xlu0 %1203
        %1205 = vrot.lane.b32.xlu0 %v797, 64
        %v1206 = vpop.permute.xlu0 %1205
        %1207 = vrot.lane.b32.xlu0 %v798, 64
        %v1208 = vpop.permute.xlu0 %1207
        %1209 = vrot.lane.b32.xlu0 %v799, 64
        %v1210 = vpop.permute.xlu0 %1209
        %1211 = vrot.lane.b32.xlu0 %v800, 64
        %v1212 = vpop.permute.xlu0 %1211
        %1213 = vrot.lane.b32.xlu0 %v801, 64
        %v1214 = vpop.permute.xlu0 %1213
        %1215 = vrot.lane.b32.xlu0 %v802, 64
        %v1216 = vpop.permute.xlu0 %1215
        %1217 = vrot.lane.b32.xlu0 %v803, 64
        %v1218 = vpop.permute.xlu0 %1217
        %1219 = vrot.lane.b32.xlu0 %v804, 64
        %v1220 = vpop.permute.xlu0 %1219
        %1221 = vrot.lane.b32.xlu0 %v805, 64
        %v1222 = vpop.permute.xlu0 %1221
        %1223 = vrot.lane.b32.xlu0 %v806, 64
        %v1224 = vpop.permute.xlu0 %1223
        %1225 = vrot.lane.b32.xlu0 %v807, 64
        %v1226 = vpop.permute.xlu0 %1225
        %1227 = vrot.lane.b32.xlu0 %v808, 64
        %v1228 = vpop.permute.xlu0 %1227
        %s1245 = scalar_lea.vmem %s276, 128 [#allocation6]
        %1246 = vst.msk [vmem:[%s1245] sm:$0xf] %vm825, %v1198
        %1247 = vst.msk [vmem:[%s1245 + $0x4] sm:$0xf] %vm825, %v1200
        %1248 = vst.msk [vmem:[%s1245 + $0x8] sm:$0xf] %vm825, %v1202
        %1249 = vst.msk [vmem:[%s1245 + $0xc] sm:$0xf] %vm825, %v1204
        %1250 = vst.msk [vmem:[%s1245 + $0x10] sm:$0xf] %vm825, %v1206
        %1251 = vst.msk [vmem:[%s1245 + $0x14] sm:$0xf] %vm825, %v1208
        %1252 = vst.msk [vmem:[%s1245 + $0x18] sm:$0xf] %vm825, %v1210
        %1253 = vst.msk [vmem:[%s1245 + $0x1c] sm:$0xf] %vm825, %v1212
        %1254 = vst.msk [vmem:[%s1245 + $0x20] sm:$0xf] %vm825, %v1214
        %1255 = vst.msk [vmem:[%s1245 + $0x24] sm:$0xf] %vm825, %v1216
        %1256 = vst.msk [vmem:[%s1245 + $0x28] sm:$0xf] %vm825, %v1218
        %1257 = vst.msk [vmem:[%s1245 + $0x2c] sm:$0xf] %vm825, %v1220
        %1258 = vst.msk [vmem:[%s1245 + $0x30] sm:$0xf] %vm825, %v1222
        %1259 = vst.msk [vmem:[%s1245 + $0x34] sm:$0xf] %vm825, %v1224
        %1260 = vst.msk [vmem:[%s1245 + $0x38] sm:$0xf] %vm825, %v1226
        %1261 = vst.msk [vmem:[%s1245 + $0x3c] sm:$0xf] %vm825, %v1228
        %1262 = vrot.lane.b32.xlu0 %v874, 64
        %v1263 = vpop.permute.xlu0 %1262
        %1264 = vrot.lane.b32.xlu0 %v875, 64
        %v1265 = vpop.permute.xlu0 %1264
        %1266 = vrot.lane.b32.xlu0 %v876, 64
        %v1267 = vpop.permute.xlu0 %1266
        %1268 = vrot.lane.b32.xlu0 %v877, 64
        %v1269 = vpop.permute.xlu0 %1268
        %1270 = vrot.lane.b32.xlu0 %v878, 64
        %v1271 = vpop.permute.xlu0 %1270
        %1272 = vrot.lane.b32.xlu0 %v879, 64
        %v1273 = vpop.permute.xlu0 %1272
        %1274 = vrot.lane.b32.xlu0 %v880, 64
        %v1275 = vpop.permute.xlu0 %1274
        %1276 = vrot.lane.b32.xlu0 %v881, 64
        %v1277 = vpop.permute.xlu0 %1276
        %1278 = vrot.lane.b32.xlu0 %v882, 64
        %v1279 = vpop.permute.xlu0 %1278
        %1280 = vrot.lane.b32.xlu0 %v883, 64
        %v1281 = vpop.permute.xlu0 %1280
        %1282 = vrot.lane.b32.xlu0 %v884, 64
        %v1283 = vpop.permute.xlu0 %1282
        %1284 = vrot.lane.b32.xlu0 %v885, 64
        %v1285 = vpop.permute.xlu0 %1284
        %1286 = vrot.lane.b32.xlu0 %v886, 64
        %v1287 = vpop.permute.xlu0 %1286
        %1288 = vrot.lane.b32.xlu0 %v887, 64
        %v1289 = vpop.permute.xlu0 %1288
        %1290 = vrot.lane.b32.xlu0 %v888, 64
        %v1291 = vpop.permute.xlu0 %1290
        %1292 = vrot.lane.b32.xlu0 %v889, 64
        %v1293 = vpop.permute.xlu0 %1292
        %s1310 = scalar_lea.vmem %s282, 128 [#allocation7]
        %1311 = vst.msk [vmem:[%s1310] sm:$0xf] %vm825, %v1263
        %1312 = vst.msk [vmem:[%s1310 + $0x4] sm:$0xf] %vm825, %v1265
        %1313 = vst.msk [vmem:[%s1310 + $0x8] sm:$0xf] %vm825, %v1267
        %1314 = vst.msk [vmem:[%s1310 + $0xc] sm:$0xf] %vm825, %v1269
        %1315 = vst.msk [vmem:[%s1310 + $0x10] sm:$0xf] %vm825, %v1271
        %1316 = vst.msk [vmem:[%s1310 + $0x14] sm:$0xf] %vm825, %v1273
        %1317 = vst.msk [vmem:[%s1310 + $0x18] sm:$0xf] %vm825, %v1275
        %1318 = vst.msk [vmem:[%s1310 + $0x1c] sm:$0xf] %vm825, %v1277
        %1319 = vst.msk [vmem:[%s1310 + $0x20] sm:$0xf] %vm825, %v1279
        %1320 = vst.msk [vmem:[%s1310 + $0x24] sm:$0xf] %vm825, %v1281
        %1321 = vst.msk [vmem:[%s1310 + $0x28] sm:$0xf] %vm825, %v1283
        %1322 = vst.msk [vmem:[%s1310 + $0x2c] sm:$0xf] %vm825, %v1285
        %1323 = vst.msk [vmem:[%s1310 + $0x30] sm:$0xf] %vm825, %v1287
        %1324 = vst.msk [vmem:[%s1310 + $0x34] sm:$0xf] %vm825, %v1289
        %1325 = vst.msk [vmem:[%s1310 + $0x38] sm:$0xf] %vm825, %v1291
        %1326 = vst.msk [vmem:[%s1310 + $0x3c] sm:$0xf] %vm825, %v1293
        %1327 = vrot.lane.b32.xlu0 %v954, 64
        %v1328 = vpop.permute.xlu0 %1327
        %1329 = vrot.lane.b32.xlu0 %v955, 64
        %v1330 = vpop.permute.xlu0 %1329
        %1331 = vrot.lane.b32.xlu0 %v956, 64
        %v1332 = vpop.permute.xlu0 %1331
        %1333 = vrot.lane.b32.xlu0 %v957, 64
        %v1334 = vpop.permute.xlu0 %1333
        %1335 = vrot.lane.b32.xlu0 %v958, 64
        %v1336 = vpop.permute.xlu0 %1335
        %1337 = vrot.lane.b32.xlu0 %v959, 64
        %v1338 = vpop.permute.xlu0 %1337
        %1339 = vrot.lane.b32.xlu0 %v960, 64
        %v1340 = vpop.permute.xlu0 %1339
        %1341 = vrot.lane.b32.xlu0 %v961, 64
        %v1342 = vpop.permute.xlu0 %1341
        %1343 = vrot.lane.b32.xlu0 %v962, 64
        %v1344 = vpop.permute.xlu0 %1343
        %1345 = vrot.lane.b32.xlu0 %v963, 64
        %v1346 = vpop.permute.xlu0 %1345
        %1347 = vrot.lane.b32.xlu0 %v964, 64
        %v1348 = vpop.permute.xlu0 %1347
        %1349 = vrot.lane.b32.xlu0 %v965, 64
        %v1350 = vpop.permute.xlu0 %1349
        %1351 = vrot.lane.b32.xlu0 %v966, 64
        %v1352 = vpop.permute.xlu0 %1351
        %1353 = vrot.lane.b32.xlu0 %v967, 64
        %v1354 = vpop.permute.xlu0 %1353
        %1355 = vrot.lane.b32.xlu0 %v968, 64
        %v1356 = vpop.permute.xlu0 %1355
        %1357 = vrot.lane.b32.xlu0 %v969, 64
        %v1358 = vpop.permute.xlu0 %1357
        %s1375 = scalar_lea.vmem %s288, 128 [#allocation8]
        %1376 = vst.msk [vmem:[%s1375] sm:$0xf] %vm825, %v1328
        %1377 = vst.msk [vmem:[%s1375 + $0x4] sm:$0xf] %vm825, %v1330
        %1378 = vst.msk [vmem:[%s1375 + $0x8] sm:$0xf] %vm825, %v1332
        %1379 = vst.msk [vmem:[%s1375 + $0xc] sm:$0xf] %vm825, %v1334
        %1380 = vst.msk [vmem:[%s1375 + $0x10] sm:$0xf] %vm825, %v1336
        %1381 = vst.msk [vmem:[%s1375 + $0x14] sm:$0xf] %vm825, %v1338
        %1382 = vst.msk [vmem:[%s1375 + $0x18] sm:$0xf] %vm825, %v1340
        %1383 = vst.msk [vmem:[%s1375 + $0x1c] sm:$0xf] %vm825, %v1342
        %1384 = vst.msk [vmem:[%s1375 + $0x20] sm:$0xf] %vm825, %v1344
        %1385 = vst.msk [vmem:[%s1375 + $0x24] sm:$0xf] %vm825, %v1346
        %1386 = vst.msk [vmem:[%s1375 + $0x28] sm:$0xf] %vm825, %v1348
        %1387 = vst.msk [vmem:[%s1375 + $0x2c] sm:$0xf] %vm825, %v1350
        %1388 = vst.msk [vmem:[%s1375 + $0x30] sm:$0xf] %vm825, %v1352
        %1389 = vst.msk [vmem:[%s1375 + $0x34] sm:$0xf] %vm825, %v1354
        %1390 = vst.msk [vmem:[%s1375 + $0x38] sm:$0xf] %vm825, %v1356
        %1391 = vst.msk [vmem:[%s1375 + $0x3c] sm:$0xf] %vm825, %v1358
        %1392 = vrot.lane.b32.xlu0 %v793, 32
        %v1393 = vpop.permute.xlu0 %1392
        %1394 = vrot.lane.b32.xlu0 %v794, 32
        %v1395 = vpop.permute.xlu0 %1394
        %1396 = vrot.lane.b32.xlu0 %v795, 32
        %v1397 = vpop.permute.xlu0 %1396
        %1398 = vrot.lane.b32.xlu0 %v796, 32
        %v1399 = vpop.permute.xlu0 %1398
        %1400 = vrot.lane.b32.xlu0 %v797, 32
        %v1401 = vpop.permute.xlu0 %1400
        %1402 = vrot.lane.b32.xlu0 %v798, 32
        %v1403 = vpop.permute.xlu0 %1402
        %1404 = vrot.lane.b32.xlu0 %v799, 32
        %v1405 = vpop.permute.xlu0 %1404
        %1406 = vrot.lane.b32.xlu0 %v800, 32
        %v1407 = vpop.permute.xlu0 %1406
        %1408 = vrot.lane.b32.xlu0 %v801, 32
        %v1409 = vpop.permute.xlu0 %1408
        %1410 = vrot.lane.b32.xlu0 %v802, 32
        %v1411 = vpop.permute.xlu0 %1410
        %1412 = vrot.lane.b32.xlu0 %v803, 32
        %v1413 = vpop.permute.xlu0 %1412
        %1414 = vrot.lane.b32.xlu0 %v804, 32
        %v1415 = vpop.permute.xlu0 %1414
        %1416 = vrot.lane.b32.xlu0 %v805, 32
        %v1417 = vpop.permute.xlu0 %1416
        %1418 = vrot.lane.b32.xlu0 %v806, 32
        %v1419 = vpop.permute.xlu0 %1418
        %1420 = vrot.lane.b32.xlu0 %v807, 32
        %v1421 = vpop.permute.xlu0 %1420
        %1422 = vrot.lane.b32.xlu0 %v808, 32
        %v1423 = vpop.permute.xlu0 %1422
        %s1440 = scalar_lea.vmem %s276, 192 [#allocation6]
        %1441 = vst.msk [vmem:[%s1440] sm:$0xf] %vm825, %v1393
        %1442 = vst.msk [vmem:[%s1440 + $0x4] sm:$0xf] %vm825, %v1395
        %1443 = vst.msk [vmem:[%s1440 + $0x8] sm:$0xf] %vm825, %v1397
        %1444 = vst.msk [vmem:[%s1440 + $0xc] sm:$0xf] %vm825, %v1399
        %1445 = vst.msk [vmem:[%s1440 + $0x10] sm:$0xf] %vm825, %v1401
        %1446 = vst.msk [vmem:[%s1440 + $0x14] sm:$0xf] %vm825, %v1403
        %1447 = vst.msk [vmem:[%s1440 + $0x18] sm:$0xf] %vm825, %v1405
        %1448 = vst.msk [vmem:[%s1440 + $0x1c] sm:$0xf] %vm825, %v1407
        %1449 = vst.msk [vmem:[%s1440 + $0x20] sm:$0xf] %vm825, %v1409
        %1450 = vst.msk [vmem:[%s1440 + $0x24] sm:$0xf] %vm825, %v1411
        %1451 = vst.msk [vmem:[%s1440 + $0x28] sm:$0xf] %vm825, %v1413
        %1452 = vst.msk [vmem:[%s1440 + $0x2c] sm:$0xf] %vm825, %v1415
        %1453 = vst.msk [vmem:[%s1440 + $0x30] sm:$0xf] %vm825, %v1417
        %1454 = vst.msk [vmem:[%s1440 + $0x34] sm:$0xf] %vm825, %v1419
        %1455 = vst.msk [vmem:[%s1440 + $0x38] sm:$0xf] %vm825, %v1421
        %1456 = vst.msk [vmem:[%s1440 + $0x3c] sm:$0xf] %vm825, %v1423
        %1457 = vrot.lane.b32.xlu0 %v874, 32
        %v1458 = vpop.permute.xlu0 %1457
        %1459 = vrot.lane.b32.xlu0 %v875, 32
        %v1460 = vpop.permute.xlu0 %1459
        %1461 = vrot.lane.b32.xlu0 %v876, 32
        %v1462 = vpop.permute.xlu0 %1461
        %1463 = vrot.lane.b32.xlu0 %v877, 32
        %v1464 = vpop.permute.xlu0 %1463
        %1465 = vrot.lane.b32.xlu0 %v878, 32
        %v1466 = vpop.permute.xlu0 %1465
        %1467 = vrot.lane.b32.xlu0 %v879, 32
        %v1468 = vpop.permute.xlu0 %1467
        %1469 = vrot.lane.b32.xlu0 %v880, 32
        %v1470 = vpop.permute.xlu0 %1469
        %1471 = vrot.lane.b32.xlu0 %v881, 32
        %v1472 = vpop.permute.xlu0 %1471
        %1473 = vrot.lane.b32.xlu0 %v882, 32
        %v1474 = vpop.permute.xlu0 %1473
        %1475 = vrot.lane.b32.xlu0 %v883, 32
        %v1476 = vpop.permute.xlu0 %1475
        %1477 = vrot.lane.b32.xlu0 %v884, 32
        %v1478 = vpop.permute.xlu0 %1477
        %1479 = vrot.lane.b32.xlu0 %v885, 32
        %v1480 = vpop.permute.xlu0 %1479
        %1481 = vrot.lane.b32.xlu0 %v886, 32
        %v1482 = vpop.permute.xlu0 %1481
        %1483 = vrot.lane.b32.xlu0 %v887, 32
        %v1484 = vpop.permute.xlu0 %1483
        %1485 = vrot.lane.b32.xlu0 %v888, 32
        %v1486 = vpop.permute.xlu0 %1485
        %1487 = vrot.lane.b32.xlu0 %v889, 32
        %v1488 = vpop.permute.xlu0 %1487
        %s1505 = scalar_lea.vmem %s282, 192 [#allocation7]
        %1506 = vst.msk [vmem:[%s1505] sm:$0xf] %vm825, %v1458
        %1507 = vst.msk [vmem:[%s1505 + $0x4] sm:$0xf] %vm825, %v1460
        %1508 = vst.msk [vmem:[%s1505 + $0x8] sm:$0xf] %vm825, %v1462
        %1509 = vst.msk [vmem:[%s1505 + $0xc] sm:$0xf] %vm825, %v1464
        %1510 = vst.msk [vmem:[%s1505 + $0x10] sm:$0xf] %vm825, %v1466
        %1511 = vst.msk [vmem:[%s1505 + $0x14] sm:$0xf] %vm825, %v1468
        %1512 = vst.msk [vmem:[%s1505 + $0x18] sm:$0xf] %vm825, %v1470
        %1513 = vst.msk [vmem:[%s1505 + $0x1c] sm:$0xf] %vm825, %v1472
        %1514 = vst.msk [vmem:[%s1505 + $0x20] sm:$0xf] %vm825, %v1474
        %1515 = vst.msk [vmem:[%s1505 + $0x24] sm:$0xf] %vm825, %v1476
        %1516 = vst.msk [vmem:[%s1505 + $0x28] sm:$0xf] %vm825, %v1478
        %1517 = vst.msk [vmem:[%s1505 + $0x2c] sm:$0xf] %vm825, %v1480
        %1518 = vst.msk [vmem:[%s1505 + $0x30] sm:$0xf] %vm825, %v1482
        %1519 = vst.msk [vmem:[%s1505 + $0x34] sm:$0xf] %vm825, %v1484
        %1520 = vst.msk [vmem:[%s1505 + $0x38] sm:$0xf] %vm825, %v1486
        %1521 = vst.msk [vmem:[%s1505 + $0x3c] sm:$0xf] %vm825, %v1488
        %1522 = vrot.lane.b32.xlu0 %v954, 32
        %v1523 = vpop.permute.xlu0 %1522
        %1524 = vrot.lane.b32.xlu0 %v955, 32
        %v1525 = vpop.permute.xlu0 %1524
        %1526 = vrot.lane.b32.xlu0 %v956, 32
        %v1527 = vpop.permute.xlu0 %1526
        %1528 = vrot.lane.b32.xlu0 %v957, 32
        %v1529 = vpop.permute.xlu0 %1528
        %1530 = vrot.lane.b32.xlu0 %v958, 32
        %v1531 = vpop.permute.xlu0 %1530
        %1532 = vrot.lane.b32.xlu0 %v959, 32
        %v1533 = vpop.permute.xlu0 %1532
        %1534 = vrot.lane.b32.xlu0 %v960, 32
        %v1535 = vpop.permute.xlu0 %1534
        %1536 = vrot.lane.b32.xlu0 %v961, 32
        %v1537 = vpop.permute.xlu0 %1536
        %1538 = vrot.lane.b32.xlu0 %v962, 32
        %v1539 = vpop.permute.xlu0 %1538
        %1540 = vrot.lane.b32.xlu0 %v963, 32
        %v1541 = vpop.permute.xlu0 %1540
        %1542 = vrot.lane.b32.xlu0 %v964, 32
        %v1543 = vpop.permute.xlu0 %1542
        %1544 = vrot.lane.b32.xlu0 %v965, 32
        %v1545 = vpop.permute.xlu0 %1544
        %1546 = vrot.lane.b32.xlu0 %v966, 32
        %v1547 = vpop.permute.xlu0 %1546
        %1548 = vrot.lane.b32.xlu0 %v967, 32
        %v1549 = vpop.permute.xlu0 %1548
        %1550 = vrot.lane.b32.xlu0 %v968, 32
        %v1551 = vpop.permute.xlu0 %1550
        %1552 = vrot.lane.b32.xlu0 %v969, 32
        %v1553 = vpop.permute.xlu0 %1552
        %s1570 = scalar_lea.vmem %s288, 192 [#allocation8]
        %1571 = vst.msk [vmem:[%s1570] sm:$0xf] %vm825, %v1523
        %1572 = vst.msk [vmem:[%s1570 + $0x4] sm:$0xf] %vm825, %v1525
        %1573 = vst.msk [vmem:[%s1570 + $0x8] sm:$0xf] %vm825, %v1527
        %1574 = vst.msk [vmem:[%s1570 + $0xc] sm:$0xf] %vm825, %v1529
        %1575 = vst.msk [vmem:[%s1570 + $0x10] sm:$0xf] %vm825, %v1531
        %1576 = vst.msk [vmem:[%s1570 + $0x14] sm:$0xf] %vm825, %v1533
        %1577 = vst.msk [vmem:[%s1570 + $0x18] sm:$0xf] %vm825, %v1535
        %1578 = vst.msk [vmem:[%s1570 + $0x1c] sm:$0xf] %vm825, %v1537
        %1579 = vst.msk [vmem:[%s1570 + $0x20] sm:$0xf] %vm825, %v1539
        %1580 = vst.msk [vmem:[%s1570 + $0x24] sm:$0xf] %vm825, %v1541
        %1581 = vst.msk [vmem:[%s1570 + $0x28] sm:$0xf] %vm825, %v1543
        %1582 = vst.msk [vmem:[%s1570 + $0x2c] sm:$0xf] %vm825, %v1545
        %1583 = vst.msk [vmem:[%s1570 + $0x30] sm:$0xf] %vm825, %v1547
        %1584 = vst.msk [vmem:[%s1570 + $0x34] sm:$0xf] %vm825, %v1549
        %1585 = vst.msk [vmem:[%s1570 + $0x38] sm:$0xf] %vm825, %v1551
        %1586 = vst.msk [vmem:[%s1570 + $0x3c] sm:$0xf] %vm825, %v1553
        %s1587 = sand.u32 %s113, 1
        %s1588 = sand.u32 %s113, 1
        %s1589 = smul.addr %s1588, 256
        %s1590 = scalar_lea.vmem [#allocation6], %s1589
        %s1591 = sand.u32 %s141, 1
        %s1592 = sand.u32 %s141, 1
        %s1593 = smul.addr %s1592, 256
        %s1594 = scalar_lea.vmem [#allocation7], %s1593
        %s1595 = sand.u32 %s169, 1
        %s1596 = sand.u32 %s169, 1
        %s1597 = smul.addr %s1596, 256
        %s1598 = scalar_lea.vmem [#allocation8], %s1597
        // Predicated region
        $region41: #{tpu_custom_call.1} parent=31 // pred_check
          %p1599 = pneg %p123
        $region42: #{tpu_custom_call.1} parent=31 // pred_check_branch
          %1601 = sbr.rel (%p1599) target = $region44
        $region43: #{tpu_custom_call.1} parent=31 // pred_region
          %s1602 = smul.u32 16, %s26
          %s1603 = smul.addr %s25, 128
          %s1604 = sadd.s32 %s1602, %s1603
          %s1605 = smul.addr %s1604, 4
          %s1606 = scalar_lea.vmem %s3, %s1605
          // Predicated region
          $region45: #{tpu_custom_call.1} parent=43 // pred_check
            _
          $region46: #{tpu_custom_call.1} parent=43 // pred_check_branch
            %1608 = sbr.rel (0) target = $region48
          $region47: #{tpu_custom_call.1} parent=43 // pred_region
            // Predicated region
            $region49: #{tpu_custom_call.1} parent=47 // pred_check
              _
            $region50: #{tpu_custom_call.1} parent=47 // pred_check_branch
              %1610 = sbr.rel target = $region52
            $region51: #{tpu_custom_call.1} parent=47 // pred_region
              // Predicated region
              $region64: #{tpu_custom_call.1} parent=51 // pred_check
                _
              $region65: #{tpu_custom_call.1} parent=51 // pred_check_branch
                %1751 = sbr.rel (0) target = $region67
              $region66: #{tpu_custom_call.1} parent=51 // pred_region
                loop: start=0, step=1, limit=1
                $region68: #{tpu_custom_call.1} parent=66 // loop_pre_header
                  _
                $region69: #{tpu_custom_call.1} parent=66 // loop_header
                  %s1753 = sphi 0, %s1757
                  %p1754 = scmp.ge.s32.totalorder %s1753, 1
                  %s1758 = sphi %s1590, %s1590
                  %s1759 = sphi %s1606, %s1606
                $region70: #{tpu_custom_call.1} parent=66 // loop_header_branch
                  %1756 = sbr.rel (%p1754) target = $region74
                $region71: #{tpu_custom_call.1} parent=66 // loop_body
                  _
                $region72: #{tpu_custom_call.1} parent=66 // loop_footer
                  %s1757 = sadd.s32 1, %s1753
                $region73: #{tpu_custom_call.1} parent=66 // loop_footer_branch
                  %1752 = sbr.rel target = $region69
                $region74: #{tpu_custom_call.1} parent=66 // loop_exit
                  _
                loop: start=0, step=1, limit=1
                $region75: #{tpu_custom_call.1} parent=66 // loop_pre_header
                  _
                $region76: #{tpu_custom_call.1} parent=66 // loop_header
                  %s1762 = sphi 0, %s1766
                  %p1763 = scmp.ge.s32.totalorder %s1762, 1
                  %s1767 = sphi %s1590, %s1590
                  %s1768 = sphi %s1606, %s1606
                $region77: #{tpu_custom_call.1} parent=66 // loop_header_branch
                  %1765 = sbr.rel (%p1763) target = $region81
                $region78: #{tpu_custom_call.1} parent=66 // loop_body
                  %v1769 = vld [vmem:[%s1767] sm:$0xf]
                  %1770 = vst [vmem:[%s1768] sm:$0xf] %v1769
                  %v1771 = vld [vmem:[%s1767 + $0x4] sm:$0xf]
                  %1772 = vst [vmem:[%s1768 + $0x4] sm:$0xf] %v1771
                  %v1773 = vld [vmem:[%s1767 + $0x8] sm:$0xf]
                  %1774 = vst [vmem:[%s1768 + $0x8] sm:$0xf] %v1773
                  %v1775 = vld [vmem:[%s1767 + $0xc] sm:$0xf]
                  %1776 = vst [vmem:[%s1768 + $0xc] sm:$0xf] %v1775
                  %v1777 = vld [vmem:[%s1767 + $0x10] sm:$0xf]
                  %1778 = vst [vmem:[%s1768 + $0x10] sm:$0xf] %v1777
                  %v1779 = vld [vmem:[%s1767 + $0x14] sm:$0xf]
                  %1780 = vst [vmem:[%s1768 + $0x14] sm:$0xf] %v1779
                  %v1781 = vld [vmem:[%s1767 + $0x18] sm:$0xf]
                  %1782 = vst [vmem:[%s1768 + $0x18] sm:$0xf] %v1781
                  %v1783 = vld [vmem:[%s1767 + $0x1c] sm:$0xf]
                  %1784 = vst [vmem:[%s1768 + $0x1c] sm:$0xf] %v1783
                  %v1785 = vld [vmem:[%s1767 + $0x20] sm:$0xf]
                  %1786 = vst [vmem:[%s1768 + $0x20] sm:$0xf] %v1785
                  %v1787 = vld [vmem:[%s1767 + $0x24] sm:$0xf]
                  %1788 = vst [vmem:[%s1768 + $0x24] sm:$0xf] %v1787
                  %v1789 = vld [vmem:[%s1767 + $0x28] sm:$0xf]
                  %1790 = vst [vmem:[%s1768 + $0x28] sm:$0xf] %v1789
                  %v1791 = vld [vmem:[%s1767 + $0x2c] sm:$0xf]
                  %1792 = vst [vmem:[%s1768 + $0x2c] sm:$0xf] %v1791
                  %v1793 = vld [vmem:[%s1767 + $0x30] sm:$0xf]
                  %1794 = vst [vmem:[%s1768 + $0x30] sm:$0xf] %v1793
                  %v1795 = vld [vmem:[%s1767 + $0x34] sm:$0xf]
                  %1796 = vst [vmem:[%s1768 + $0x34] sm:$0xf] %v1795
                  %v1797 = vld [vmem:[%s1767 + $0x38] sm:$0xf]
                  %1798 = vst [vmem:[%s1768 + $0x38] sm:$0xf] %v1797
                  %v1799 = vld [vmem:[%s1767 + $0x3c] sm:$0xf]
                  %1800 = vst [vmem:[%s1768 + $0x3c] sm:$0xf] %v1799
                  %v1801 = vld [vmem:[%s1767 + $0x40] sm:$0xf]
                  %1802 = vst [vmem:[%s1768 + $0x80] sm:$0xf] %v1801
                  %v1803 = vld [vmem:[%s1767 + $0x44] sm:$0xf]
                  %1804 = vst [vmem:[%s1768 + $0x84] sm:$0xf] %v1803
                  %v1805 = vld [vmem:[%s1767 + $0x48] sm:$0xf]
                  %1806 = vst [vmem:[%s1768 + $0x88] sm:$0xf] %v1805
                  %v1807 = vld [vmem:[%s1767 + $0x4c] sm:$0xf]
                  %1808 = vst [vmem:[%s1768 + $0x8c] sm:$0xf] %v1807
                  %v1809 = vld [vmem:[%s1767 + $0x50] sm:$0xf]
                  %1810 = vst [vmem:[%s1768 + $0x90] sm:$0xf] %v1809
                  %v1811 = vld [vmem:[%s1767 + $0x54] sm:$0xf]
                  %1812 = vst [vmem:[%s1768 + $0x94] sm:$0xf] %v1811
                  %v1813 = vld [vmem:[%s1767 + $0x58] sm:$0xf]
                  %1814 = vst [vmem:[%s1768 + $0x98] sm:$0xf] %v1813
                  %v1815 = vld [vmem:[%s1767 + $0x5c] sm:$0xf]
                  %1816 = vst [vmem:[%s1768 + $0x9c] sm:$0xf] %v1815
                  %v1817 = vld [vmem:[%s1767 + $0x60] sm:$0xf]
                  %1818 = vst [vmem:[%s1768 + $0xa0] sm:$0xf] %v1817
                  %v1819 = vld [vmem:[%s1767 + $0x64] sm:$0xf]
                  %1820 = vst [vmem:[%s1768 + $0xa4] sm:$0xf] %v1819
                  %v1821 = vld [vmem:[%s1767 + $0x68] sm:$0xf]
                  %1822 = vst [vmem:[%s1768 + $0xa8] sm:$0xf] %v1821
                  %v1823 = vld [vmem:[%s1767 + $0x6c] sm:$0xf]
                  %1824 = vst [vmem:[%s1768 + $0xac] sm:$0xf] %v1823
                  %v1825 = vld [vmem:[%s1767 + $0x70] sm:$0xf]
                  %1826 = vst [vmem:[%s1768 + $0xb0] sm:$0xf] %v1825
                  %v1827 = vld [vmem:[%s1767 + $0x74] sm:$0xf]
                  %1828 = vst [vmem:[%s1768 + $0xb4] sm:$0xf] %v1827
                  %v1829 = vld [vmem:[%s1767 + $0x78] sm:$0xf]
                  %1830 = vst [vmem:[%s1768 + $0xb8] sm:$0xf] %v1829
                  %v1831 = vld [vmem:[%s1767 + $0x7c] sm:$0xf]
                  %1832 = vst [vmem:[%s1768 + $0xbc] sm:$0xf] %v1831
                  %v1833 = vld [vmem:[%s1767 + $0x80] sm:$0xf]
                  %1834 = vst [vmem:[%s1768 + $0x100] sm:$0xf] %v1833
                  %v1835 = vld [vmem:[%s1767 + $0x84] sm:$0xf]
                  %1836 = vst [vmem:[%s1768 + $0x104] sm:$0xf] %v1835
                  %v1837 = vld [vmem:[%s1767 + $0x88] sm:$0xf]
                  %1838 = vst [vmem:[%s1768 + $0x108] sm:$0xf] %v1837
                  %v1839 = vld [vmem:[%s1767 + $0x8c] sm:$0xf]
                  %1840 = vst [vmem:[%s1768 + $0x10c] sm:$0xf] %v1839
                  %v1841 = vld [vmem:[%s1767 + $0x90] sm:$0xf]
                  %1842 = vst [vmem:[%s1768 + $0x110] sm:$0xf] %v1841
                  %v1843 = vld [vmem:[%s1767 + $0x94] sm:$0xf]
                  %1844 = vst [vmem:[%s1768 + $0x114] sm:$0xf] %v1843
                  %v1845 = vld [vmem:[%s1767 + $0x98] sm:$0xf]
                  %1846 = vst [vmem:[%s1768 + $0x118] sm:$0xf] %v1845
                  %v1847 = vld [vmem:[%s1767 + $0x9c] sm:$0xf]
                  %1848 = vst [vmem:[%s1768 + $0x11c] sm:$0xf] %v1847
                  %v1849 = vld [vmem:[%s1767 + $0xa0] sm:$0xf]
                  %1850 = vst [vmem:[%s1768 + $0x120] sm:$0xf] %v1849
                  %v1851 = vld [vmem:[%s1767 + $0xa4] sm:$0xf]
                  %1852 = vst [vmem:[%s1768 + $0x124] sm:$0xf] %v1851
                  %v1853 = vld [vmem:[%s1767 + $0xa8] sm:$0xf]
                  %1854 = vst [vmem:[%s1768 + $0x128] sm:$0xf] %v1853
                  %v1855 = vld [vmem:[%s1767 + $0xac] sm:$0xf]
                  %1856 = vst [vmem:[%s1768 + $0x12c] sm:$0xf] %v1855
                  %v1857 = vld [vmem:[%s1767 + $0xb0] sm:$0xf]
                  %1858 = vst [vmem:[%s1768 + $0x130] sm:$0xf] %v1857
                  %v1859 = vld [vmem:[%s1767 + $0xb4] sm:$0xf]
                  %1860 = vst [vmem:[%s1768 + $0x134] sm:$0xf] %v1859
                  %v1861 = vld [vmem:[%s1767 + $0xb8] sm:$0xf]
                  %1862 = vst [vmem:[%s1768 + $0x138] sm:$0xf] %v1861
                  %v1863 = vld [vmem:[%s1767 + $0xbc] sm:$0xf]
                  %1864 = vst [vmem:[%s1768 + $0x13c] sm:$0xf] %v1863
                  %v1865 = vld [vmem:[%s1767 + $0xc0] sm:$0xf]
                  %1866 = vst [vmem:[%s1768 + $0x180] sm:$0xf] %v1865
                  %v1867 = vld [vmem:[%s1767 + $0xc4] sm:$0xf]
                  %1868 = vst [vmem:[%s1768 + $0x184] sm:$0xf] %v1867
                  %v1869 = vld [vmem:[%s1767 + $0xc8] sm:$0xf]
                  %1870 = vst [vmem:[%s1768 + $0x188] sm:$0xf] %v1869
                  %v1871 = vld [vmem:[%s1767 + $0xcc] sm:$0xf]
                  %1872 = vst [vmem:[%s1768 + $0x18c] sm:$0xf] %v1871
                  %v1873 = vld [vmem:[%s1767 + $0xd0] sm:$0xf]
                  %1874 = vst [vmem:[%s1768 + $0x190] sm:$0xf] %v1873
                  %v1875 = vld [vmem:[%s1767 + $0xd4] sm:$0xf]
                  %1876 = vst [vmem:[%s1768 + $0x194] sm:$0xf] %v1875
                  %v1877 = vld [vmem:[%s1767 + $0xd8] sm:$0xf]
                  %1878 = vst [vmem:[%s1768 + $0x198] sm:$0xf] %v1877
                  %v1879 = vld [vmem:[%s1767 + $0xdc] sm:$0xf]
                  %1880 = vst [vmem:[%s1768 + $0x19c] sm:$0xf] %v1879
                  %v1881 = vld [vmem:[%s1767 + $0xe0] sm:$0xf]
                  %1882 = vst [vmem:[%s1768 + $0x1a0] sm:$0xf] %v1881
                  %v1883 = vld [vmem:[%s1767 + $0xe4] sm:$0xf]
                  %1884 = vst [vmem:[%s1768 + $0x1a4] sm:$0xf] %v1883
                  %v1885 = vld [vmem:[%s1767 + $0xe8] sm:$0xf]
                  %1886 = vst [vmem:[%s1768 + $0x1a8] sm:$0xf] %v1885
                  %v1887 = vld [vmem:[%s1767 + $0xec] sm:$0xf]
                  %1888 = vst [vmem:[%s1768 + $0x1ac] sm:$0xf] %v1887
                  %v1889 = vld [vmem:[%s1767 + $0xf0] sm:$0xf]
                  %1890 = vst [vmem:[%s1768 + $0x1b0] sm:$0xf] %v1889
                  %v1891 = vld [vmem:[%s1767 + $0xf4] sm:$0xf]
                  %1892 = vst [vmem:[%s1768 + $0x1b4] sm:$0xf] %v1891
                  %v1893 = vld [vmem:[%s1767 + $0xf8] sm:$0xf]
                  %1894 = vst [vmem:[%s1768 + $0x1b8] sm:$0xf] %v1893
                  %v1895 = vld [vmem:[%s1767 + $0xfc] sm:$0xf]
                  %1896 = vst [vmem:[%s1768 + $0x1bc] sm:$0xf] %v1895
                $region79: #{tpu_custom_call.1} parent=66 // loop_footer
                  %s1766 = sadd.s32 1, %s1762
                $region80: #{tpu_custom_call.1} parent=66 // loop_footer_branch
                  %1761 = sbr.rel target = $region76
                $region81: #{tpu_custom_call.1} parent=66 // loop_exit
                  _
              $region67: #{tpu_custom_call.1} parent=51 // pred_fallthru
                _
            $region52: #{tpu_custom_call.1} parent=47 // pred_fallthru
              _
            // Predicated region
            $region53: #{tpu_custom_call.1} parent=47 // pred_check
              _
            $region54: #{tpu_custom_call.1} parent=47 // pred_check_branch
              %1612 = sbr.rel (0) target = $region56
            $region55: #{tpu_custom_call.1} parent=47 // pred_region
              loop: start=0, step=1, limit=1
              $region57: #{tpu_custom_call.1} parent=55 // loop_pre_header
                _
              $region58: #{tpu_custom_call.1} parent=55 // loop_header
                %s1615 = sphi 0, %s1619
                %p1616 = scmp.ge.s32.totalorder %s1615, 1
                %s1620 = sphi %s1590, %s1590
                %s1621 = sphi %s1606, %s1606
              $region59: #{tpu_custom_call.1} parent=55 // loop_header_branch
                %1618 = sbr.rel (%p1616) target = $region63
              $region60: #{tpu_custom_call.1} parent=55 // loop_body
                %v1622 = vld [vmem:[%s1620] sm:$0xf]
                %1623 = vst [vmem:[%s1621] sm:$0xf] %v1622
                %v1624 = vld [vmem:[%s1620 + $0x4] sm:$0xf]
                %1625 = vst [vmem:[%s1621 + $0x4] sm:$0xf] %v1624
                %v1626 = vld [vmem:[%s1620 + $0x8] sm:$0xf]
                %1627 = vst [vmem:[%s1621 + $0x8] sm:$0xf] %v1626
                %v1628 = vld [vmem:[%s1620 + $0xc] sm:$0xf]
                %1629 = vst [vmem:[%s1621 + $0xc] sm:$0xf] %v1628
                %v1630 = vld [vmem:[%s1620 + $0x10] sm:$0xf]
                %1631 = vst [vmem:[%s1621 + $0x10] sm:$0xf] %v1630
                %v1632 = vld [vmem:[%s1620 + $0x14] sm:$0xf]
                %1633 = vst [vmem:[%s1621 + $0x14] sm:$0xf] %v1632
                %v1634 = vld [vmem:[%s1620 + $0x18] sm:$0xf]
                %1635 = vst [vmem:[%s1621 + $0x18] sm:$0xf] %v1634
                %v1636 = vld [vmem:[%s1620 + $0x1c] sm:$0xf]
                %1637 = vst [vmem:[%s1621 + $0x1c] sm:$0xf] %v1636
                %v1638 = vld [vmem:[%s1620 + $0x20] sm:$0xf]
                %1639 = vst [vmem:[%s1621 + $0x20] sm:$0xf] %v1638
                %v1640 = vld [vmem:[%s1620 + $0x24] sm:$0xf]
                %1641 = vst [vmem:[%s1621 + $0x24] sm:$0xf] %v1640
                %v1642 = vld [vmem:[%s1620 + $0x28] sm:$0xf]
                %1643 = vst [vmem:[%s1621 + $0x28] sm:$0xf] %v1642
                %v1644 = vld [vmem:[%s1620 + $0x2c] sm:$0xf]
                %1645 = vst [vmem:[%s1621 + $0x2c] sm:$0xf] %v1644
                %v1646 = vld [vmem:[%s1620 + $0x30] sm:$0xf]
                %1647 = vst [vmem:[%s1621 + $0x30] sm:$0xf] %v1646
                %v1648 = vld [vmem:[%s1620 + $0x34] sm:$0xf]
                %1649 = vst [vmem:[%s1621 + $0x34] sm:$0xf] %v1648
                %v1650 = vld [vmem:[%s1620 + $0x38] sm:$0xf]
                %1651 = vst [vmem:[%s1621 + $0x38] sm:$0xf] %v1650
                %v1652 = vld [vmem:[%s1620 + $0x3c] sm:$0xf]
                %1653 = vst [vmem:[%s1621 + $0x3c] sm:$0xf] %v1652
                %v1654 = vld [vmem:[%s1620 + $0x40] sm:$0xf]
                %1655 = vst [vmem:[%s1621 + $0x80] sm:$0xf] %v1654
                %v1656 = vld [vmem:[%s1620 + $0x44] sm:$0xf]
                %1657 = vst [vmem:[%s1621 + $0x84] sm:$0xf] %v1656
                %v1658 = vld [vmem:[%s1620 + $0x48] sm:$0xf]
                %1659 = vst [vmem:[%s1621 + $0x88] sm:$0xf] %v1658
                %v1660 = vld [vmem:[%s1620 + $0x4c] sm:$0xf]
                %1661 = vst [vmem:[%s1621 + $0x8c] sm:$0xf] %v1660
                %v1662 = vld [vmem:[%s1620 + $0x50] sm:$0xf]
                %1663 = vst [vmem:[%s1621 + $0x90] sm:$0xf] %v1662
                %v1664 = vld [vmem:[%s1620 + $0x54] sm:$0xf]
                %1665 = vst [vmem:[%s1621 + $0x94] sm:$0xf] %v1664
                %v1666 = vld [vmem:[%s1620 + $0x58] sm:$0xf]
                %1667 = vst [vmem:[%s1621 + $0x98] sm:$0xf] %v1666
                %v1668 = vld [vmem:[%s1620 + $0x5c] sm:$0xf]
                %1669 = vst [vmem:[%s1621 + $0x9c] sm:$0xf] %v1668
                %v1670 = vld [vmem:[%s1620 + $0x60] sm:$0xf]
                %1671 = vst [vmem:[%s1621 + $0xa0] sm:$0xf] %v1670
                %v1672 = vld [vmem:[%s1620 + $0x64] sm:$0xf]
                %1673 = vst [vmem:[%s1621 + $0xa4] sm:$0xf] %v1672
                %v1674 = vld [vmem:[%s1620 + $0x68] sm:$0xf]
                %1675 = vst [vmem:[%s1621 + $0xa8] sm:$0xf] %v1674
                %v1676 = vld [vmem:[%s1620 + $0x6c] sm:$0xf]
                %1677 = vst [vmem:[%s1621 + $0xac] sm:$0xf] %v1676
                %v1678 = vld [vmem:[%s1620 + $0x70] sm:$0xf]
                %1679 = vst [vmem:[%s1621 + $0xb0] sm:$0xf] %v1678
                %v1680 = vld [vmem:[%s1620 + $0x74] sm:$0xf]
                %1681 = vst [vmem:[%s1621 + $0xb4] sm:$0xf] %v1680
                %v1682 = vld [vmem:[%s1620 + $0x78] sm:$0xf]
                %1683 = vst [vmem:[%s1621 + $0xb8] sm:$0xf] %v1682
                %v1684 = vld [vmem:[%s1620 + $0x7c] sm:$0xf]
                %1685 = vst [vmem:[%s1621 + $0xbc] sm:$0xf] %v1684
                %v1686 = vld [vmem:[%s1620 + $0x80] sm:$0xf]
                %1687 = vst [vmem:[%s1621 + $0x100] sm:$0xf] %v1686
                %v1688 = vld [vmem:[%s1620 + $0x84] sm:$0xf]
                %1689 = vst [vmem:[%s1621 + $0x104] sm:$0xf] %v1688
                %v1690 = vld [vmem:[%s1620 + $0x88] sm:$0xf]
                %1691 = vst [vmem:[%s1621 + $0x108] sm:$0xf] %v1690
                %v1692 = vld [vmem:[%s1620 + $0x8c] sm:$0xf]
                %1693 = vst [vmem:[%s1621 + $0x10c] sm:$0xf] %v1692
                %v1694 = vld [vmem:[%s1620 + $0x90] sm:$0xf]
                %1695 = vst [vmem:[%s1621 + $0x110] sm:$0xf] %v1694
                %v1696 = vld [vmem:[%s1620 + $0x94] sm:$0xf]
                %1697 = vst [vmem:[%s1621 + $0x114] sm:$0xf] %v1696
                %v1698 = vld [vmem:[%s1620 + $0x98] sm:$0xf]
                %1699 = vst [vmem:[%s1621 + $0x118] sm:$0xf] %v1698
                %v1700 = vld [vmem:[%s1620 + $0x9c] sm:$0xf]
                %1701 = vst [vmem:[%s1621 + $0x11c] sm:$0xf] %v1700
                %v1702 = vld [vmem:[%s1620 + $0xa0] sm:$0xf]
                %1703 = vst [vmem:[%s1621 + $0x120] sm:$0xf] %v1702
                %v1704 = vld [vmem:[%s1620 + $0xa4] sm:$0xf]
                %1705 = vst [vmem:[%s1621 + $0x124] sm:$0xf] %v1704
                %v1706 = vld [vmem:[%s1620 + $0xa8] sm:$0xf]
                %1707 = vst [vmem:[%s1621 + $0x128] sm:$0xf] %v1706
                %v1708 = vld [vmem:[%s1620 + $0xac] sm:$0xf]
                %1709 = vst [vmem:[%s1621 + $0x12c] sm:$0xf] %v1708
                %v1710 = vld [vmem:[%s1620 + $0xb0] sm:$0xf]
                %1711 = vst [vmem:[%s1621 + $0x130] sm:$0xf] %v1710
                %v1712 = vld [vmem:[%s1620 + $0xb4] sm:$0xf]
                %1713 = vst [vmem:[%s1621 + $0x134] sm:$0xf] %v1712
                %v1714 = vld [vmem:[%s1620 + $0xb8] sm:$0xf]
                %1715 = vst [vmem:[%s1621 + $0x138] sm:$0xf] %v1714
                %v1716 = vld [vmem:[%s1620 + $0xbc] sm:$0xf]
                %1717 = vst [vmem:[%s1621 + $0x13c] sm:$0xf] %v1716
                %v1718 = vld [vmem:[%s1620 + $0xc0] sm:$0xf]
                %1719 = vst [vmem:[%s1621 + $0x180] sm:$0xf] %v1718
                %v1720 = vld [vmem:[%s1620 + $0xc4] sm:$0xf]
                %1721 = vst [vmem:[%s1621 + $0x184] sm:$0xf] %v1720
                %v1722 = vld [vmem:[%s1620 + $0xc8] sm:$0xf]
                %1723 = vst [vmem:[%s1621 + $0x188] sm:$0xf] %v1722
                %v1724 = vld [vmem:[%s1620 + $0xcc] sm:$0xf]
                %1725 = vst [vmem:[%s1621 + $0x18c] sm:$0xf] %v1724
                %v1726 = vld [vmem:[%s1620 + $0xd0] sm:$0xf]
                %1727 = vst [vmem:[%s1621 + $0x190] sm:$0xf] %v1726
                %v1728 = vld [vmem:[%s1620 + $0xd4] sm:$0xf]
                %1729 = vst [vmem:[%s1621 + $0x194] sm:$0xf] %v1728
                %v1730 = vld [vmem:[%s1620 + $0xd8] sm:$0xf]
                %1731 = vst [vmem:[%s1621 + $0x198] sm:$0xf] %v1730
                %v1732 = vld [vmem:[%s1620 + $0xdc] sm:$0xf]
                %1733 = vst [vmem:[%s1621 + $0x19c] sm:$0xf] %v1732
                %v1734 = vld [vmem:[%s1620 + $0xe0] sm:$0xf]
                %1735 = vst [vmem:[%s1621 + $0x1a0] sm:$0xf] %v1734
                %v1736 = vld [vmem:[%s1620 + $0xe4] sm:$0xf]
                %1737 = vst [vmem:[%s1621 + $0x1a4] sm:$0xf] %v1736
                %v1738 = vld [vmem:[%s1620 + $0xe8] sm:$0xf]
                %1739 = vst [vmem:[%s1621 + $0x1a8] sm:$0xf] %v1738
                %v1740 = vld [vmem:[%s1620 + $0xec] sm:$0xf]
                %1741 = vst [vmem:[%s1621 + $0x1ac] sm:$0xf] %v1740
                %v1742 = vld [vmem:[%s1620 + $0xf0] sm:$0xf]
                %1743 = vst [vmem:[%s1621 + $0x1b0] sm:$0xf] %v1742
                %v1744 = vld [vmem:[%s1620 + $0xf4] sm:$0xf]
                %1745 = vst [vmem:[%s1621 + $0x1b4] sm:$0xf] %v1744
                %v1746 = vld [vmem:[%s1620 + $0xf8] sm:$0xf]
                %1747 = vst [vmem:[%s1621 + $0x1b8] sm:$0xf] %v1746
                %v1748 = vld [vmem:[%s1620 + $0xfc] sm:$0xf]
                %1749 = vst [vmem:[%s1621 + $0x1bc] sm:$0xf] %v1748
              $region61: #{tpu_custom_call.1} parent=55 // loop_footer
                %s1619 = sadd.s32 1, %s1615
              $region62: #{tpu_custom_call.1} parent=55 // loop_footer_branch
                %1614 = sbr.rel target = $region58
              $region63: #{tpu_custom_call.1} parent=55 // loop_exit
                _
            $region56: #{tpu_custom_call.1} parent=47 // pred_fallthru
              _
          $region48: #{tpu_custom_call.1} parent=43 // pred_fallthru
            _
          %1897 = vnop
        $region44: #{tpu_custom_call.1} parent=31 // pred_fallthru
          _
        // Predicated region
        $region82: #{tpu_custom_call.1} parent=31 // pred_check
          %p1898 = pneg %p151
        $region83: #{tpu_custom_call.1} parent=31 // pred_check_branch
          %1900 = sbr.rel (%p1898) target = $region85
        $region84: #{tpu_custom_call.1} parent=31 // pred_region
          %s1901 = smul.u32 16, %s26
          %s1902 = smul.addr %s25, 128
          %s1903 = sadd.s32 %s1901, %s1902
          %s1904 = smul.addr %s1903, 4
          %s1905 = scalar_lea.vmem %s4, %s1904
          // Predicated region
          $region86: #{tpu_custom_call.1} parent=84 // pred_check
            _
          $region87: #{tpu_custom_call.1} parent=84 // pred_check_branch
            %1907 = sbr.rel (0) target = $region89
          $region88: #{tpu_custom_call.1} parent=84 // pred_region
            // Predicated region
            $region90: #{tpu_custom_call.1} parent=88 // pred_check
              _
            $region91: #{tpu_custom_call.1} parent=88 // pred_check_branch
              %1909 = sbr.rel target = $region93
            $region92: #{tpu_custom_call.1} parent=88 // pred_region
              // Predicated region
              $region105: #{tpu_custom_call.1} parent=92 // pred_check
                _
              $region106: #{tpu_custom_call.1} parent=92 // pred_check_branch
                %2050 = sbr.rel (0) target = $region108
              $region107: #{tpu_custom_call.1} parent=92 // pred_region
                loop: start=0, step=1, limit=1
                $region109: #{tpu_custom_call.1} parent=107 // loop_pre_header
                  _
                $region110: #{tpu_custom_call.1} parent=107 // loop_header
                  %s2052 = sphi 0, %s2056
                  %p2053 = scmp.ge.s32.totalorder %s2052, 1
                  %s2057 = sphi %s1594, %s1594
                  %s2058 = sphi %s1905, %s1905
                $region111: #{tpu_custom_call.1} parent=107 // loop_header_branch
                  %2055 = sbr.rel (%p2053) target = $region115
                $region112: #{tpu_custom_call.1} parent=107 // loop_body
                  _
                $region113: #{tpu_custom_call.1} parent=107 // loop_footer
                  %s2056 = sadd.s32 1, %s2052
                $region114: #{tpu_custom_call.1} parent=107 // loop_footer_branch
                  %2051 = sbr.rel target = $region110
                $region115: #{tpu_custom_call.1} parent=107 // loop_exit
                  _
                loop: start=0, step=1, limit=1
                $region116: #{tpu_custom_call.1} parent=107 // loop_pre_header
                  _
                $region117: #{tpu_custom_call.1} parent=107 // loop_header
                  %s2061 = sphi 0, %s2065
                  %p2062 = scmp.ge.s32.totalorder %s2061, 1
                  %s2066 = sphi %s1594, %s1594
                  %s2067 = sphi %s1905, %s1905
                $region118: #{tpu_custom_call.1} parent=107 // loop_header_branch
                  %2064 = sbr.rel (%p2062) target = $region122
                $region119: #{tpu_custom_call.1} parent=107 // loop_body
                  %v2068 = vld [vmem:[%s2066] sm:$0xf]
                  %2069 = vst [vmem:[%s2067] sm:$0xf] %v2068
                  %v2070 = vld [vmem:[%s2066 + $0x4] sm:$0xf]
                  %2071 = vst [vmem:[%s2067 + $0x4] sm:$0xf] %v2070
                  %v2072 = vld [vmem:[%s2066 + $0x8] sm:$0xf]
                  %2073 = vst [vmem:[%s2067 + $0x8] sm:$0xf] %v2072
                  %v2074 = vld [vmem:[%s2066 + $0xc] sm:$0xf]
                  %2075 = vst [vmem:[%s2067 + $0xc] sm:$0xf] %v2074
                  %v2076 = vld [vmem:[%s2066 + $0x10] sm:$0xf]
                  %2077 = vst [vmem:[%s2067 + $0x10] sm:$0xf] %v2076
                  %v2078 = vld [vmem:[%s2066 + $0x14] sm:$0xf]
                  %2079 = vst [vmem:[%s2067 + $0x14] sm:$0xf] %v2078
                  %v2080 = vld [vmem:[%s2066 + $0x18] sm:$0xf]
                  %2081 = vst [vmem:[%s2067 + $0x18] sm:$0xf] %v2080
                  %v2082 = vld [vmem:[%s2066 + $0x1c] sm:$0xf]
                  %2083 = vst [vmem:[%s2067 + $0x1c] sm:$0xf] %v2082
                  %v2084 = vld [vmem:[%s2066 + $0x20] sm:$0xf]
                  %2085 = vst [vmem:[%s2067 + $0x20] sm:$0xf] %v2084
                  %v2086 = vld [vmem:[%s2066 + $0x24] sm:$0xf]
                  %2087 = vst [vmem:[%s2067 + $0x24] sm:$0xf] %v2086
                  %v2088 = vld [vmem:[%s2066 + $0x28] sm:$0xf]
                  %2089 = vst [vmem:[%s2067 + $0x28] sm:$0xf] %v2088
                  %v2090 = vld [vmem:[%s2066 + $0x2c] sm:$0xf]
                  %2091 = vst [vmem:[%s2067 + $0x2c] sm:$0xf] %v2090
                  %v2092 = vld [vmem:[%s2066 + $0x30] sm:$0xf]
                  %2093 = vst [vmem:[%s2067 + $0x30] sm:$0xf] %v2092
                  %v2094 = vld [vmem:[%s2066 + $0x34] sm:$0xf]
                  %2095 = vst [vmem:[%s2067 + $0x34] sm:$0xf] %v2094
                  %v2096 = vld [vmem:[%s2066 + $0x38] sm:$0xf]
                  %2097 = vst [vmem:[%s2067 + $0x38] sm:$0xf] %v2096
                  %v2098 = vld [vmem:[%s2066 + $0x3c] sm:$0xf]
                  %2099 = vst [vmem:[%s2067 + $0x3c] sm:$0xf] %v2098
                  %v2100 = vld [vmem:[%s2066 + $0x40] sm:$0xf]
                  %2101 = vst [vmem:[%s2067 + $0x80] sm:$0xf] %v2100
                  %v2102 = vld [vmem:[%s2066 + $0x44] sm:$0xf]
                  %2103 = vst [vmem:[%s2067 + $0x84] sm:$0xf] %v2102
                  %v2104 = vld [vmem:[%s2066 + $0x48] sm:$0xf]
                  %2105 = vst [vmem:[%s2067 + $0x88] sm:$0xf] %v2104
                  %v2106 = vld [vmem:[%s2066 + $0x4c] sm:$0xf]
                  %2107 = vst [vmem:[%s2067 + $0x8c] sm:$0xf] %v2106
                  %v2108 = vld [vmem:[%s2066 + $0x50] sm:$0xf]
                  %2109 = vst [vmem:[%s2067 + $0x90] sm:$0xf] %v2108
                  %v2110 = vld [vmem:[%s2066 + $0x54] sm:$0xf]
                  %2111 = vst [vmem:[%s2067 + $0x94] sm:$0xf] %v2110
                  %v2112 = vld [vmem:[%s2066 + $0x58] sm:$0xf]
                  %2113 = vst [vmem:[%s2067 + $0x98] sm:$0xf] %v2112
                  %v2114 = vld [vmem:[%s2066 + $0x5c] sm:$0xf]
                  %2115 = vst [vmem:[%s2067 + $0x9c] sm:$0xf] %v2114
                  %v2116 = vld [vmem:[%s2066 + $0x60] sm:$0xf]
                  %2117 = vst [vmem:[%s2067 + $0xa0] sm:$0xf] %v2116
                  %v2118 = vld [vmem:[%s2066 + $0x64] sm:$0xf]
                  %2119 = vst [vmem:[%s2067 + $0xa4] sm:$0xf] %v2118
                  %v2120 = vld [vmem:[%s2066 + $0x68] sm:$0xf]
                  %2121 = vst [vmem:[%s2067 + $0xa8] sm:$0xf] %v2120
                  %v2122 = vld [vmem:[%s2066 + $0x6c] sm:$0xf]
                  %2123 = vst [vmem:[%s2067 + $0xac] sm:$0xf] %v2122
                  %v2124 = vld [vmem:[%s2066 + $0x70] sm:$0xf]
                  %2125 = vst [vmem:[%s2067 + $0xb0] sm:$0xf] %v2124
                  %v2126 = vld [vmem:[%s2066 + $0x74] sm:$0xf]
                  %2127 = vst [vmem:[%s2067 + $0xb4] sm:$0xf] %v2126
                  %v2128 = vld [vmem:[%s2066 + $0x78] sm:$0xf]
                  %2129 = vst [vmem:[%s2067 + $0xb8] sm:$0xf] %v2128
                  %v2130 = vld [vmem:[%s2066 + $0x7c] sm:$0xf]
                  %2131 = vst [vmem:[%s2067 + $0xbc] sm:$0xf] %v2130
                  %v2132 = vld [vmem:[%s2066 + $0x80] sm:$0xf]
                  %2133 = vst [vmem:[%s2067 + $0x100] sm:$0xf] %v2132
                  %v2134 = vld [vmem:[%s2066 + $0x84] sm:$0xf]
                  %2135 = vst [vmem:[%s2067 + $0x104] sm:$0xf] %v2134
                  %v2136 = vld [vmem:[%s2066 + $0x88] sm:$0xf]
                  %2137 = vst [vmem:[%s2067 + $0x108] sm:$0xf] %v2136
                  %v2138 = vld [vmem:[%s2066 + $0x8c] sm:$0xf]
                  %2139 = vst [vmem:[%s2067 + $0x10c] sm:$0xf] %v2138
                  %v2140 = vld [vmem:[%s2066 + $0x90] sm:$0xf]
                  %2141 = vst [vmem:[%s2067 + $0x110] sm:$0xf] %v2140
                  %v2142 = vld [vmem:[%s2066 + $0x94] sm:$0xf]
                  %2143 = vst [vmem:[%s2067 + $0x114] sm:$0xf] %v2142
                  %v2144 = vld [vmem:[%s2066 + $0x98] sm:$0xf]
                  %2145 = vst [vmem:[%s2067 + $0x118] sm:$0xf] %v2144
                  %v2146 = vld [vmem:[%s2066 + $0x9c] sm:$0xf]
                  %2147 = vst [vmem:[%s2067 + $0x11c] sm:$0xf] %v2146
                  %v2148 = vld [vmem:[%s2066 + $0xa0] sm:$0xf]
                  %2149 = vst [vmem:[%s2067 + $0x120] sm:$0xf] %v2148
                  %v2150 = vld [vmem:[%s2066 + $0xa4] sm:$0xf]
                  %2151 = vst [vmem:[%s2067 + $0x124] sm:$0xf] %v2150
                  %v2152 = vld [vmem:[%s2066 + $0xa8] sm:$0xf]
                  %2153 = vst [vmem:[%s2067 + $0x128] sm:$0xf] %v2152
                  %v2154 = vld [vmem:[%s2066 + $0xac] sm:$0xf]
                  %2155 = vst [vmem:[%s2067 + $0x12c] sm:$0xf] %v2154
                  %v2156 = vld [vmem:[%s2066 + $0xb0] sm:$0xf]
                  %2157 = vst [vmem:[%s2067 + $0x130] sm:$0xf] %v2156
                  %v2158 = vld [vmem:[%s2066 + $0xb4] sm:$0xf]
                  %2159 = vst [vmem:[%s2067 + $0x134] sm:$0xf] %v2158
                  %v2160 = vld [vmem:[%s2066 + $0xb8] sm:$0xf]
                  %2161 = vst [vmem:[%s2067 + $0x138] sm:$0xf] %v2160
                  %v2162 = vld [vmem:[%s2066 + $0xbc] sm:$0xf]
                  %2163 = vst [vmem:[%s2067 + $0x13c] sm:$0xf] %v2162
                  %v2164 = vld [vmem:[%s2066 + $0xc0] sm:$0xf]
                  %2165 = vst [vmem:[%s2067 + $0x180] sm:$0xf] %v2164
                  %v2166 = vld [vmem:[%s2066 + $0xc4] sm:$0xf]
                  %2167 = vst [vmem:[%s2067 + $0x184] sm:$0xf] %v2166
                  %v2168 = vld [vmem:[%s2066 + $0xc8] sm:$0xf]
                  %2169 = vst [vmem:[%s2067 + $0x188] sm:$0xf] %v2168
                  %v2170 = vld [vmem:[%s2066 + $0xcc] sm:$0xf]
                  %2171 = vst [vmem:[%s2067 + $0x18c] sm:$0xf] %v2170
                  %v2172 = vld [vmem:[%s2066 + $0xd0] sm:$0xf]
                  %2173 = vst [vmem:[%s2067 + $0x190] sm:$0xf] %v2172
                  %v2174 = vld [vmem:[%s2066 + $0xd4] sm:$0xf]
                  %2175 = vst [vmem:[%s2067 + $0x194] sm:$0xf] %v2174
                  %v2176 = vld [vmem:[%s2066 + $0xd8] sm:$0xf]
                  %2177 = vst [vmem:[%s2067 + $0x198] sm:$0xf] %v2176
                  %v2178 = vld [vmem:[%s2066 + $0xdc] sm:$0xf]
                  %2179 = vst [vmem:[%s2067 + $0x19c] sm:$0xf] %v2178
                  %v2180 = vld [vmem:[%s2066 + $0xe0] sm:$0xf]
                  %2181 = vst [vmem:[%s2067 + $0x1a0] sm:$0xf] %v2180
                  %v2182 = vld [vmem:[%s2066 + $0xe4] sm:$0xf]
                  %2183 = vst [vmem:[%s2067 + $0x1a4] sm:$0xf] %v2182
                  %v2184 = vld [vmem:[%s2066 + $0xe8] sm:$0xf]
                  %2185 = vst [vmem:[%s2067 + $0x1a8] sm:$0xf] %v2184
                  %v2186 = vld [vmem:[%s2066 + $0xec] sm:$0xf]
                  %2187 = vst [vmem:[%s2067 + $0x1ac] sm:$0xf] %v2186
                  %v2188 = vld [vmem:[%s2066 + $0xf0] sm:$0xf]
                  %2189 = vst [vmem:[%s2067 + $0x1b0] sm:$0xf] %v2188
                  %v2190 = vld [vmem:[%s2066 + $0xf4] sm:$0xf]
                  %2191 = vst [vmem:[%s2067 + $0x1b4] sm:$0xf] %v2190
                  %v2192 = vld [vmem:[%s2066 + $0xf8] sm:$0xf]
                  %2193 = vst [vmem:[%s2067 + $0x1b8] sm:$0xf] %v2192
                  %v2194 = vld [vmem:[%s2066 + $0xfc] sm:$0xf]
                  %2195 = vst [vmem:[%s2067 + $0x1bc] sm:$0xf] %v2194
                $region120: #{tpu_custom_call.1} parent=107 // loop_footer
                  %s2065 = sadd.s32 1, %s2061
                $region121: #{tpu_custom_call.1} parent=107 // loop_footer_branch
                  %2060 = sbr.rel target = $region117
                $region122: #{tpu_custom_call.1} parent=107 // loop_exit
                  _
              $region108: #{tpu_custom_call.1} parent=92 // pred_fallthru
                _
            $region93: #{tpu_custom_call.1} parent=88 // pred_fallthru
              _
            // Predicated region
            $region94: #{tpu_custom_call.1} parent=88 // pred_check
              _
            $region95: #{tpu_custom_call.1} parent=88 // pred_check_branch
              %1911 = sbr.rel (0) target = $region97
            $region96: #{tpu_custom_call.1} parent=88 // pred_region
              loop: start=0, step=1, limit=1
              $region98: #{tpu_custom_call.1} parent=96 // loop_pre_header
                _
              $region99: #{tpu_custom_call.1} parent=96 // loop_header
                %s1914 = sphi 0, %s1918
                %p1915 = scmp.ge.s32.totalorder %s1914, 1
                %s1919 = sphi %s1594, %s1594
                %s1920 = sphi %s1905, %s1905
              $region100: #{tpu_custom_call.1} parent=96 // loop_header_branch
                %1917 = sbr.rel (%p1915) target = $region104
              $region101: #{tpu_custom_call.1} parent=96 // loop_body
                %v1921 = vld [vmem:[%s1919] sm:$0xf]
                %1922 = vst [vmem:[%s1920] sm:$0xf] %v1921
                %v1923 = vld [vmem:[%s1919 + $0x4] sm:$0xf]
                %1924 = vst [vmem:[%s1920 + $0x4] sm:$0xf] %v1923
                %v1925 = vld [vmem:[%s1919 + $0x8] sm:$0xf]
                %1926 = vst [vmem:[%s1920 + $0x8] sm:$0xf] %v1925
                %v1927 = vld [vmem:[%s1919 + $0xc] sm:$0xf]
                %1928 = vst [vmem:[%s1920 + $0xc] sm:$0xf] %v1927
                %v1929 = vld [vmem:[%s1919 + $0x10] sm:$0xf]
                %1930 = vst [vmem:[%s1920 + $0x10] sm:$0xf] %v1929
                %v1931 = vld [vmem:[%s1919 + $0x14] sm:$0xf]
                %1932 = vst [vmem:[%s1920 + $0x14] sm:$0xf] %v1931
                %v1933 = vld [vmem:[%s1919 + $0x18] sm:$0xf]
                %1934 = vst [vmem:[%s1920 + $0x18] sm:$0xf] %v1933
                %v1935 = vld [vmem:[%s1919 + $0x1c] sm:$0xf]
                %1936 = vst [vmem:[%s1920 + $0x1c] sm:$0xf] %v1935
                %v1937 = vld [vmem:[%s1919 + $0x20] sm:$0xf]
                %1938 = vst [vmem:[%s1920 + $0x20] sm:$0xf] %v1937
                %v1939 = vld [vmem:[%s1919 + $0x24] sm:$0xf]
                %1940 = vst [vmem:[%s1920 + $0x24] sm:$0xf] %v1939
                %v1941 = vld [vmem:[%s1919 + $0x28] sm:$0xf]
                %1942 = vst [vmem:[%s1920 + $0x28] sm:$0xf] %v1941
                %v1943 = vld [vmem:[%s1919 + $0x2c] sm:$0xf]
                %1944 = vst [vmem:[%s1920 + $0x2c] sm:$0xf] %v1943
                %v1945 = vld [vmem:[%s1919 + $0x30] sm:$0xf]
                %1946 = vst [vmem:[%s1920 + $0x30] sm:$0xf] %v1945
                %v1947 = vld [vmem:[%s1919 + $0x34] sm:$0xf]
                %1948 = vst [vmem:[%s1920 + $0x34] sm:$0xf] %v1947
                %v1949 = vld [vmem:[%s1919 + $0x38] sm:$0xf]
                %1950 = vst [vmem:[%s1920 + $0x38] sm:$0xf] %v1949
                %v1951 = vld [vmem:[%s1919 + $0x3c] sm:$0xf]
                %1952 = vst [vmem:[%s1920 + $0x3c] sm:$0xf] %v1951
                %v1953 = vld [vmem:[%s1919 + $0x40] sm:$0xf]
                %1954 = vst [vmem:[%s1920 + $0x80] sm:$0xf] %v1953
                %v1955 = vld [vmem:[%s1919 + $0x44] sm:$0xf]
                %1956 = vst [vmem:[%s1920 + $0x84] sm:$0xf] %v1955
                %v1957 = vld [vmem:[%s1919 + $0x48] sm:$0xf]
                %1958 = vst [vmem:[%s1920 + $0x88] sm:$0xf] %v1957
                %v1959 = vld [vmem:[%s1919 + $0x4c] sm:$0xf]
                %1960 = vst [vmem:[%s1920 + $0x8c] sm:$0xf] %v1959
                %v1961 = vld [vmem:[%s1919 + $0x50] sm:$0xf]
                %1962 = vst [vmem:[%s1920 + $0x90] sm:$0xf] %v1961
                %v1963 = vld [vmem:[%s1919 + $0x54] sm:$0xf]
                %1964 = vst [vmem:[%s1920 + $0x94] sm:$0xf] %v1963
                %v1965 = vld [vmem:[%s1919 + $0x58] sm:$0xf]
                %1966 = vst [vmem:[%s1920 + $0x98] sm:$0xf] %v1965
                %v1967 = vld [vmem:[%s1919 + $0x5c] sm:$0xf]
                %1968 = vst [vmem:[%s1920 + $0x9c] sm:$0xf] %v1967
                %v1969 = vld [vmem:[%s1919 + $0x60] sm:$0xf]
                %1970 = vst [vmem:[%s1920 + $0xa0] sm:$0xf] %v1969
                %v1971 = vld [vmem:[%s1919 + $0x64] sm:$0xf]
                %1972 = vst [vmem:[%s1920 + $0xa4] sm:$0xf] %v1971
                %v1973 = vld [vmem:[%s1919 + $0x68] sm:$0xf]
                %1974 = vst [vmem:[%s1920 + $0xa8] sm:$0xf] %v1973
                %v1975 = vld [vmem:[%s1919 + $0x6c] sm:$0xf]
                %1976 = vst [vmem:[%s1920 + $0xac] sm:$0xf] %v1975
                %v1977 = vld [vmem:[%s1919 + $0x70] sm:$0xf]
                %1978 = vst [vmem:[%s1920 + $0xb0] sm:$0xf] %v1977
                %v1979 = vld [vmem:[%s1919 + $0x74] sm:$0xf]
                %1980 = vst [vmem:[%s1920 + $0xb4] sm:$0xf] %v1979
                %v1981 = vld [vmem:[%s1919 + $0x78] sm:$0xf]
                %1982 = vst [vmem:[%s1920 + $0xb8] sm:$0xf] %v1981
                %v1983 = vld [vmem:[%s1919 + $0x7c] sm:$0xf]
                %1984 = vst [vmem:[%s1920 + $0xbc] sm:$0xf] %v1983
                %v1985 = vld [vmem:[%s1919 + $0x80] sm:$0xf]
                %1986 = vst [vmem:[%s1920 + $0x100] sm:$0xf] %v1985
                %v1987 = vld [vmem:[%s1919 + $0x84] sm:$0xf]
                %1988 = vst [vmem:[%s1920 + $0x104] sm:$0xf] %v1987
                %v1989 = vld [vmem:[%s1919 + $0x88] sm:$0xf]
                %1990 = vst [vmem:[%s1920 + $0x108] sm:$0xf] %v1989
                %v1991 = vld [vmem:[%s1919 + $0x8c] sm:$0xf]
                %1992 = vst [vmem:[%s1920 + $0x10c] sm:$0xf] %v1991
                %v1993 = vld [vmem:[%s1919 + $0x90] sm:$0xf]
                %1994 = vst [vmem:[%s1920 + $0x110] sm:$0xf] %v1993
                %v1995 = vld [vmem:[%s1919 + $0x94] sm:$0xf]
                %1996 = vst [vmem:[%s1920 + $0x114] sm:$0xf] %v1995
                %v1997 = vld [vmem:[%s1919 + $0x98] sm:$0xf]
                %1998 = vst [vmem:[%s1920 + $0x118] sm:$0xf] %v1997
                %v1999 = vld [vmem:[%s1919 + $0x9c] sm:$0xf]
                %2000 = vst [vmem:[%s1920 + $0x11c] sm:$0xf] %v1999
                %v2001 = vld [vmem:[%s1919 + $0xa0] sm:$0xf]
                %2002 = vst [vmem:[%s1920 + $0x120] sm:$0xf] %v2001
                %v2003 = vld [vmem:[%s1919 + $0xa4] sm:$0xf]
                %2004 = vst [vmem:[%s1920 + $0x124] sm:$0xf] %v2003
                %v2005 = vld [vmem:[%s1919 + $0xa8] sm:$0xf]
                %2006 = vst [vmem:[%s1920 + $0x128] sm:$0xf] %v2005
                %v2007 = vld [vmem:[%s1919 + $0xac] sm:$0xf]
                %2008 = vst [vmem:[%s1920 + $0x12c] sm:$0xf] %v2007
                %v2009 = vld [vmem:[%s1919 + $0xb0] sm:$0xf]
                %2010 = vst [vmem:[%s1920 + $0x130] sm:$0xf] %v2009
                %v2011 = vld [vmem:[%s1919 + $0xb4] sm:$0xf]
                %2012 = vst [vmem:[%s1920 + $0x134] sm:$0xf] %v2011
                %v2013 = vld [vmem:[%s1919 + $0xb8] sm:$0xf]
                %2014 = vst [vmem:[%s1920 + $0x138] sm:$0xf] %v2013
                %v2015 = vld [vmem:[%s1919 + $0xbc] sm:$0xf]
                %2016 = vst [vmem:[%s1920 + $0x13c] sm:$0xf] %v2015
                %v2017 = vld [vmem:[%s1919 + $0xc0] sm:$0xf]
                %2018 = vst [vmem:[%s1920 + $0x180] sm:$0xf] %v2017
                %v2019 = vld [vmem:[%s1919 + $0xc4] sm:$0xf]
                %2020 = vst [vmem:[%s1920 + $0x184] sm:$0xf] %v2019
                %v2021 = vld [vmem:[%s1919 + $0xc8] sm:$0xf]
                %2022 = vst [vmem:[%s1920 + $0x188] sm:$0xf] %v2021
                %v2023 = vld [vmem:[%s1919 + $0xcc] sm:$0xf]
                %2024 = vst [vmem:[%s1920 + $0x18c] sm:$0xf] %v2023
                %v2025 = vld [vmem:[%s1919 + $0xd0] sm:$0xf]
                %2026 = vst [vmem:[%s1920 + $0x190] sm:$0xf] %v2025
                %v2027 = vld [vmem:[%s1919 + $0xd4] sm:$0xf]
                %2028 = vst [vmem:[%s1920 + $0x194] sm:$0xf] %v2027
                %v2029 = vld [vmem:[%s1919 + $0xd8] sm:$0xf]
                %2030 = vst [vmem:[%s1920 + $0x198] sm:$0xf] %v2029
                %v2031 = vld [vmem:[%s1919 + $0xdc] sm:$0xf]
                %2032 = vst [vmem:[%s1920 + $0x19c] sm:$0xf] %v2031
                %v2033 = vld [vmem:[%s1919 + $0xe0] sm:$0xf]
                %2034 = vst [vmem:[%s1920 + $0x1a0] sm:$0xf] %v2033
                %v2035 = vld [vmem:[%s1919 + $0xe4] sm:$0xf]
                %2036 = vst [vmem:[%s1920 + $0x1a4] sm:$0xf] %v2035
                %v2037 = vld [vmem:[%s1919 + $0xe8] sm:$0xf]
                %2038 = vst [vmem:[%s1920 + $0x1a8] sm:$0xf] %v2037
                %v2039 = vld [vmem:[%s1919 + $0xec] sm:$0xf]
                %2040 = vst [vmem:[%s1920 + $0x1ac] sm:$0xf] %v2039
                %v2041 = vld [vmem:[%s1919 + $0xf0] sm:$0xf]
                %2042 = vst [vmem:[%s1920 + $0x1b0] sm:$0xf] %v2041
                %v2043 = vld [vmem:[%s1919 + $0xf4] sm:$0xf]
                %2044 = vst [vmem:[%s1920 + $0x1b4] sm:$0xf] %v2043
                %v2045 = vld [vmem:[%s1919 + $0xf8] sm:$0xf]
                %2046 = vst [vmem:[%s1920 + $0x1b8] sm:$0xf] %v2045
                %v2047 = vld [vmem:[%s1919 + $0xfc] sm:$0xf]
                %2048 = vst [vmem:[%s1920 + $0x1bc] sm:$0xf] %v2047
              $region102: #{tpu_custom_call.1} parent=96 // loop_footer
                %s1918 = sadd.s32 1, %s1914
              $region103: #{tpu_custom_call.1} parent=96 // loop_footer_branch
                %1913 = sbr.rel target = $region99
              $region104: #{tpu_custom_call.1} parent=96 // loop_exit
                _
            $region97: #{tpu_custom_call.1} parent=88 // pred_fallthru
              _
          $region89: #{tpu_custom_call.1} parent=84 // pred_fallthru
            _
          %2196 = vnop
        $region85: #{tpu_custom_call.1} parent=31 // pred_fallthru
          _
        // Predicated region
        $region123: #{tpu_custom_call.1} parent=31 // pred_check
          %p2197 = pneg %p179
        $region124: #{tpu_custom_call.1} parent=31 // pred_check_branch
          %2199 = sbr.rel (%p2197) target = $region126
        $region125: #{tpu_custom_call.1} parent=31 // pred_region
          %s2200 = smul.u32 16, %s26
          %s2201 = smul.addr %s25, 128
          %s2202 = sadd.s32 %s2200, %s2201
          %s2203 = smul.addr %s2202, 4
          %s2204 = scalar_lea.vmem %s5, %s2203
          // Predicated region
          $region127: #{tpu_custom_call.1} parent=125 // pred_check
            _
          $region128: #{tpu_custom_call.1} parent=125 // pred_check_branch
            %2206 = sbr.rel (0) target = $region130
          $region129: #{tpu_custom_call.1} parent=125 // pred_region
            // Predicated region
            $region131: #{tpu_custom_call.1} parent=129 // pred_check
              _
            $region132: #{tpu_custom_call.1} parent=129 // pred_check_branch
              %2208 = sbr.rel target = $region134
            $region133: #{tpu_custom_call.1} parent=129 // pred_region
              // Predicated region
              $region146: #{tpu_custom_call.1} parent=133 // pred_check
                _
              $region147: #{tpu_custom_call.1} parent=133 // pred_check_branch
                %2349 = sbr.rel (0) target = $region149
              $region148: #{tpu_custom_call.1} parent=133 // pred_region
                loop: start=0, step=1, limit=1
                $region150: #{tpu_custom_call.1} parent=148 // loop_pre_header
                  _
                $region151: #{tpu_custom_call.1} parent=148 // loop_header
                  %s2351 = sphi 0, %s2355
                  %p2352 = scmp.ge.s32.totalorder %s2351, 1
                  %s2356 = sphi %s1598, %s1598
                  %s2357 = sphi %s2204, %s2204
                $region152: #{tpu_custom_call.1} parent=148 // loop_header_branch
                  %2354 = sbr.rel (%p2352) target = $region156
                $region153: #{tpu_custom_call.1} parent=148 // loop_body
                  _
                $region154: #{tpu_custom_call.1} parent=148 // loop_footer
                  %s2355 = sadd.s32 1, %s2351
                $region155: #{tpu_custom_call.1} parent=148 // loop_footer_branch
                  %2350 = sbr.rel target = $region151
                $region156: #{tpu_custom_call.1} parent=148 // loop_exit
                  _
                loop: start=0, step=1, limit=1
                $region157: #{tpu_custom_call.1} parent=148 // loop_pre_header
                  _
                $region158: #{tpu_custom_call.1} parent=148 // loop_header
                  %s2360 = sphi 0, %s2364
                  %p2361 = scmp.ge.s32.totalorder %s2360, 1
                  %s2365 = sphi %s1598, %s1598
                  %s2366 = sphi %s2204, %s2204
                $region159: #{tpu_custom_call.1} parent=148 // loop_header_branch
                  %2363 = sbr.rel (%p2361) target = $region163
                $region160: #{tpu_custom_call.1} parent=148 // loop_body
                  %v2367 = vld [vmem:[%s2365] sm:$0xf]
                  %2368 = vst [vmem:[%s2366] sm:$0xf] %v2367
                  %v2369 = vld [vmem:[%s2365 + $0x4] sm:$0xf]
                  %2370 = vst [vmem:[%s2366 + $0x4] sm:$0xf] %v2369
                  %v2371 = vld [vmem:[%s2365 + $0x8] sm:$0xf]
                  %2372 = vst [vmem:[%s2366 + $0x8] sm:$0xf] %v2371
                  %v2373 = vld [vmem:[%s2365 + $0xc] sm:$0xf]
                  %2374 = vst [vmem:[%s2366 + $0xc] sm:$0xf] %v2373
                  %v2375 = vld [vmem:[%s2365 + $0x10] sm:$0xf]
                  %2376 = vst [vmem:[%s2366 + $0x10] sm:$0xf] %v2375
                  %v2377 = vld [vmem:[%s2365 + $0x14] sm:$0xf]
                  %2378 = vst [vmem:[%s2366 + $0x14] sm:$0xf] %v2377
                  %v2379 = vld [vmem:[%s2365 + $0x18] sm:$0xf]
                  %2380 = vst [vmem:[%s2366 + $0x18] sm:$0xf] %v2379
                  %v2381 = vld [vmem:[%s2365 + $0x1c] sm:$0xf]
                  %2382 = vst [vmem:[%s2366 + $0x1c] sm:$0xf] %v2381
                  %v2383 = vld [vmem:[%s2365 + $0x20] sm:$0xf]
                  %2384 = vst [vmem:[%s2366 + $0x20] sm:$0xf] %v2383
                  %v2385 = vld [vmem:[%s2365 + $0x24] sm:$0xf]
                  %2386 = vst [vmem:[%s2366 + $0x24] sm:$0xf] %v2385
                  %v2387 = vld [vmem:[%s2365 + $0x28] sm:$0xf]
                  %2388 = vst [vmem:[%s2366 + $0x28] sm:$0xf] %v2387
                  %v2389 = vld [vmem:[%s2365 + $0x2c] sm:$0xf]
                  %2390 = vst [vmem:[%s2366 + $0x2c] sm:$0xf] %v2389
                  %v2391 = vld [vmem:[%s2365 + $0x30] sm:$0xf]
                  %2392 = vst [vmem:[%s2366 + $0x30] sm:$0xf] %v2391
                  %v2393 = vld [vmem:[%s2365 + $0x34] sm:$0xf]
                  %2394 = vst [vmem:[%s2366 + $0x34] sm:$0xf] %v2393
                  %v2395 = vld [vmem:[%s2365 + $0x38] sm:$0xf]
                  %2396 = vst [vmem:[%s2366 + $0x38] sm:$0xf] %v2395
                  %v2397 = vld [vmem:[%s2365 + $0x3c] sm:$0xf]
                  %2398 = vst [vmem:[%s2366 + $0x3c] sm:$0xf] %v2397
                  %v2399 = vld [vmem:[%s2365 + $0x40] sm:$0xf]
                  %2400 = vst [vmem:[%s2366 + $0x80] sm:$0xf] %v2399
                  %v2401 = vld [vmem:[%s2365 + $0x44] sm:$0xf]
                  %2402 = vst [vmem:[%s2366 + $0x84] sm:$0xf] %v2401
                  %v2403 = vld [vmem:[%s2365 + $0x48] sm:$0xf]
                  %2404 = vst [vmem:[%s2366 + $0x88] sm:$0xf] %v2403
                  %v2405 = vld [vmem:[%s2365 + $0x4c] sm:$0xf]
                  %2406 = vst [vmem:[%s2366 + $0x8c] sm:$0xf] %v2405
                  %v2407 = vld [vmem:[%s2365 + $0x50] sm:$0xf]
                  %2408 = vst [vmem:[%s2366 + $0x90] sm:$0xf] %v2407
                  %v2409 = vld [vmem:[%s2365 + $0x54] sm:$0xf]
                  %2410 = vst [vmem:[%s2366 + $0x94] sm:$0xf] %v2409
                  %v2411 = vld [vmem:[%s2365 + $0x58] sm:$0xf]
                  %2412 = vst [vmem:[%s2366 + $0x98] sm:$0xf] %v2411
                  %v2413 = vld [vmem:[%s2365 + $0x5c] sm:$0xf]
                  %2414 = vst [vmem:[%s2366 + $0x9c] sm:$0xf] %v2413
                  %v2415 = vld [vmem:[%s2365 + $0x60] sm:$0xf]
                  %2416 = vst [vmem:[%s2366 + $0xa0] sm:$0xf] %v2415
                  %v2417 = vld [vmem:[%s2365 + $0x64] sm:$0xf]
                  %2418 = vst [vmem:[%s2366 + $0xa4] sm:$0xf] %v2417
                  %v2419 = vld [vmem:[%s2365 + $0x68] sm:$0xf]
                  %2420 = vst [vmem:[%s2366 + $0xa8] sm:$0xf] %v2419
                  %v2421 = vld [vmem:[%s2365 + $0x6c] sm:$0xf]
                  %2422 = vst [vmem:[%s2366 + $0xac] sm:$0xf] %v2421
                  %v2423 = vld [vmem:[%s2365 + $0x70] sm:$0xf]
                  %2424 = vst [vmem:[%s2366 + $0xb0] sm:$0xf] %v2423
                  %v2425 = vld [vmem:[%s2365 + $0x74] sm:$0xf]
                  %2426 = vst [vmem:[%s2366 + $0xb4] sm:$0xf] %v2425
                  %v2427 = vld [vmem:[%s2365 + $0x78] sm:$0xf]
                  %2428 = vst [vmem:[%s2366 + $0xb8] sm:$0xf] %v2427
                  %v2429 = vld [vmem:[%s2365 + $0x7c] sm:$0xf]
                  %2430 = vst [vmem:[%s2366 + $0xbc] sm:$0xf] %v2429
                  %v2431 = vld [vmem:[%s2365 + $0x80] sm:$0xf]
                  %2432 = vst [vmem:[%s2366 + $0x100] sm:$0xf] %v2431
                  %v2433 = vld [vmem:[%s2365 + $0x84] sm:$0xf]
                  %2434 = vst [vmem:[%s2366 + $0x104] sm:$0xf] %v2433
                  %v2435 = vld [vmem:[%s2365 + $0x88] sm:$0xf]
                  %2436 = vst [vmem:[%s2366 + $0x108] sm:$0xf] %v2435
                  %v2437 = vld [vmem:[%s2365 + $0x8c] sm:$0xf]
                  %2438 = vst [vmem:[%s2366 + $0x10c] sm:$0xf] %v2437
                  %v2439 = vld [vmem:[%s2365 + $0x90] sm:$0xf]
                  %2440 = vst [vmem:[%s2366 + $0x110] sm:$0xf] %v2439
                  %v2441 = vld [vmem:[%s2365 + $0x94] sm:$0xf]
                  %2442 = vst [vmem:[%s2366 + $0x114] sm:$0xf] %v2441
                  %v2443 = vld [vmem:[%s2365 + $0x98] sm:$0xf]
                  %2444 = vst [vmem:[%s2366 + $0x118] sm:$0xf] %v2443
                  %v2445 = vld [vmem:[%s2365 + $0x9c] sm:$0xf]
                  %2446 = vst [vmem:[%s2366 + $0x11c] sm:$0xf] %v2445
                  %v2447 = vld [vmem:[%s2365 + $0xa0] sm:$0xf]
                  %2448 = vst [vmem:[%s2366 + $0x120] sm:$0xf] %v2447
                  %v2449 = vld [vmem:[%s2365 + $0xa4] sm:$0xf]
                  %2450 = vst [vmem:[%s2366 + $0x124] sm:$0xf] %v2449
                  %v2451 = vld [vmem:[%s2365 + $0xa8] sm:$0xf]
                  %2452 = vst [vmem:[%s2366 + $0x128] sm:$0xf] %v2451
                  %v2453 = vld [vmem:[%s2365 + $0xac] sm:$0xf]
                  %2454 = vst [vmem:[%s2366 + $0x12c] sm:$0xf] %v2453
                  %v2455 = vld [vmem:[%s2365 + $0xb0] sm:$0xf]
                  %2456 = vst [vmem:[%s2366 + $0x130] sm:$0xf] %v2455
                  %v2457 = vld [vmem:[%s2365 + $0xb4] sm:$0xf]
                  %2458 = vst [vmem:[%s2366 + $0x134] sm:$0xf] %v2457
                  %v2459 = vld [vmem:[%s2365 + $0xb8] sm:$0xf]
                  %2460 = vst [vmem:[%s2366 + $0x138] sm:$0xf] %v2459
                  %v2461 = vld [vmem:[%s2365 + $0xbc] sm:$0xf]
                  %2462 = vst [vmem:[%s2366 + $0x13c] sm:$0xf] %v2461
                  %v2463 = vld [vmem:[%s2365 + $0xc0] sm:$0xf]
                  %2464 = vst [vmem:[%s2366 + $0x180] sm:$0xf] %v2463
                  %v2465 = vld [vmem:[%s2365 + $0xc4] sm:$0xf]
                  %2466 = vst [vmem:[%s2366 + $0x184] sm:$0xf] %v2465
                  %v2467 = vld [vmem:[%s2365 + $0xc8] sm:$0xf]
                  %2468 = vst [vmem:[%s2366 + $0x188] sm:$0xf] %v2467
                  %v2469 = vld [vmem:[%s2365 + $0xcc] sm:$0xf]
                  %2470 = vst [vmem:[%s2366 + $0x18c] sm:$0xf] %v2469
                  %v2471 = vld [vmem:[%s2365 + $0xd0] sm:$0xf]
                  %2472 = vst [vmem:[%s2366 + $0x190] sm:$0xf] %v2471
                  %v2473 = vld [vmem:[%s2365 + $0xd4] sm:$0xf]
                  %2474 = vst [vmem:[%s2366 + $0x194] sm:$0xf] %v2473
                  %v2475 = vld [vmem:[%s2365 + $0xd8] sm:$0xf]
                  %2476 = vst [vmem:[%s2366 + $0x198] sm:$0xf] %v2475
                  %v2477 = vld [vmem:[%s2365 + $0xdc] sm:$0xf]
                  %2478 = vst [vmem:[%s2366 + $0x19c] sm:$0xf] %v2477
                  %v2479 = vld [vmem:[%s2365 + $0xe0] sm:$0xf]
                  %2480 = vst [vmem:[%s2366 + $0x1a0] sm:$0xf] %v2479
                  %v2481 = vld [vmem:[%s2365 + $0xe4] sm:$0xf]
                  %2482 = vst [vmem:[%s2366 + $0x1a4] sm:$0xf] %v2481
                  %v2483 = vld [vmem:[%s2365 + $0xe8] sm:$0xf]
                  %2484 = vst [vmem:[%s2366 + $0x1a8] sm:$0xf] %v2483
                  %v2485 = vld [vmem:[%s2365 + $0xec] sm:$0xf]
                  %2486 = vst [vmem:[%s2366 + $0x1ac] sm:$0xf] %v2485
                  %v2487 = vld [vmem:[%s2365 + $0xf0] sm:$0xf]
                  %2488 = vst [vmem:[%s2366 + $0x1b0] sm:$0xf] %v2487
                  %v2489 = vld [vmem:[%s2365 + $0xf4] sm:$0xf]
                  %2490 = vst [vmem:[%s2366 + $0x1b4] sm:$0xf] %v2489
                  %v2491 = vld [vmem:[%s2365 + $0xf8] sm:$0xf]
                  %2492 = vst [vmem:[%s2366 + $0x1b8] sm:$0xf] %v2491
                  %v2493 = vld [vmem:[%s2365 + $0xfc] sm:$0xf]
                  %2494 = vst [vmem:[%s2366 + $0x1bc] sm:$0xf] %v2493
                $region161: #{tpu_custom_call.1} parent=148 // loop_footer
                  %s2364 = sadd.s32 1, %s2360
                $region162: #{tpu_custom_call.1} parent=148 // loop_footer_branch
                  %2359 = sbr.rel target = $region158
                $region163: #{tpu_custom_call.1} parent=148 // loop_exit
                  _
              $region149: #{tpu_custom_call.1} parent=133 // pred_fallthru
                _
            $region134: #{tpu_custom_call.1} parent=129 // pred_fallthru
              _
            // Predicated region
            $region135: #{tpu_custom_call.1} parent=129 // pred_check
              _
            $region136: #{tpu_custom_call.1} parent=129 // pred_check_branch
              %2210 = sbr.rel (0) target = $region138
            $region137: #{tpu_custom_call.1} parent=129 // pred_region
              loop: start=0, step=1, limit=1
              $region139: #{tpu_custom_call.1} parent=137 // loop_pre_header
                _
              $region140: #{tpu_custom_call.1} parent=137 // loop_header
                %s2213 = sphi 0, %s2217
                %p2214 = scmp.ge.s32.totalorder %s2213, 1
                %s2218 = sphi %s1598, %s1598
                %s2219 = sphi %s2204, %s2204
              $region141: #{tpu_custom_call.1} parent=137 // loop_header_branch
                %2216 = sbr.rel (%p2214) target = $region145
              $region142: #{tpu_custom_call.1} parent=137 // loop_body
                %v2220 = vld [vmem:[%s2218] sm:$0xf]
                %2221 = vst [vmem:[%s2219] sm:$0xf] %v2220
                %v2222 = vld [vmem:[%s2218 + $0x4] sm:$0xf]
                %2223 = vst [vmem:[%s2219 + $0x4] sm:$0xf] %v2222
                %v2224 = vld [vmem:[%s2218 + $0x8] sm:$0xf]
                %2225 = vst [vmem:[%s2219 + $0x8] sm:$0xf] %v2224
                %v2226 = vld [vmem:[%s2218 + $0xc] sm:$0xf]
                %2227 = vst [vmem:[%s2219 + $0xc] sm:$0xf] %v2226
                %v2228 = vld [vmem:[%s2218 + $0x10] sm:$0xf]
                %2229 = vst [vmem:[%s2219 + $0x10] sm:$0xf] %v2228
                %v2230 = vld [vmem:[%s2218 + $0x14] sm:$0xf]
                %2231 = vst [vmem:[%s2219 + $0x14] sm:$0xf] %v2230
                %v2232 = vld [vmem:[%s2218 + $0x18] sm:$0xf]
                %2233 = vst [vmem:[%s2219 + $0x18] sm:$0xf] %v2232
                %v2234 = vld [vmem:[%s2218 + $0x1c] sm:$0xf]
                %2235 = vst [vmem:[%s2219 + $0x1c] sm:$0xf] %v2234
                %v2236 = vld [vmem:[%s2218 + $0x20] sm:$0xf]
                %2237 = vst [vmem:[%s2219 + $0x20] sm:$0xf] %v2236
                %v2238 = vld [vmem:[%s2218 + $0x24] sm:$0xf]
                %2239 = vst [vmem:[%s2219 + $0x24] sm:$0xf] %v2238
                %v2240 = vld [vmem:[%s2218 + $0x28] sm:$0xf]
                %2241 = vst [vmem:[%s2219 + $0x28] sm:$0xf] %v2240
                %v2242 = vld [vmem:[%s2218 + $0x2c] sm:$0xf]
                %2243 = vst [vmem:[%s2219 + $0x2c] sm:$0xf] %v2242
                %v2244 = vld [vmem:[%s2218 + $0x30] sm:$0xf]
                %2245 = vst [vmem:[%s2219 + $0x30] sm:$0xf] %v2244
                %v2246 = vld [vmem:[%s2218 + $0x34] sm:$0xf]
                %2247 = vst [vmem:[%s2219 + $0x34] sm:$0xf] %v2246
                %v2248 = vld [vmem:[%s2218 + $0x38] sm:$0xf]
                %2249 = vst [vmem:[%s2219 + $0x38] sm:$0xf] %v2248
                %v2250 = vld [vmem:[%s2218 + $0x3c] sm:$0xf]
                %2251 = vst [vmem:[%s2219 + $0x3c] sm:$0xf] %v2250
                %v2252 = vld [vmem:[%s2218 + $0x40] sm:$0xf]
                %2253 = vst [vmem:[%s2219 + $0x80] sm:$0xf] %v2252
                %v2254 = vld [vmem:[%s2218 + $0x44] sm:$0xf]
                %2255 = vst [vmem:[%s2219 + $0x84] sm:$0xf] %v2254
                %v2256 = vld [vmem:[%s2218 + $0x48] sm:$0xf]
                %2257 = vst [vmem:[%s2219 + $0x88] sm:$0xf] %v2256
                %v2258 = vld [vmem:[%s2218 + $0x4c] sm:$0xf]
                %2259 = vst [vmem:[%s2219 + $0x8c] sm:$0xf] %v2258
                %v2260 = vld [vmem:[%s2218 + $0x50] sm:$0xf]
                %2261 = vst [vmem:[%s2219 + $0x90] sm:$0xf] %v2260
                %v2262 = vld [vmem:[%s2218 + $0x54] sm:$0xf]
                %2263 = vst [vmem:[%s2219 + $0x94] sm:$0xf] %v2262
                %v2264 = vld [vmem:[%s2218 + $0x58] sm:$0xf]
                %2265 = vst [vmem:[%s2219 + $0x98] sm:$0xf] %v2264
                %v2266 = vld [vmem:[%s2218 + $0x5c] sm:$0xf]
                %2267 = vst [vmem:[%s2219 + $0x9c] sm:$0xf] %v2266
                %v2268 = vld [vmem:[%s2218 + $0x60] sm:$0xf]
                %2269 = vst [vmem:[%s2219 + $0xa0] sm:$0xf] %v2268
                %v2270 = vld [vmem:[%s2218 + $0x64] sm:$0xf]
                %2271 = vst [vmem:[%s2219 + $0xa4] sm:$0xf] %v2270
                %v2272 = vld [vmem:[%s2218 + $0x68] sm:$0xf]
                %2273 = vst [vmem:[%s2219 + $0xa8] sm:$0xf] %v2272
                %v2274 = vld [vmem:[%s2218 + $0x6c] sm:$0xf]
                %2275 = vst [vmem:[%s2219 + $0xac] sm:$0xf] %v2274
                %v2276 = vld [vmem:[%s2218 + $0x70] sm:$0xf]
                %2277 = vst [vmem:[%s2219 + $0xb0] sm:$0xf] %v2276
                %v2278 = vld [vmem:[%s2218 + $0x74] sm:$0xf]
                %2279 = vst [vmem:[%s2219 + $0xb4] sm:$0xf] %v2278
                %v2280 = vld [vmem:[%s2218 + $0x78] sm:$0xf]
                %2281 = vst [vmem:[%s2219 + $0xb8] sm:$0xf] %v2280
                %v2282 = vld [vmem:[%s2218 + $0x7c] sm:$0xf]
                %2283 = vst [vmem:[%s2219 + $0xbc] sm:$0xf] %v2282
                %v2284 = vld [vmem:[%s2218 + $0x80] sm:$0xf]
                %2285 = vst [vmem:[%s2219 + $0x100] sm:$0xf] %v2284
                %v2286 = vld [vmem:[%s2218 + $0x84] sm:$0xf]
                %2287 = vst [vmem:[%s2219 + $0x104] sm:$0xf] %v2286
                %v2288 = vld [vmem:[%s2218 + $0x88] sm:$0xf]
                %2289 = vst [vmem:[%s2219 + $0x108] sm:$0xf] %v2288
                %v2290 = vld [vmem:[%s2218 + $0x8c] sm:$0xf]
                %2291 = vst [vmem:[%s2219 + $0x10c] sm:$0xf] %v2290
                %v2292 = vld [vmem:[%s2218 + $0x90] sm:$0xf]
                %2293 = vst [vmem:[%s2219 + $0x110] sm:$0xf] %v2292
                %v2294 = vld [vmem:[%s2218 + $0x94] sm:$0xf]
                %2295 = vst [vmem:[%s2219 + $0x114] sm:$0xf] %v2294
                %v2296 = vld [vmem:[%s2218 + $0x98] sm:$0xf]
                %2297 = vst [vmem:[%s2219 + $0x118] sm:$0xf] %v2296
                %v2298 = vld [vmem:[%s2218 + $0x9c] sm:$0xf]
                %2299 = vst [vmem:[%s2219 + $0x11c] sm:$0xf] %v2298
                %v2300 = vld [vmem:[%s2218 + $0xa0] sm:$0xf]
                %2301 = vst [vmem:[%s2219 + $0x120] sm:$0xf] %v2300
                %v2302 = vld [vmem:[%s2218 + $0xa4] sm:$0xf]
                %2303 = vst [vmem:[%s2219 + $0x124] sm:$0xf] %v2302
                %v2304 = vld [vmem:[%s2218 + $0xa8] sm:$0xf]
                %2305 = vst [vmem:[%s2219 + $0x128] sm:$0xf] %v2304
                %v2306 = vld [vmem:[%s2218 + $0xac] sm:$0xf]
                %2307 = vst [vmem:[%s2219 + $0x12c] sm:$0xf] %v2306
                %v2308 = vld [vmem:[%s2218 + $0xb0] sm:$0xf]
                %2309 = vst [vmem:[%s2219 + $0x130] sm:$0xf] %v2308
                %v2310 = vld [vmem:[%s2218 + $0xb4] sm:$0xf]
                %2311 = vst [vmem:[%s2219 + $0x134] sm:$0xf] %v2310
                %v2312 = vld [vmem:[%s2218 + $0xb8] sm:$0xf]
                %2313 = vst [vmem:[%s2219 + $0x138] sm:$0xf] %v2312
                %v2314 = vld [vmem:[%s2218 + $0xbc] sm:$0xf]
                %2315 = vst [vmem:[%s2219 + $0x13c] sm:$0xf] %v2314
                %v2316 = vld [vmem:[%s2218 + $0xc0] sm:$0xf]
                %2317 = vst [vmem:[%s2219 + $0x180] sm:$0xf] %v2316
                %v2318 = vld [vmem:[%s2218 + $0xc4] sm:$0xf]
                %2319 = vst [vmem:[%s2219 + $0x184] sm:$0xf] %v2318
                %v2320 = vld [vmem:[%s2218 + $0xc8] sm:$0xf]
                %2321 = vst [vmem:[%s2219 + $0x188] sm:$0xf] %v2320
                %v2322 = vld [vmem:[%s2218 + $0xcc] sm:$0xf]
                %2323 = vst [vmem:[%s2219 + $0x18c] sm:$0xf] %v2322
                %v2324 = vld [vmem:[%s2218 + $0xd0] sm:$0xf]
                %2325 = vst [vmem:[%s2219 + $0x190] sm:$0xf] %v2324
                %v2326 = vld [vmem:[%s2218 + $0xd4] sm:$0xf]
                %2327 = vst [vmem:[%s2219 + $0x194] sm:$0xf] %v2326
                %v2328 = vld [vmem:[%s2218 + $0xd8] sm:$0xf]
                %2329 = vst [vmem:[%s2219 + $0x198] sm:$0xf] %v2328
                %v2330 = vld [vmem:[%s2218 + $0xdc] sm:$0xf]
                %2331 = vst [vmem:[%s2219 + $0x19c] sm:$0xf] %v2330
                %v2332 = vld [vmem:[%s2218 + $0xe0] sm:$0xf]
                %2333 = vst [vmem:[%s2219 + $0x1a0] sm:$0xf] %v2332
                %v2334 = vld [vmem:[%s2218 + $0xe4] sm:$0xf]
                %2335 = vst [vmem:[%s2219 + $0x1a4] sm:$0xf] %v2334
                %v2336 = vld [vmem:[%s2218 + $0xe8] sm:$0xf]
                %2337 = vst [vmem:[%s2219 + $0x1a8] sm:$0xf] %v2336
                %v2338 = vld [vmem:[%s2218 + $0xec] sm:$0xf]
                %2339 = vst [vmem:[%s2219 + $0x1ac] sm:$0xf] %v2338
                %v2340 = vld [vmem:[%s2218 + $0xf0] sm:$0xf]
                %2341 = vst [vmem:[%s2219 + $0x1b0] sm:$0xf] %v2340
                %v2342 = vld [vmem:[%s2218 + $0xf4] sm:$0xf]
                %2343 = vst [vmem:[%s2219 + $0x1b4] sm:$0xf] %v2342
                %v2344 = vld [vmem:[%s2218 + $0xf8] sm:$0xf]
                %2345 = vst [vmem:[%s2219 + $0x1b8] sm:$0xf] %v2344
                %v2346 = vld [vmem:[%s2218 + $0xfc] sm:$0xf]
                %2347 = vst [vmem:[%s2219 + $0x1bc] sm:$0xf] %v2346
              $region143: #{tpu_custom_call.1} parent=137 // loop_footer
                %s2217 = sadd.s32 1, %s2213
              $region144: #{tpu_custom_call.1} parent=137 // loop_footer_branch
                %2212 = sbr.rel target = $region140
              $region145: #{tpu_custom_call.1} parent=137 // loop_exit
                _
            $region138: #{tpu_custom_call.1} parent=129 // pred_fallthru
              _
          $region130: #{tpu_custom_call.1} parent=125 // pred_fallthru
            _
          %2495 = vnop
        $region126: #{tpu_custom_call.1} parent=31 // pred_fallthru
          _
      $region32: #{tpu_custom_call.1} parent=5 // pred_fallthru
        _
      %p2496 = scmp.le.s32.totalorder 2, %s16
      // Predicated region
      $region164: #{tpu_custom_call.1} parent=5 // pred_check
        %p2497 = pneg %p2496
      $region165: #{tpu_custom_call.1} parent=5 // pred_check_branch
        %2499 = sbr.rel (%p2497) target = $region167
      $region166: #{tpu_custom_call.1} parent=5 // pred_region
        %s2500 = ssub.s32 %s16, 2
        // Predicated region
        $region168: #{tpu_custom_call.1} parent=166 // pred_check
          %p2501 = pneg %p129
        $region169: #{tpu_custom_call.1} parent=166 // pred_check_branch
          %2503 = sbr.rel (%p2501) target = $region171
        $region170: #{tpu_custom_call.1} parent=166 // pred_region
          %s2504 = sand.u32 %s114, 1
          %s2505 = sand.u32 %s114, 1
          %s2506 = smul.addr %s2505, 256
          %s2507 = scalar_lea.vmem [#allocation6], %s2506
        $region171: #{tpu_custom_call.1} parent=166 // pred_fallthru
          _
        // Predicated region
        $region172: #{tpu_custom_call.1} parent=166 // pred_check
          %p2508 = pneg %p157
        $region173: #{tpu_custom_call.1} parent=166 // pred_check_branch
          %2510 = sbr.rel (%p2508) target = $region175
        $region174: #{tpu_custom_call.1} parent=166 // pred_region
          %s2511 = sand.u32 %s142, 1
          %s2512 = sand.u32 %s142, 1
          %s2513 = smul.addr %s2512, 256
          %s2514 = scalar_lea.vmem [#allocation7], %s2513
        $region175: #{tpu_custom_call.1} parent=166 // pred_fallthru
          _
        // Predicated region
        $region176: #{tpu_custom_call.1} parent=166 // pred_check
          %p2515 = pneg %p185
        $region177: #{tpu_custom_call.1} parent=166 // pred_check_branch
          %2517 = sbr.rel (%p2515) target = $region179
        $region178: #{tpu_custom_call.1} parent=166 // pred_region
          %s2518 = sand.u32 %s170, 1
          %s2519 = sand.u32 %s170, 1
          %s2520 = smul.addr %s2519, 256
          %s2521 = scalar_lea.vmem [#allocation8], %s2520
        $region179: #{tpu_custom_call.1} parent=166 // pred_fallthru
          _
      $region167: #{tpu_custom_call.1} parent=5 // pred_fallthru
        _
    $region6: #{tpu_custom_call.1} parent=1 // loop_footer
      %s20 = sadd.s32 1, %s16
    $region7: #{tpu_custom_call.1} parent=1 // loop_footer_branch
      %15 = sbr.rel target = $region3
    $region8: #{tpu_custom_call.1} parent=1 // loop_exit
      _
    %2522 = vsyncpa [#allocation3], 1
    %s2523 = scalar_lea.sflag [#allocation3], 1
    %2524 = vsyncpa %s2523, 1
    %2525 = vsyncpa [#allocation5], 1

</llo_original>
